<compile_context>
chip_gen: v6e
topology: v6e:2x2x1
jax: 0.10.0
libtpu: 0.0.40
codegen_flags: <defaults>
</compile_context>

<pallas_src>
import math

import jax
import jax.numpy as jnp
from jax import lax
from jax.experimental import pallas as pl
from jax.experimental.pallas import tpu as pltpu

NOISE_STD = 0.01
NOISE_VAR = NOISE_STD ** 2
SIGMA_ENTR = (10.0, 50.0)   # diagonal of Sigma in the NN (arcsine) covariance
SIGMA_F = 1.0
LENGTHSCALE = 1.0

# Abramowitz & Stegun 4.4.46 polynomial for asin on [0, 1], |err| <= 2e-8
# (arcsin has no direct Mosaic lowering).
# NOTE: the 4-term A&S 4.4.45 form (|err| <= 5e-5) would roughly halve the VALU
# cost of this chain, but 5e-5 is half the sigma_n^2 = 1e-4 jitter, so we keep
# the accurate polynomial to protect the downstream Cholesky conditioning.
_ASIN_COEFFS = (1.5707963050, -0.2145988016, 0.0889789874, -0.0501743046,
                0.0308918810, -0.0170881256, 0.0066700901, -0.0012624911)


def _asin(z):
    """Arcsine via A&S 4.4.46; sign restored with the f32 sign bit (bitcast + or)
    instead of a vselect."""
    a = jnp.clip(jnp.abs(z), 0.0, 1.0)
    poly = _ASIN_COEFFS[-1]
    for c in _ASIN_COEFFS[-2::-1]:
        poly = poly * a + c
    r = (math.pi / 2.0) - jnp.sqrt(1.0 - a) * poly            # >= 0 on [0, 1]
    sign_mask = jnp.int32(-2 ** 31)                           # 0x80000000
    sign = jnp.bitwise_and(pltpu.bitcast(z, jnp.int32), sign_mask)
    return pltpu.bitcast(jnp.bitwise_or(pltpu.bitcast(r, jnp.int32), sign),
                         jnp.float32)


# ----------------------- covariance functions (run inside kernels) ---------------

def _nn_row_aux(x_row):
    """Grid-invariant xb-only factor rsqrt(1 + 2*(s0 + s1*x^2)); computed once in
    the wrapper (O(N+M)) instead of per grid step / per tile element."""
    s0, s1 = SIGMA_ENTR
    return lax.rsqrt(1.0 + 2.0 * (s0 + s1 * x_row * x_row))


def _nn_cov(xa_col, xb_row, xb_aux_row):
    """Williams (1998) NN / arcsine covariance, Sigma = diag(s0, s1).
    rsqrt(da*db) is split into rsqrt(da) (EUP on tm elems only) times the
    precomputed xb-side factor -> EUP traffic drops from tm*Nb to tm per tile."""
    s0, s1 = SIGMA_ENTR
    num = 2.0 * (s0 + s1 * xa_col * xb_row)                            # (tm, Nb)
    inv_a = lax.rsqrt(1.0 + 2.0 * (s0 + s1 * xa_col * xa_col))          # (tm, 1)
    arg = jnp.clip(num * inv_a * xb_aux_row, -1.0, 1.0)
    return (2.0 / math.pi) * _asin(arg)


def _se_cov(xa_col, xb_row, xb_aux_row):
    """Squared-exponential covariance for 1-D inputs (no xb-side aux needed)."""
    del xb_aux_row
    d = xa_col - xb_row
    return (SIGMA_F * SIGMA_F) * jnp.exp(-0.5 * d * d / (LENGTHSCALE * LENGTHSCALE))


# ----------------------------- Pallas kernel bodies ------------------------------

def _cov_dual_body(cov, tm, with_aux):
    def body(*refs):
        if with_aux:
            (xa_ref, xtr_row_ref, xte_row_ref,
             aux_tr_ref, aux_te_ref, k_tt_ref, k_tx_ref) = refs
            aux_tr, aux_te = aux_tr_ref[...], aux_te_ref[...]
        else:
            xa_ref, xtr_row_ref, xte_row_ref, k_tt_ref, k_tx_ref = refs
            aux_tr = aux_te = None
        xa = xa_ref[...]                                          # (tm, 1)
        k_tt = cov(xa, xtr_row_ref[...], aux_tr)                  # (tm, N)
        # Fused noise jitter on the (global) diagonal -- no jnp.eye / HBM round trip.
        row = pl.program_id(0) * tm + lax.broadcasted_iota(jnp.int32, k_tt.shape, 0)
        col = lax.broadcasted_iota(jnp.int32, k_tt.shape, 1)
        k_tt_ref[...] = jnp.where(row == col, k_tt + NOISE_VAR, k_tt)
        k_tx_ref[...] = cov(xa, xte_row_ref[...], aux_te)         # (tm, M)
    return body


def _matvec_body(alpha_ref, k_ref, out_ref, acc_ref):
    """(1,N) @ (N,M) GEMV tiled over the contraction axis with an f32 accumulator."""
    @pl.when(pl.program_id(0) == 0)
    def _():
        acc_ref[...] = jnp.zeros_like(acc_ref)
    acc_ref[...] += jnp.dot(alpha_ref[...], k_ref[...],
                            preferred_element_type=jnp.float32)
    @pl.when(pl.program_id(0) == pl.num_programs(0) - 1)
    def _():
        out_ref[...] = acc_ref[...]


# ------------------------- VMEM budgeting & tile selection ------------------------

def _ceil_to(x, m):
    return -(-x // m) * m


def _vmem_capacity_bytes():
    """Generation-aware VMEM capacity (v5e/v6e: 128 MiB, v7x: 64 MiB)."""
    try:
        cap = getattr(pltpu.get_tpu_info(), "vmem_capacity_bytes", None)
        if cap:
            return int(cap)
    except Exception:
        pass
    return 64 * 1024 * 1024          # conservative fallback (v7x per-core VMEM)


def _cov_step_bytes(tm, n, m, with_aux):
    """Per-grid-step f32 footprint of cov_dual, double-buffered, layout-padded."""
    lane_n, lane_m = _ceil_to(n, 128), _ceil_to(m, 128)
    sub_tm = _ceil_to(tm, 8)
    rows = (2 if with_aux else 1) * 8 * (lane_n + lane_m)        # (1,N)/(1,M) inputs
    xa = sub_tm * 128                                            # (tm,1) input
    outs = sub_tm * (lane_n + lane_m)                            # (tm,N)+(tm,M) outputs
    return 2 * 4 * (rows + xa + outs)


def _matvec_step_bytes(tk, m):
    lane_m = _ceil_to(m, 128)
    a = 8 * _ceil_to(tk, 128)
    k = _ceil_to(tk, 8) * lane_m
    o = 8 * lane_m
    return 2 * 4 * (a + k + o) + 4 * 8 * lane_m                  # + acc scratch


def _vmem_limit_bytes(step_bytes, capacity):
    """Scoped-VMEM limit to request: tile footprint + headroom, capped at 3/4 of
    physical VMEM (covers v5e's 16 MiB default and v7x's 64 MiB physical)."""
    want = step_bytes + (4 << 20)
    return int(min(capacity * 3 // 4, max(want, 16 << 20)))


def _pick_row_tile(n, m, with_aux, budget):
    """Largest multiple-of-8 divisor of n whose double-buffered footprint fits the
    budget, capped at n/2 (once n >= 16) so both v7x TensorCores get grid steps."""
    if n <= 8 or n % 8 != 0:
        return n                       # full block (legal: equals array dim)
    cap = n // 2 if n >= 16 else n
    best = 8
    for tm in range(8, cap + 1, 8):
        if n % tm == 0 and _cov_step_bytes(tm, n, m, with_aux) <= budget:
            best = tm
    return best


def _pick_contract_tile(n, m, budget):
    """Contraction tile for the GEMV: multiple of 128 (alpha lane dim) dividing n,
    capped at n/2 for DMA/compute overlap; full block when n is small/indivisible."""
    if n <= 128 or n % 128 != 0:
        return n
    best = 128
    for tk in range(128, n // 2 + 1, 128):
        if n % tk == 0 and _matvec_step_bytes(tk, m) <= budget:
            best = tk
    return best


# ------------------------------- pallas_call wrappers ----------------------------

def cov_dual(x_train_col, x_test_col, cov, row_aux=None):
    """One launch: K(xtr,xtr) + sigma_n^2 I  and  K(xtr,xte), shared xtr row tiles."""
    n = x_train_col.shape[0]
    m = x_test_col.shape[0]
    with_aux = row_aux is not None
    capacity = _vmem_capacity_bytes()
    tm = _pick_row_tile(n, m, with_aux, capacity * 2 // 5)

    xtr_row = x_train_col.reshape(1, n)
    xte_row = x_test_col.reshape(1, m)
    inputs = [x_train_col, xtr_row, xte_row]
    in_specs = [pl.BlockSpec((tm, 1), lambda i: (i, 0)),
                pl.BlockSpec((1, n), lambda i: (0, 0)),
                pl.BlockSpec((1, m), lambda i: (0, 0))]
    if with_aux:
        inputs += [row_aux(xtr_row), row_aux(xte_row)]
        in_specs += [pl.BlockSpec((1, n), lambda i: (0, 0)),
                     pl.BlockSpec((1, m), lambda i: (0, 0))]

    # TODO(synk): for very large N+M add a second (column) grid axis with a
    # 128-multiple tn (and pad lane dims) so VMEM stays bounded independently of
    # N+M and output stores stay lane-dense; row tiling alone suffices here.
    return pl.pallas_call(
        _cov_dual_body(cov, tm, with_aux),
        grid=(n // tm,),
        in_specs=in_specs,
        out_specs=(pl.BlockSpec((tm, n), lambda i: (i, 0)),
                   pl.BlockSpec((tm, m), lambda i: (i, 0))),
        out_shape=(jax.ShapeDtypeStruct((n, n), jnp.float32),
                   jax.ShapeDtypeStruct((n, m), jnp.float32)),
        compiler_params=pltpu.CompilerParams(
            dimension_semantics=("parallel",),
            vmem_limit_bytes=_vmem_limit_bytes(
                _cov_step_bytes(tm, n, m, with_aux), capacity)),
    )(*inputs)


def predict_matvec(alpha_col, k_cross):
    """Posterior mean row alpha^T @ K_cross, tiled/pipelined over the contraction
    axis (f32 accumulator, pl.when init/finalize)."""
    n, m = k_cross.shape
    capacity = _vmem_capacity_bytes()
    tk = _pick_contract_tile(n, m, capacity * 2 // 5)
    return pl.pallas_call(
        _matvec_body,
        grid=(n // tk,),
        in_specs=[pl.BlockSpec((1, tk), lambda k: (0, k)),
                  pl.BlockSpec((tk, m), lambda k: (k, 0))],
        out_specs=pl.BlockSpec((1, m), lambda k: (0, 0)),
        out_shape=jax.ShapeDtypeStruct((1, m), jnp.float32),
        scratch_shapes=[pltpu.VMEM((1, m), jnp.float32)],
        compiler_params=pltpu.CompilerParams(
            dimension_semantics=("arbitrary",),
            vmem_limit_bytes=_vmem_limit_bytes(_matvec_step_bytes(tk, m), capacity)),
    )(alpha_col.reshape(1, n), k_cross)


# ---------------------------------- GP / senn forward -----------------------------

def _solve_spd(k_noisy, y_col):
    # TODO(synk): the dense SPD Cholesky solve has no clean Pallas TPU equivalent;
    # it stays in plain JAX (matches the original module's solve).
    c, lower = jax.scipy.linalg.cho_factor(k_noisy, lower=True)
    return jax.scipy.linalg.cho_solve((c, lower), y_col)


def senn_forward(x_train, y_train, x_test=None):
    n = x_train.shape[0]
    xtr = x_train.reshape(n, 1).astype(jnp.float32)
    y = y_train.reshape(n, 1).astype(jnp.float32)
    xte = xtr if x_test is None else x_test.reshape(-1, 1).astype(jnp.float32)
    m = xte.shape[0]

    # --- stage 1: GP with NN (arcsine) covariance ---------------------------------
    k1_noisy, k1_cross = cov_dual(xtr, xte, _nn_cov, row_aux=_nn_row_aux)
    alpha1 = _solve_spd(k1_noisy, y)                              # (N, 1)
    # Training-point posterior mean via the exact identity
    #   h = K alpha = (K_noisy - sigma_n^2 I) alpha = y - sigma_n^2 alpha
    # (no N x N Gram reload / GEMV needed).
    h_col = y - NOISE_VAR * alpha1                                # (N, 1)
    h2_col = predict_matvec(alpha1, k1_cross).reshape(m, 1)       # (M, 1)

    # --- stage 2: GP with SE covariance on (h, y), predicted at h2 ----------------
    k2_noisy, k2_cross = cov_dual(h_col, h2_col, _se_cov)
    alpha2 = _solve_spd(k2_noisy, y)
    out_row = predict_matvec(alpha2, k2_cross)                    # (1, M)
    return out_row.reshape(m, 1)


# ------------------------------------- main ---------------------------------------

if __name__ == "__main__":
    key = jax.random.PRNGKey(0)
    k1, k2 = jax.random.split(key, 2)

    n_train, n_test = 32, 48
    x_train = jax.random.uniform(k1, (n_train, 1), jnp.float32, -2.0, 2.0)
    y_train = jnp.sin(2.0 * x_train) + NOISE_STD * jax.random.normal(
        k2, (n_train, 1), jnp.float32)
    x_test = jnp.linspace(-2.0, 2.0, n_test, dtype=jnp.float32).reshape(n_test, 1)

    out = jax.jit(senn_forward)(x_train, y_train, x_test)
    jax.block_until_ready(out)
    assert out.shape == (n_test, 1) and out.dtype == jnp.float32
    assert bool(jnp.all(jnp.isfinite(out)))
    print("KERNEL_OK")
</pallas_src>

<mosaic_0001>
module attributes {stable_mosaic.version = 11 : i64} {
  func.func @body(%arg0: i32, %arg1: memref<16x1xf32, #tpu.memory_space<vmem>>, %arg2: memref<1x32xf32, #tpu.memory_space<vmem>>, %arg3: memref<1x48xf32, #tpu.memory_space<vmem>>, %arg4: memref<1x32xf32, #tpu.memory_space<vmem>>, %arg5: memref<1x48xf32, #tpu.memory_space<vmem>>, %arg6: memref<16x32xf32, #tpu.memory_space<vmem>>, %arg7: memref<16x48xf32, #tpu.memory_space<vmem>>) attributes {dimension_semantics = [#tpu.dimension_semantics<parallel>], iteration_bounds = array<i64: 2>, scalar_prefetch = 0 : i64, scratch_operands = 0 : i64, tpu.core_type = #tpu.core_type<tc>, window_params = [{transform_indices = @transform_0, window_bounds = array<i64: 16, 1>}, {pipeline_mode = #tpu.pipeline_mode<synchronous>, transform_indices = @transform_1, window_bounds = array<i64: 1, 32>}, {pipeline_mode = #tpu.pipeline_mode<synchronous>, transform_indices = @transform_2, window_bounds = array<i64: 1, 48>}, {pipeline_mode = #tpu.pipeline_mode<synchronous>, transform_indices = @transform_3, window_bounds = array<i64: 1, 32>}, {pipeline_mode = #tpu.pipeline_mode<synchronous>, transform_indices = @transform_4, window_bounds = array<i64: 1, 48>}, {transform_indices = @transform_5, window_bounds = array<i64: 16, 32>}, {transform_indices = @transform_6, window_bounds = array<i64: 16, 48>}]} {
    %c0 = arith.constant 0 : index
    %c0_0 = arith.constant 0 : index
    %0 = vector.load %arg4[%c0, %c0_0] : memref<1x32xf32, #tpu.memory_space<vmem>>, vector<1x32xf32>
    %c0_1 = arith.constant 0 : index
    %c0_2 = arith.constant 0 : index
    %1 = vector.load %arg5[%c0_1, %c0_2] : memref<1x48xf32, #tpu.memory_space<vmem>>, vector<1x48xf32>
    %c0_3 = arith.constant 0 : index
    %c0_4 = arith.constant 0 : index
    %2 = vector.load %arg1[%c0_3, %c0_4] : memref<16x1xf32, #tpu.memory_space<vmem>>, vector<16x1xf32>
    %c0_5 = arith.constant 0 : index
    %c0_6 = arith.constant 0 : index
    %3 = vector.load %arg2[%c0_5, %c0_6] : memref<1x32xf32, #tpu.memory_space<vmem>>, vector<1x32xf32>
    %cst = arith.constant 5.000000e+01 : f32
    %4 = vector.broadcast %cst : f32 to vector<16x1xf32>
    %5 = arith.mulf %4, %2 : vector<16x1xf32>
    %6 = vector.broadcast %5 : vector<16x1xf32> to vector<16x32xf32>
    %7 = vector.broadcast %3 : vector<1x32xf32> to vector<16x32xf32>
    %8 = arith.mulf %6, %7 : vector<16x32xf32>
    %cst_7 = arith.constant 1.000000e+01 : f32
    %9 = vector.broadcast %cst_7 : f32 to vector<16x32xf32>
    %10 = arith.addf %9, %8 : vector<16x32xf32>
    %cst_8 = arith.constant 2.000000e+00 : f32
    %11 = vector.broadcast %cst_8 : f32 to vector<16x32xf32>
    %12 = arith.mulf %11, %10 : vector<16x32xf32>
    %cst_9 = arith.constant 5.000000e+01 : f32
    %13 = vector.broadcast %cst_9 : f32 to vector<16x1xf32>
    %14 = arith.mulf %13, %2 : vector<16x1xf32>
    %15 = arith.mulf %14, %2 : vector<16x1xf32>
    %cst_10 = arith.constant 1.000000e+01 : f32
    %16 = vector.broadcast %cst_10 : f32 to vector<16x1xf32>
    %17 = arith.addf %16, %15 : vector<16x1xf32>
    %cst_11 = arith.constant 2.000000e+00 : f32
    %18 = vector.broadcast %cst_11 : f32 to vector<16x1xf32>
    %19 = arith.mulf %18, %17 : vector<16x1xf32>
    %cst_12 = arith.constant 1.000000e+00 : f32
    %20 = vector.broadcast %cst_12 : f32 to vector<16x1xf32>
    %21 = arith.addf %20, %19 : vector<16x1xf32>
    %22 = math.rsqrt %21 : vector<16x1xf32>
    %23 = vector.broadcast %22 : vector<16x1xf32> to vector<16x32xf32>
    %24 = arith.mulf %12, %23 : vector<16x32xf32>
    %25 = vector.broadcast %0 : vector<1x32xf32> to vector<16x32xf32>
    %26 = arith.mulf %24, %25 : vector<16x32xf32>
    %cst_13 = arith.constant -1.000000e+00 : f32
    %cst_14 = arith.constant 1.000000e+00 : f32
    %27 = vector.broadcast %cst_13 : f32 to vector<16x32xf32>
    %28 = arith.maximumf %27, %26 : vector<16x32xf32>
    %29 = vector.broadcast %cst_14 : f32 to vector<16x32xf32>
    %30 = arith.minimumf %29, %28 : vector<16x32xf32>
    %31 = math.absf %30 : vector<16x32xf32>
    %cst_15 = arith.constant 0.000000e+00 : f32
    %cst_16 = arith.constant 1.000000e+00 : f32
    %32 = vector.broadcast %cst_15 : f32 to vector<16x32xf32>
    %33 = arith.maximumf %32, %31 : vector<16x32xf32>
    %34 = vector.broadcast %cst_16 : f32 to vector<16x32xf32>
    %35 = arith.minimumf %34, %33 : vector<16x32xf32>
    %cst_17 = arith.constant -0.0012624911 : f32
    %36 = vector.broadcast %cst_17 : f32 to vector<16x32xf32>
    %37 = arith.mulf %36, %35 : vector<16x32xf32>
    %cst_18 = arith.constant 6.670090e-03 : f32
    %38 = vector.broadcast %cst_18 : f32 to vector<16x32xf32>
    %39 = arith.addf %37, %38 : vector<16x32xf32>
    %40 = arith.mulf %39, %35 : vector<16x32xf32>
    %cst_19 = arith.constant -0.0170881264 : f32
    %41 = vector.broadcast %cst_19 : f32 to vector<16x32xf32>
    %42 = arith.addf %40, %41 : vector<16x32xf32>
    %43 = arith.mulf %42, %35 : vector<16x32xf32>
    %cst_20 = arith.constant 0.0308918804 : f32
    %44 = vector.broadcast %cst_20 : f32 to vector<16x32xf32>
    %45 = arith.addf %43, %44 : vector<16x32xf32>
    %46 = arith.mulf %45, %35 : vector<16x32xf32>
    %cst_21 = arith.constant -0.0501743034 : f32
    %47 = vector.broadcast %cst_21 : f32 to vector<16x32xf32>
    %48 = arith.addf %46, %47 : vector<16x32xf32>
    %49 = arith.mulf %48, %35 : vector<16x32xf32>
    %cst_22 = arith.constant 0.0889789909 : f32
    %50 = vector.broadcast %cst_22 : f32 to vector<16x32xf32>
    %51 = arith.addf %49, %50 : vector<16x32xf32>
    %52 = arith.mulf %51, %35 : vector<16x32xf32>
    %cst_23 = arith.constant -0.214598805 : f32
    %53 = vector.broadcast %cst_23 : f32 to vector<16x32xf32>
    %54 = arith.addf %52, %53 : vector<16x32xf32>
    %55 = arith.mulf %54, %35 : vector<16x32xf32>
    %cst_24 = arith.constant 1.57079625 : f32
    %56 = vector.broadcast %cst_24 : f32 to vector<16x32xf32>
    %57 = arith.addf %55, %56 : vector<16x32xf32>
    %cst_25 = arith.constant 1.000000e+00 : f32
    %58 = vector.broadcast %cst_25 : f32 to vector<16x32xf32>
    %59 = arith.subf %58, %35 : vector<16x32xf32>
    %60 = math.sqrt %59 : vector<16x32xf32>
    %61 = arith.mulf %60, %57 : vector<16x32xf32>
    %cst_26 = arith.constant 1.57079637 : f32
    %62 = vector.broadcast %cst_26 : f32 to vector<16x32xf32>
    %63 = arith.subf %62, %61 : vector<16x32xf32>
    %64 = tpu.bitcast %30 : vector<16x32xf32> -> vector<16x32xi32>
    %c-2147483648_i32 = arith.constant -2147483648 : i32
    %65 = vector.broadcast %c-2147483648_i32 : i32 to vector<16x32xi32>
    %66 = arith.andi %64, %65 : vector<16x32xi32>
    %67 = tpu.bitcast %63 : vector<16x32xf32> -> vector<16x32xi32>
    %68 = arith.ori %67, %66 : vector<16x32xi32>
    %69 = tpu.bitcast %68 : vector<16x32xi32> -> vector<16x32xf32>
    %cst_27 = arith.constant 0.636619746 : f32
    %70 = vector.broadcast %cst_27 : f32 to vector<16x32xf32>
    %71 = arith.mulf %70, %69 : vector<16x32xf32>
    %c16_i32 = arith.constant 16 : i32
    %72 = arith.muli %arg0, %c16_i32 : i32
    %73 = tpu.iota {dimensions = array<i32: 0>} : vector<16x32xi32>
    %74 = vector.broadcast %72 : i32 to vector<16x32xi32>
    %75 = arith.addi %74, %73 : vector<16x32xi32>
    %76 = tpu.iota {dimensions = array<i32: 1>} : vector<16x32xi32>
    %77 = arith.cmpi eq, %75, %76 : vector<16x32xi32>
    %cst_28 = arith.constant 9.99999974E-5 : f32
    %78 = vector.broadcast %cst_28 : f32 to vector<16x32xf32>
    %79 = arith.addf %71, %78 : vector<16x32xf32>
    %80 = arith.select %77, %79, %71 : vector<16x32xi1>, vector<16x32xf32>
    %c0_29 = arith.constant 0 : index
    %c0_30 = arith.constant 0 : index
    %81 = vector.load %arg6[%c0_29, %c0_30] : memref<16x32xf32, #tpu.memory_space<vmem>>, vector<16x32xf32>
    tpu.vector_store %arg6[%c0_29, %c0_30], %80 {strides = array<i32>} : memref<16x32xf32, #tpu.memory_space<vmem>>, vector<16x32xf32>,
    %c0_31 = arith.constant 0 : index
    %c0_32 = arith.constant 0 : index
    %82 = vector.load %arg3[%c0_31, %c0_32] : memref<1x48xf32, #tpu.memory_space<vmem>>, vector<1x48xf32>
    %cst_33 = arith.constant 5.000000e+01 : f32
    %83 = vector.broadcast %cst_33 : f32 to vector<16x1xf32>
    %84 = arith.mulf %83, %2 : vector<16x1xf32>
    %85 = vector.broadcast %84 : vector<16x1xf32> to vector<16x48xf32>
    %86 = vector.broadcast %82 : vector<1x48xf32> to vector<16x48xf32>
    %87 = arith.mulf %85, %86 : vector<16x48xf32>
    %cst_34 = arith.constant 1.000000e+01 : f32
    %88 = vector.broadcast %cst_34 : f32 to vector<16x48xf32>
    %89 = arith.addf %88, %87 : vector<16x48xf32>
    %cst_35 = arith.constant 2.000000e+00 : f32
    %90 = vector.broadcast %cst_35 : f32 to vector<16x48xf32>
    %91 = arith.mulf %90, %89 : vector<16x48xf32>
    %cst_36 = arith.constant 5.000000e+01 : f32
    %92 = vector.broadcast %cst_36 : f32 to vector<16x1xf32>
    %93 = arith.mulf %92, %2 : vector<16x1xf32>
    %94 = arith.mulf %93, %2 : vector<16x1xf32>
    %cst_37 = arith.constant 1.000000e+01 : f32
    %95 = vector.broadcast %cst_37 : f32 to vector<16x1xf32>
    %96 = arith.addf %95, %94 : vector<16x1xf32>
    %cst_38 = arith.constant 2.000000e+00 : f32
    %97 = vector.broadcast %cst_38 : f32 to vector<16x1xf32>
    %98 = arith.mulf %97, %96 : vector<16x1xf32>
    %cst_39 = arith.constant 1.000000e+00 : f32
    %99 = vector.broadcast %cst_39 : f32 to vector<16x1xf32>
    %100 = arith.addf %99, %98 : vector<16x1xf32>
    %101 = math.rsqrt %100 : vector<16x1xf32>
    %102 = vector.broadcast %101 : vector<16x1xf32> to vector<16x48xf32>
    %103 = arith.mulf %91, %102 : vector<16x48xf32>
    %104 = vector.broadcast %1 : vector<1x48xf32> to vector<16x48xf32>
    %105 = arith.mulf %103, %104 : vector<16x48xf32>
    %cst_40 = arith.constant -1.000000e+00 : f32
    %cst_41 = arith.constant 1.000000e+00 : f32
    %106 = vector.broadcast %cst_40 : f32 to vector<16x48xf32>
    %107 = arith.maximumf %106, %105 : vector<16x48xf32>
    %108 = vector.broadcast %cst_41 : f32 to vector<16x48xf32>
    %109 = arith.minimumf %108, %107 : vector<16x48xf32>
    %110 = math.absf %109 : vector<16x48xf32>
    %cst_42 = arith.constant 0.000000e+00 : f32
    %cst_43 = arith.constant 1.000000e+00 : f32
    %111 = vector.broadcast %cst_42 : f32 to vector<16x48xf32>
    %112 = arith.maximumf %111, %110 : vector<16x48xf32>
    %113 = vector.broadcast %cst_43 : f32 to vector<16x48xf32>
    %114 = arith.minimumf %113, %112 : vector<16x48xf32>
    %cst_44 = arith.constant -0.0012624911 : f32
    %115 = vector.broadcast %cst_44 : f32 to vector<16x48xf32>
    %116 = arith.mulf %115, %114 : vector<16x48xf32>
    %cst_45 = arith.constant 6.670090e-03 : f32
    %117 = vector.broadcast %cst_45 : f32 to vector<16x48xf32>
    %118 = arith.addf %116, %117 : vector<16x48xf32>
    %119 = arith.mulf %118, %114 : vector<16x48xf32>
    %cst_46 = arith.constant -0.0170881264 : f32
    %120 = vector.broadcast %cst_46 : f32 to vector<16x48xf32>
    %121 = arith.addf %119, %120 : vector<16x48xf32>
    %122 = arith.mulf %121, %114 : vector<16x48xf32>
    %cst_47 = arith.constant 0.0308918804 : f32
    %123 = vector.broadcast %cst_47 : f32 to vector<16x48xf32>
    %124 = arith.addf %122, %123 : vector<16x48xf32>
    %125 = arith.mulf %124, %114 : vector<16x48xf32>
    %cst_48 = arith.constant -0.0501743034 : f32
    %126 = vector.broadcast %cst_48 : f32 to vector<16x48xf32>
    %127 = arith.addf %125, %126 : vector<16x48xf32>
    %128 = arith.mulf %127, %114 : vector<16x48xf32>
    %cst_49 = arith.constant 0.0889789909 : f32
    %129 = vector.broadcast %cst_49 : f32 to vector<16x48xf32>
    %130 = arith.addf %128, %129 : vector<16x48xf32>
    %131 = arith.mulf %130, %114 : vector<16x48xf32>
    %cst_50 = arith.constant -0.214598805 : f32
    %132 = vector.broadcast %cst_50 : f32 to vector<16x48xf32>
    %133 = arith.addf %131, %132 : vector<16x48xf32>
    %134 = arith.mulf %133, %114 : vector<16x48xf32>
    %cst_51 = arith.constant 1.57079625 : f32
    %135 = vector.broadcast %cst_51 : f32 to vector<16x48xf32>
    %136 = arith.addf %134, %135 : vector<16x48xf32>
    %cst_52 = arith.constant 1.000000e+00 : f32
    %137 = vector.broadcast %cst_52 : f32 to vector<16x48xf32>
    %138 = arith.subf %137, %114 : vector<16x48xf32>
    %139 = math.sqrt %138 : vector<16x48xf32>
    %140 = arith.mulf %139, %136 : vector<16x48xf32>
    %cst_53 = arith.constant 1.57079637 : f32
    %141 = vector.broadcast %cst_53 : f32 to vector<16x48xf32>
    %142 = arith.subf %141, %140 : vector<16x48xf32>
    %143 = tpu.bitcast %109 : vector<16x48xf32> -> vector<16x48xi32>
    %c-2147483648_i32_54 = arith.constant -2147483648 : i32
    %144 = vector.broadcast %c-2147483648_i32_54 : i32 to vector<16x48xi32>
    %145 = arith.andi %143, %144 : vector<16x48xi32>
    %146 = tpu.bitcast %142 : vector<16x48xf32> -> vector<16x48xi32>
    %147 = arith.ori %146, %145 : vector<16x48xi32>
    %148 = tpu.bitcast %147 : vector<16x48xi32> -> vector<16x48xf32>
    %cst_55 = arith.constant 0.636619746 : f32
    %149 = vector.broadcast %cst_55 : f32 to vector<16x48xf32>
    %150 = arith.mulf %149, %148 : vector<16x48xf32>
    %c0_56 = arith.constant 0 : index
    %c0_57 = arith.constant 0 : index
    %151 = vector.load %arg7[%c0_56, %c0_57] : memref<16x48xf32, #tpu.memory_space<vmem>>, vector<16x48xf32>
    tpu.vector_store %arg7[%c0_56, %c0_57], %150 {strides = array<i32>} : memref<16x48xf32, #tpu.memory_space<vmem>>, vector<16x48xf32>,
    return
  }
  func.func @transform_0(%arg0: i32) -> (i32, i32) {
    %c0_i32 = arith.constant 0 : i32
    %c0_i32_0 = arith.constant 0 : i32
    return %arg0, %c0_i32 : i32, i32
  }
  func.func @transform_1(%arg0: i32) -> (i32, i32) {
    %c0_i32 = arith.constant 0 : i32
    %c0_i32_0 = arith.constant 0 : i32
    %c0_i32_1 = arith.constant 0 : i32
    return %c0_i32, %c0_i32_0 : i32, i32
  }
  func.func @transform_2(%arg0: i32) -> (i32, i32) {
    %c0_i32 = arith.constant 0 : i32
    %c0_i32_0 = arith.constant 0 : i32
    %c0_i32_1 = arith.constant 0 : i32
    return %c0_i32, %c0_i32_0 : i32, i32
  }
  func.func @transform_3(%arg0: i32) -> (i32, i32) {
    %c0_i32 = arith.constant 0 : i32
    %c0_i32_0 = arith.constant 0 : i32
    %c0_i32_1 = arith.constant 0 : i32
    return %c0_i32, %c0_i32_0 : i32, i32
  }
  func.func @transform_4(%arg0: i32) -> (i32, i32) {
    %c0_i32 = arith.constant 0 : i32
    %c0_i32_0 = arith.constant 0 : i32
    %c0_i32_1 = arith.constant 0 : i32
    return %c0_i32, %c0_i32_0 : i32, i32
  }
  func.func @transform_5(%arg0: i32) -> (i32, i32) {
    %c0_i32 = arith.constant 0 : i32
    %c0_i32_0 = arith.constant 0 : i32
    return %arg0, %c0_i32 : i32, i32
  }
  func.func @transform_6(%arg0: i32) -> (i32, i32) {
    %c0_i32 = arith.constant 0 : i32
    %c0_i32_0 = arith.constant 0 : i32
    return %arg0, %c0_i32 : i32, i32
  }
}

module attributes {stable_mosaic.version = 11 : i64} {
  func.func @_matvec_body(%arg0: i32, %arg1: memref<1x32xf32, #tpu.memory_space<vmem>>, %arg2: memref<32x48xf32, #tpu.memory_space<vmem>>, %arg3: memref<1x48xf32, #tpu.memory_space<vmem>>, %arg4: memref<1x48xf32, #tpu.memory_space<vmem>>) attributes {dimension_semantics = [#tpu.dimension_semantics<arbitrary>], iteration_bounds = array<i64: 1>, scalar_prefetch = 0 : i64, scratch_operands = 1 : i64, tpu.core_type = #tpu.core_type<tc>, window_params = [{transform_indices = @transform_0, window_bounds = array<i64: 1, 32>}, {transform_indices = @transform_1, window_bounds = array<i64: 32, 48>}, {pipeline_mode = #tpu.pipeline_mode<synchronous>, transform_indices = @transform_2, window_bounds = array<i64: 1, 48>}]} {
    %c0_i32 = arith.constant 0 : i32
    %0 = arith.cmpi eq, %arg0, %c0_i32 : i32
    %1 = arith.extui %0 : i1 to i32
    %c0_i32_0 = arith.constant 0 : i32
    %2 = arith.cmpi ne, %1, %c0_i32_0 : i32
    scf.if %2 {
      %cst_10 = arith.constant 0.000000e+00 : f32
      %12 = vector.broadcast %cst_10 : f32 to vector<1x48xf32>
      %c0_11 = arith.constant 0 : index
      %c0_12 = arith.constant 0 : index
      %13 = vector.load %arg4[%c0_11, %c0_12] : memref<1x48xf32, #tpu.memory_space<vmem>>, vector<1x48xf32>
      tpu.vector_store %arg4[%c0_11, %c0_12], %12 {strides = array<i32>} : memref<1x48xf32, #tpu.memory_space<vmem>>, vector<1x48xf32>,
    } else {
    }
    %c0 = arith.constant 0 : index
    %c0_1 = arith.constant 0 : index
    %3 = vector.load %arg4[%c0, %c0_1] : memref<1x48xf32, #tpu.memory_space<vmem>>, vector<1x48xf32>
    %c0_2 = arith.constant 0 : index
    %c0_3 = arith.constant 0 : index
    %4 = vector.load %arg1[%c0_2, %c0_3] : memref<1x32xf32, #tpu.memory_space<vmem>>, vector<1x32xf32>
    %c0_4 = arith.constant 0 : index
    %c0_5 = arith.constant 0 : index
    %5 = vector.load %arg2[%c0_4, %c0_5] : memref<32x48xf32, #tpu.memory_space<vmem>>, vector<32x48xf32>
    %cst = arith.constant dense<0.000000e+00> : vector<1x48xf32>
    %6 = tpu.matmul %4, %5, %cst {dimension_numbers = #tpu.dot_dimension_numbers<[1], [0], [0], [1], [0, 0, 1, 1], [], []>} : vector<1x32xf32>, vector<32x48xf32>, vector<1x48xf32> -> vector<1x48xf32>
    %7 = arith.addf %3, %6 : vector<1x48xf32>
    %c0_6 = arith.constant 0 : index
    %c0_7 = arith.constant 0 : index
    %8 = vector.load %arg4[%c0_6, %c0_7] : memref<1x48xf32, #tpu.memory_space<vmem>>, vector<1x48xf32>
    tpu.vector_store %arg4[%c0_6, %c0_7], %7 {strides = array<i32>} : memref<1x48xf32, #tpu.memory_space<vmem>>, vector<1x48xf32>,
    %c0_i32_8 = arith.constant 0 : i32
    %9 = arith.cmpi eq, %arg0, %c0_i32_8 : i32
    %10 = arith.extui %9 : i1 to i32
    %c0_i32_9 = arith.constant 0 : i32
    %11 = arith.cmpi ne, %10, %c0_i32_9 : i32
    scf.if %11 {
      %c0_10 = arith.constant 0 : index
      %c0_11 = arith.constant 0 : index
      %12 = vector.load %arg4[%c0_10, %c0_11] : memref<1x48xf32, #tpu.memory_space<vmem>>, vector<1x48xf32>
      %c0_12 = arith.constant 0 : index
      %c0_13 = arith.constant 0 : index
      %13 = vector.load %arg3[%c0_12, %c0_13] : memref<1x48xf32, #tpu.memory_space<vmem>>, vector<1x48xf32>
      tpu.vector_store %arg3[%c0_12, %c0_13], %12 {strides = array<i32>} : memref<1x48xf32, #tpu.memory_space<vmem>>, vector<1x48xf32>,
    } else {
    }
    return
  }
  func.func @transform_0(%arg0: i32) -> (i32, i32) {
    %c0_i32 = arith.constant 0 : i32
    %c0_i32_0 = arith.constant 0 : i32
    return %c0_i32, %arg0 : i32, i32
  }
  func.func @transform_1(%arg0: i32) -> (i32, i32) {
    %c0_i32 = arith.constant 0 : i32
    %c0_i32_0 = arith.constant 0 : i32
    return %arg0, %c0_i32 : i32, i32
  }
  func.func @transform_2(%arg0: i32) -> (i32, i32) {
    %c0_i32 = arith.constant 0 : i32
    %c0_i32_0 = arith.constant 0 : i32
    %c0_i32_1 = arith.constant 0 : i32
    return %c0_i32, %c0_i32_0 : i32, i32
  }
}

module attributes {stable_mosaic.version = 11 : i64} {
  func.func @body(%arg0: i32, %arg1: memref<16x1xf32, #tpu.memory_space<vmem>>, %arg2: memref<1x32xf32, #tpu.memory_space<vmem>>, %arg3: memref<1x48xf32, #tpu.memory_space<vmem>>, %arg4: memref<16x32xf32, #tpu.memory_space<vmem>>, %arg5: memref<16x48xf32, #tpu.memory_space<vmem>>) attributes {dimension_semantics = [#tpu.dimension_semantics<parallel>], iteration_bounds = array<i64: 2>, scalar_prefetch = 0 : i64, scratch_operands = 0 : i64, tpu.core_type = #tpu.core_type<tc>, window_params = [{transform_indices = @transform_0, window_bounds = array<i64: 16, 1>}, {pipeline_mode = #tpu.pipeline_mode<synchronous>, transform_indices = @transform_1, window_bounds = array<i64: 1, 32>}, {pipeline_mode = #tpu.pipeline_mode<synchronous>, transform_indices = @transform_2, window_bounds = array<i64: 1, 48>}, {transform_indices = @transform_3, window_bounds = array<i64: 16, 32>}, {transform_indices = @transform_4, window_bounds = array<i64: 16, 48>}]} {
    %c0 = arith.constant 0 : index
    %c0_0 = arith.constant 0 : index
    %0 = vector.load %arg1[%c0, %c0_0] : memref<16x1xf32, #tpu.memory_space<vmem>>, vector<16x1xf32>
    %c0_1 = arith.constant 0 : index
    %c0_2 = arith.constant 0 : index
    %1 = vector.load %arg2[%c0_1, %c0_2] : memref<1x32xf32, #tpu.memory_space<vmem>>, vector<1x32xf32>
    %2 = vector.broadcast %0 : vector<16x1xf32> to vector<16x32xf32>
    %3 = vector.broadcast %1 : vector<1x32xf32> to vector<16x32xf32>
    %4 = arith.subf %2, %3 : vector<16x32xf32>
    %cst = arith.constant -5.000000e-01 : f32
    %5 = vector.broadcast %cst : f32 to vector<16x32xf32>
    %6 = arith.mulf %5, %4 : vector<16x32xf32>
    %7 = arith.mulf %6, %4 : vector<16x32xf32>
    %cst_3 = arith.constant 1.000000e+00 : f32
    %8 = vector.broadcast %cst_3 : f32 to vector<16x32xf32>
    %9 = arith.divf %7, %8 : vector<16x32xf32>
    %10 = math.exp %9 : vector<16x32xf32>
    %cst_4 = arith.constant 1.000000e+00 : f32
    %11 = vector.broadcast %cst_4 : f32 to vector<16x32xf32>
    %12 = arith.mulf %11, %10 : vector<16x32xf32>
    %c16_i32 = arith.constant 16 : i32
    %13 = arith.muli %arg0, %c16_i32 : i32
    %14 = tpu.iota {dimensions = array<i32: 0>} : vector<16x32xi32>
    %15 = vector.broadcast %13 : i32 to vector<16x32xi32>
    %16 = arith.addi %15, %14 : vector<16x32xi32>
    %17 = tpu.iota {dimensions = array<i32: 1>} : vector<16x32xi32>
    %18 = arith.cmpi eq, %16, %17 : vector<16x32xi32>
    %cst_5 = arith.constant 9.99999974E-5 : f32
    %19 = vector.broadcast %cst_5 : f32 to vector<16x32xf32>
    %20 = arith.addf %12, %19 : vector<16x32xf32>
    %21 = arith.select %18, %20, %12 : vector<16x32xi1>, vector<16x32xf32>
    %c0_6 = arith.constant 0 : index
    %c0_7 = arith.constant 0 : index
    %22 = vector.load %arg4[%c0_6, %c0_7] : memref<16x32xf32, #tpu.memory_space<vmem>>, vector<16x32xf32>
    tpu.vector_store %arg4[%c0_6, %c0_7], %21 {strides = array<i32>} : memref<16x32xf32, #tpu.memory_space<vmem>>, vector<16x32xf32>,
    %c0_8 = arith.constant 0 : index
    %c0_9 = arith.constant 0 : index
    %23 = vector.load %arg3[%c0_8, %c0_9] : memref<1x48xf32, #tpu.memory_space<vmem>>, vector<1x48xf32>
    %24 = vector.broadcast %0 : vector<16x1xf32> to vector<16x48xf32>
    %25 = vector.broadcast %23 : vector<1x48xf32> to vector<16x48xf32>
    %26 = arith.subf %24, %25 : vector<16x48xf32>
    %cst_10 = arith.constant -5.000000e-01 : f32
    %27 = vector.broadcast %cst_10 : f32 to vector<16x48xf32>
    %28 = arith.mulf %27, %26 : vector<16x48xf32>
    %29 = arith.mulf %28, %26 : vector<16x48xf32>
    %cst_11 = arith.constant 1.000000e+00 : f32
    %30 = vector.broadcast %cst_11 : f32 to vector<16x48xf32>
    %31 = arith.divf %29, %30 : vector<16x48xf32>
    %32 = math.exp %31 : vector<16x48xf32>
    %cst_12 = arith.constant 1.000000e+00 : f32
    %33 = vector.broadcast %cst_12 : f32 to vector<16x48xf32>
    %34 = arith.mulf %33, %32 : vector<16x48xf32>
    %c0_13 = arith.constant 0 : index
    %c0_14 = arith.constant 0 : index
    %35 = vector.load %arg5[%c0_13, %c0_14] : memref<16x48xf32, #tpu.memory_space<vmem>>, vector<16x48xf32>
    tpu.vector_store %arg5[%c0_13, %c0_14], %34 {strides = array<i32>} : memref<16x48xf32, #tpu.memory_space<vmem>>, vector<16x48xf32>,
    return
  }
  func.func @transform_0(%arg0: i32) -> (i32, i32) {
    %c0_i32 = arith.constant 0 : i32
    %c0_i32_0 = arith.constant 0 : i32
    return %arg0, %c0_i32 : i32, i32
  }
  func.func @transform_1(%arg0: i32) -> (i32, i32) {
    %c0_i32 = arith.constant 0 : i32
    %c0_i32_0 = arith.constant 0 : i32
    %c0_i32_1 = arith.constant 0 : i32
    return %c0_i32, %c0_i32_0 : i32, i32
  }
  func.func @transform_2(%arg0: i32) -> (i32, i32) {
    %c0_i32 = arith.constant 0 : i32
    %c0_i32_0 = arith.constant 0 : i32
    %c0_i32_1 = arith.constant 0 : i32
    return %c0_i32, %c0_i32_0 : i32, i32
  }
  func.func @transform_3(%arg0: i32) -> (i32, i32) {
    %c0_i32 = arith.constant 0 : i32
    %c0_i32_0 = arith.constant 0 : i32
    return %arg0, %c0_i32 : i32, i32
  }
  func.func @transform_4(%arg0: i32) -> (i32, i32) {
    %c0_i32 = arith.constant 0 : i32
    %c0_i32_0 = arith.constant 0 : i32
    return %arg0, %c0_i32 : i32, i32
  }
}

module attributes {stable_mosaic.version = 11 : i64} {
  func.func @_matvec_body(%arg0: i32, %arg1: memref<1x32xf32, #tpu.memory_space<vmem>>, %arg2: memref<32x48xf32, #tpu.memory_space<vmem>>, %arg3: memref<1x48xf32, #tpu.memory_space<vmem>>, %arg4: memref<1x48xf32, #tpu.memory_space<vmem>>) attributes {dimension_semantics = [#tpu.dimension_semantics<arbitrary>], iteration_bounds = array<i64: 1>, scalar_prefetch = 0 : i64, scratch_operands = 1 : i64, tpu.core_type = #tpu.core_type<tc>, window_params = [{transform_indices = @transform_0, window_bounds = array<i64: 1, 32>}, {transform_indices = @transform_1, window_bounds = array<i64: 32, 48>}, {pipeline_mode = #tpu.pipeline_mode<synchronous>, transform_indices = @transform_2, window_bounds = array<i64: 1, 48>}]} {
    %c0_i32 = arith.constant 0 : i32
    %0 = arith.cmpi eq, %arg0, %c0_i32 : i32
    %1 = arith.extui %0 : i1 to i32
    %c0_i32_0 = arith.constant 0 : i32
    %2 = arith.cmpi ne, %1, %c0_i32_0 : i32
    scf.if %2 {
      %cst_10 = arith.constant 0.000000e+00 : f32
      %12 = vector.broadcast %cst_10 : f32 to vector<1x48xf32>
      %c0_11 = arith.constant 0 : index
      %c0_12 = arith.constant 0 : index
      %13 = vector.load %arg4[%c0_11, %c0_12] : memref<1x48xf32, #tpu.memory_space<vmem>>, vector<1x48xf32>
      tpu.vector_store %arg4[%c0_11, %c0_12], %12 {strides = array<i32>} : memref<1x48xf32, #tpu.memory_space<vmem>>, vector<1x48xf32>,
    } else {
    }
    %c0 = arith.constant 0 : index
    %c0_1 = arith.constant 0 : index
    %3 = vector.load %arg4[%c0, %c0_1] : memref<1x48xf32, #tpu.memory_space<vmem>>, vector<1x48xf32>
    %c0_2 = arith.constant 0 : index
    %c0_3 = arith.constant 0 : index
    %4 = vector.load %arg1[%c0_2, %c0_3] : memref<1x32xf32, #tpu.memory_space<vmem>>, vector<1x32xf32>
    %c0_4 = arith.constant 0 : index
    %c0_5 = arith.constant 0 : index
    %5 = vector.load %arg2[%c0_4, %c0_5] : memref<32x48xf32, #tpu.memory_space<vmem>>, vector<32x48xf32>
    %cst = arith.constant dense<0.000000e+00> : vector<1x48xf32>
    %6 = tpu.matmul %4, %5, %cst {dimension_numbers = #tpu.dot_dimension_numbers<[1], [0], [0], [1], [0, 0, 1, 1], [], []>} : vector<1x32xf32>, vector<32x48xf32>, vector<1x48xf32> -> vector<1x48xf32>
    %7 = arith.addf %3, %6 : vector<1x48xf32>
    %c0_6 = arith.constant 0 : index
    %c0_7 = arith.constant 0 : index
    %8 = vector.load %arg4[%c0_6, %c0_7] : memref<1x48xf32, #tpu.memory_space<vmem>>, vector<1x48xf32>
    tpu.vector_store %arg4[%c0_6, %c0_7], %7 {strides = array<i32>} : memref<1x48xf32, #tpu.memory_space<vmem>>, vector<1x48xf32>,
    %c0_i32_8 = arith.constant 0 : i32
    %9 = arith.cmpi eq, %arg0, %c0_i32_8 : i32
    %10 = arith.extui %9 : i1 to i32
    %c0_i32_9 = arith.constant 0 : i32
    %11 = arith.cmpi ne, %10, %c0_i32_9 : i32
    scf.if %11 {
      %c0_10 = arith.constant 0 : index
      %c0_11 = arith.constant 0 : index
      %12 = vector.load %arg4[%c0_10, %c0_11] : memref<1x48xf32, #tpu.memory_space<vmem>>, vector<1x48xf32>
      %c0_12 = arith.constant 0 : index
      %c0_13 = arith.constant 0 : index
      %13 = vector.load %arg3[%c0_12, %c0_13] : memref<1x48xf32, #tpu.memory_space<vmem>>, vector<1x48xf32>
      tpu.vector_store %arg3[%c0_12, %c0_13], %12 {strides = array<i32>} : memref<1x48xf32, #tpu.memory_space<vmem>>, vector<1x48xf32>,
    } else {
    }
    return
  }
  func.func @transform_0(%arg0: i32) -> (i32, i32) {
    %c0_i32 = arith.constant 0 : i32
    %c0_i32_0 = arith.constant 0 : i32
    return %c0_i32, %arg0 : i32, i32
  }
  func.func @transform_1(%arg0: i32) -> (i32, i32) {
    %c0_i32 = arith.constant 0 : i32
    %c0_i32_0 = arith.constant 0 : i32
    return %arg0, %c0_i32 : i32, i32
  }
  func.func @transform_2(%arg0: i32) -> (i32, i32) {
    %c0_i32 = arith.constant 0 : i32
    %c0_i32_0 = arith.constant 0 : i32
    %c0_i32_1 = arith.constant 0 : i32
    return %c0_i32, %c0_i32_0 : i32, i32
  }
}

</mosaic_0001>

<llo_original>
// kernel: custom-call.8
$region0: #{custom-call.8}
  %s0 = inlined_call_operand.vmem [shape: f32[32,32], index: 0, kind: input, shape index: {}]
  %s1 = inlined_call_operand.vmem [shape: f32[32,32], index: 1, kind: output, shape index: {}]
  $region1: #{custom-call.8} parent=0
    #allocation0 [shape = 'u8[16384]{0}', space=vmem, size = 0x4000, scoped, tag = 'operand span for operand 0']
    #allocation1 [shape = 'u8[16384]{0}', space=vmem, size = 0x4000, scoped, tag = 'operand span for operand 1']
    // Predicated region
    $region2: #{custom-call.8} parent=1 // pred_check
      _
    $region3: #{custom-call.8} parent=1 // pred_check_branch
      %3 = sbr.rel (0) target = $region5
    $region4: #{custom-call.8} parent=1 // pred_region
      // Predicated region
      $region6: #{custom-call.8} parent=4 // pred_check
        _
      $region7: #{custom-call.8} parent=4 // pred_check_branch
        %5 = sbr.rel (0) target = $region9
      $region8: #{custom-call.8} parent=4 // pred_region
        // Predicated region
        $region21: #{custom-call.8} parent=8 // pred_check
          _
        $region22: #{custom-call.8} parent=8 // pred_check_branch
          %27 = sbr.rel (0) target = $region24
        $region23: #{custom-call.8} parent=8 // pred_region
          loop: start=0, step=1, limit=1
          $region25: #{custom-call.8} parent=23 // loop_pre_header
            _
          $region26: #{custom-call.8} parent=23 // loop_header
            %s29 = sphi 0, %s33
            %p30 = scmp.ge.s32.totalorder %s29, 1
            %s34 = sphi %s0, %s0
            %s35 = sphi [#allocation0], [#allocation0]
          $region27: #{custom-call.8} parent=23 // loop_header_branch
            %32 = sbr.rel (%p30) target = $region31
          $region28: #{custom-call.8} parent=23 // loop_body
            %v36 = vld [vmem:[%s34] sm:$0xff]
            %37 = vst [vmem:[%s35] sm:$0xff] %v36
            %v38 = vld [vmem:[%s34 + $0x8] sm:$0xff]
            %39 = vst [vmem:[%s35 + $0x8] sm:$0xff] %v38
            %v40 = vld [vmem:[%s34 + $0x10] sm:$0xff]
            %41 = vst [vmem:[%s35 + $0x10] sm:$0xff] %v40
            %v42 = vld [vmem:[%s34 + $0x18] sm:$0xff]
            %43 = vst [vmem:[%s35 + $0x18] sm:$0xff] %v42
          $region29: #{custom-call.8} parent=23 // loop_footer
            %s33 = sadd.s32 1, %s29
          $region30: #{custom-call.8} parent=23 // loop_footer_branch
            %28 = sbr.rel target = $region26
          $region31: #{custom-call.8} parent=23 // loop_exit
            _
        $region24: #{custom-call.8} parent=8 // pred_fallthru
          _
        // Predicated region
        $region32: #{custom-call.8} parent=8 // pred_check
          _
        $region33: #{custom-call.8} parent=8 // pred_check_branch
          %45 = sbr.rel target = $region35
        $region34: #{custom-call.8} parent=8 // pred_region
          _
        $region35: #{custom-call.8} parent=8 // pred_fallthru
          _
      $region9: #{custom-call.8} parent=4 // pred_fallthru
        _
      // Predicated region
      $region10: #{custom-call.8} parent=4 // pred_check
        _
      $region11: #{custom-call.8} parent=4 // pred_check_branch
        %7 = sbr.rel target = $region13
      $region12: #{custom-call.8} parent=4 // pred_region
        %s9 = ssub.s32 256, 1
        loop: start=0, step=1, limit=1
        $region14: #{custom-call.8} parent=12 // loop_pre_header
          _
        $region15: #{custom-call.8} parent=12 // loop_header
          %s11 = sphi 0, %s15
          %p12 = scmp.ge.s32.totalorder %s11, 1
          %s16 = sphi %s0, %s0
          %s17 = sphi [#allocation0], [#allocation0]
        $region16: #{custom-call.8} parent=12 // loop_header_branch
          %14 = sbr.rel (%p12) target = $region20
        $region17: #{custom-call.8} parent=12 // loop_body
          %v18 = vld [vmem:[%s16] sm:%s9]
          %19 = vst [vmem:[%s17] sm:%s9] %v18
          %v20 = vld [vmem:[%s16 + $0x8] sm:%s9]
          %21 = vst [vmem:[%s17 + $0x8] sm:%s9] %v20
          %v22 = vld [vmem:[%s16 + $0x10] sm:%s9]
          %23 = vst [vmem:[%s17 + $0x10] sm:%s9] %v22
          %v24 = vld [vmem:[%s16 + $0x18] sm:%s9]
          %25 = vst [vmem:[%s17 + $0x18] sm:%s9] %v24
        $region18: #{custom-call.8} parent=12 // loop_footer
          %s15 = sadd.s32 1, %s11
        $region19: #{custom-call.8} parent=12 // loop_footer_branch
          %10 = sbr.rel target = $region15
        $region20: #{custom-call.8} parent=12 // loop_exit
          _
      $region13: #{custom-call.8} parent=4 // pred_fallthru
        _
    $region5: #{custom-call.8} parent=1 // pred_fallthru
      _
    %46 = vnop
    %47 = vst [vmem:[#allocation1] sm:$0xff] 0.0
    %s48 = scalar_lea.vmem [#allocation1], 8
    %49 = vst [vmem:[%s48] sm:$0xff] 0.0
    %s50 = scalar_lea.vmem [#allocation1], 16
    %51 = vst [vmem:[%s50] sm:$0xff] 0.0
    %s52 = scalar_lea.vmem [#allocation1], 24
    %53 = vst [vmem:[%s52] sm:$0xff] 0.0
    %vm54 = vcmask 7168
    %v55 = vld [vmem:[#allocation1] ss:$0 sm:$0xff]
    %v56 = vld [vmem:[#allocation0] ss:$0 sm:$0xff]
    %v57 = vmul.f32 %v55, %v55
    %58 = vadd.xlane.f32.xlu0 %v57
    %v59 = vpop.xlane.xlu0 %58
    %v60 = vsub.f32 %v56, %v59
    %v61 = vrsqrt.pop %v60
    %v62 = vld [vmem:[#allocation0] sm:$0xff]
    %v63 = vld [vmem:[#allocation1] sm:$0xff]
    %v64 = vmul.f32 %v63, %v55
    %65 = vadd.xlane.f32.xlu0 %v64
    %v66 = vpop.xlane.xlu0 %65
    %v67 = vsub.f32 %v62, %v66
    %v68 = vmul.f32 %v67, %v61
    %v69 = vsel %vm54, %v68, 0.0
    %v70 = vadd.f32 %v63, %v69
    %71 = vst [vmem:[#allocation1] sm:$0xff] %v70
    %s72 = scalar_lea.vmem [#allocation0], 8
    %v73 = vld [vmem:[%s72] sm:$0xff]
    %s74 = scalar_lea.vmem [#allocation1], 8
    %v75 = vld [vmem:[%s74] sm:$0xff]
    %v76 = vmul.f32 %v75, %v55
    %77 = vadd.xlane.f32.xlu0 %v76
    %v78 = vpop.xlane.xlu0 %77
    %v79 = vsub.f32 %v73, %v78
    %v80 = vmul.f32 %v79, %v61
    %v81 = vsel %vm54, %v80, 0.0
    %v82 = vadd.f32 %v75, %v81
    %s83 = scalar_lea.vmem [#allocation1], 8
    %84 = vst [vmem:[%s83] sm:$0xff] %v82
    %s85 = scalar_lea.vmem [#allocation0], 16
    %v86 = vld [vmem:[%s85] sm:$0xff]
    %s87 = scalar_lea.vmem [#allocation1], 16
    %v88 = vld [vmem:[%s87] sm:$0xff]
    %v89 = vmul.f32 %v88, %v55
    %90 = vadd.xlane.f32.xlu0 %v89
    %v91 = vpop.xlane.xlu0 %90
    %v92 = vsub.f32 %v86, %v91
    %v93 = vmul.f32 %v92, %v61
    %v94 = vsel %vm54, %v93, 0.0
    %v95 = vadd.f32 %v88, %v94
    %s96 = scalar_lea.vmem [#allocation1], 16
    %97 = vst [vmem:[%s96] sm:$0xff] %v95
    %s98 = scalar_lea.vmem [#allocation0], 24
    %v99 = vld [vmem:[%s98] sm:$0xff]
    %s100 = scalar_lea.vmem [#allocation1], 24
    %v101 = vld [vmem:[%s100] sm:$0xff]
    %v102 = vmul.f32 %v101, %v55
    %103 = vadd.xlane.f32.xlu0 %v102
    %v104 = vpop.xlane.xlu0 %103
    %v105 = vsub.f32 %v99, %v104
    %v106 = vmul.f32 %v105, %v61
    %v107 = vsel %vm54, %v106, 0.0
    %v108 = vadd.f32 %v101, %v107
    %s109 = scalar_lea.vmem [#allocation1], 24
    %110 = vst [vmem:[%s109] sm:$0xff] %v108
    %vm111 = vcmask 15368
    %s112 = scalar_lea.vmem [#allocation1], 1
    %v113 = vld [vmem:[%s112] ss:$0 sm:$0xff]
    %s114 = scalar_lea.vmem [#allocation0], 1
    %v115 = vld [vmem:[%s114] ss:$0 sm:$0xff]
    %v116 = vmul.f32 %v113, %v113
    %117 = vadd.xlane.f32.xlu0 %v116
    %v118 = vpop.xlane.xlu0 %117
    %v119 = vsub.f32 %v115, %v118
    %v120 = vrsqrt.pop %v119
    %v121 = vld [vmem:[#allocation0] sm:$0xff]
    %v122 = vld [vmem:[#allocation1] sm:$0xff]
    %v123 = vmul.f32 %v122, %v113
    %124 = vadd.xlane.f32.xlu0 %v123
    %v125 = vpop.xlane.xlu0 %124
    %v126 = vsub.f32 %v121, %v125
    %v127 = vmul.f32 %v126, %v120
    %vm128 = vcmask 1047553
    %vm129 = vmand %vm111, %vm128
    %v130 = vsel %vm129, %v127, 0.0
    %v131 = vadd.f32 %v122, %v130
    %132 = vst [vmem:[#allocation1] sm:$0xff] %v131
    %s133 = scalar_lea.vmem [#allocation0], 8
    %v134 = vld [vmem:[%s133] sm:$0xff]
    %s135 = scalar_lea.vmem [#allocation1], 8
    %v136 = vld [vmem:[%s135] sm:$0xff]
    %v137 = vmul.f32 %v136, %v113
    %138 = vadd.xlane.f32.xlu0 %v137
    %v139 = vpop.xlane.xlu0 %138
    %v140 = vsub.f32 %v134, %v139
    %v141 = vmul.f32 %v140, %v120
    %v142 = vsel %vm111, %v141, 0.0
    %v143 = vadd.f32 %v136, %v142
    %s144 = scalar_lea.vmem [#allocation1], 8
    %145 = vst [vmem:[%s144] sm:$0xff] %v143
    %s146 = scalar_lea.vmem [#allocation0], 16
    %v147 = vld [vmem:[%s146] sm:$0xff]
    %s148 = scalar_lea.vmem [#allocation1], 16
    %v149 = vld [vmem:[%s148] sm:$0xff]
    %v150 = vmul.f32 %v149, %v113
    %151 = vadd.xlane.f32.xlu0 %v150
    %v152 = vpop.xlane.xlu0 %151
    %v153 = vsub.f32 %v147, %v152
    %v154 = vmul.f32 %v153, %v120
    %v155 = vsel %vm111, %v154, 0.0
    %v156 = vadd.f32 %v149, %v155
    %s157 = scalar_lea.vmem [#allocation1], 16
    %158 = vst [vmem:[%s157] sm:$0xff] %v156
    %s159 = scalar_lea.vmem [#allocation0], 24
    %v160 = vld [vmem:[%s159] sm:$0xff]
    %s161 = scalar_lea.vmem [#allocation1], 24
    %v162 = vld [vmem:[%s161] sm:$0xff]
    %v163 = vmul.f32 %v162, %v113
    %164 = vadd.xlane.f32.xlu0 %v163
    %v165 = vpop.xlane.xlu0 %164
    %v166 = vsub.f32 %v160, %v165
    %v167 = vmul.f32 %v166, %v120
    %v168 = vsel %vm111, %v167, 0.0
    %v169 = vadd.f32 %v162, %v168
    %s170 = scalar_lea.vmem [#allocation1], 24
    %171 = vst [vmem:[%s170] sm:$0xff] %v169
    %vm172 = vcmask 23568
    %s173 = scalar_lea.vmem [#allocation1], 2
    %v174 = vld [vmem:[%s173] ss:$0 sm:$0xff]
    %s175 = scalar_lea.vmem [#allocation0], 2
    %v176 = vld [vmem:[%s175] ss:$0 sm:$0xff]
    %v177 = vmul.f32 %v174, %v174
    %178 = vadd.xlane.f32.xlu0 %v177
    %v179 = vpop.xlane.xlu0 %178
    %v180 = vsub.f32 %v176, %v179
    %v181 = vrsqrt.pop %v180
    %v182 = vld [vmem:[#allocation0] sm:$0xff]
    %v183 = vld [vmem:[#allocation1] sm:$0xff]
    %v184 = vmul.f32 %v183, %v174
    %185 = vadd.xlane.f32.xlu0 %v184
    %v186 = vpop.xlane.xlu0 %185
    %v187 = vsub.f32 %v182, %v186
    %v188 = vmul.f32 %v187, %v181
    %vm189 = vcmask 1047554
    %vm190 = vmand %vm172, %vm189
    %v191 = vsel %vm190, %v188, 0.0
    %v192 = vadd.f32 %v183, %v191
    %193 = vst [vmem:[#allocation1] sm:$0xff] %v192
    %s194 = scalar_lea.vmem [#allocation0], 8
    %v195 = vld [vmem:[%s194] sm:$0xff]
    %s196 = scalar_lea.vmem [#allocation1], 8
    %v197 = vld [vmem:[%s196] sm:$0xff]
    %v198 = vmul.f32 %v197, %v174
    %199 = vadd.xlane.f32.xlu0 %v198
    %v200 = vpop.xlane.xlu0 %199
    %v201 = vsub.f32 %v195, %v200
    %v202 = vmul.f32 %v201, %v181
    %v203 = vsel %vm172, %v202, 0.0
    %v204 = vadd.f32 %v197, %v203
    %s205 = scalar_lea.vmem [#allocation1], 8
    %206 = vst [vmem:[%s205] sm:$0xff] %v204
    %s207 = scalar_lea.vmem [#allocation0], 16
    %v208 = vld [vmem:[%s207] sm:$0xff]
    %s209 = scalar_lea.vmem [#allocation1], 16
    %v210 = vld [vmem:[%s209] sm:$0xff]
    %v211 = vmul.f32 %v210, %v174
    %212 = vadd.xlane.f32.xlu0 %v211
    %v213 = vpop.xlane.xlu0 %212
    %v214 = vsub.f32 %v208, %v213
    %v215 = vmul.f32 %v214, %v181
    %v216 = vsel %vm172, %v215, 0.0
    %v217 = vadd.f32 %v210, %v216
    %s218 = scalar_lea.vmem [#allocation1], 16
    %219 = vst [vmem:[%s218] sm:$0xff] %v217
    %s220 = scalar_lea.vmem [#allocation0], 24
    %v221 = vld [vmem:[%s220] sm:$0xff]
    %s222 = scalar_lea.vmem [#allocation1], 24
    %v223 = vld [vmem:[%s222] sm:$0xff]
    %v224 = vmul.f32 %v223, %v174
    %225 = vadd.xlane.f32.xlu0 %v224
    %v226 = vpop.xlane.xlu0 %225
    %v227 = vsub.f32 %v221, %v226
    %v228 = vmul.f32 %v227, %v181
    %v229 = vsel %vm172, %v228, 0.0
    %v230 = vadd.f32 %v223, %v229
    %s231 = scalar_lea.vmem [#allocation1], 24
    %232 = vst [vmem:[%s231] sm:$0xff] %v230
    %vm233 = vcmask 31768
    %s234 = scalar_lea.vmem [#allocation1], 3
    %v235 = vld [vmem:[%s234] ss:$0 sm:$0xff]
    %s236 = scalar_lea.vmem [#allocation0], 3
    %v237 = vld [vmem:[%s236] ss:$0 sm:$0xff]
    %v238 = vmul.f32 %v235, %v235
    %239 = vadd.xlane.f32.xlu0 %v238
    %v240 = vpop.xlane.xlu0 %239
    %v241 = vsub.f32 %v237, %v240
    %v242 = vrsqrt.pop %v241
    %v243 = vld [vmem:[#allocation0] sm:$0xff]
    %v244 = vld [vmem:[#allocation1] sm:$0xff]
    %v245 = vmul.f32 %v244, %v235
    %246 = vadd.xlane.f32.xlu0 %v245
    %v247 = vpop.xlane.xlu0 %246
    %v248 = vsub.f32 %v243, %v247
    %v249 = vmul.f32 %v248, %v242
    %vm250 = vcmask 1047555
    %vm251 = vmand %vm233, %vm250
    %v252 = vsel %vm251, %v249, 0.0
    %v253 = vadd.f32 %v244, %v252
    %254 = vst [vmem:[#allocation1] sm:$0xff] %v253
    %s255 = scalar_lea.vmem [#allocation0], 8
    %v256 = vld [vmem:[%s255] sm:$0xff]
    %s257 = scalar_lea.vmem [#allocation1], 8
    %v258 = vld [vmem:[%s257] sm:$0xff]
    %v259 = vmul.f32 %v258, %v235
    %260 = vadd.xlane.f32.xlu0 %v259
    %v261 = vpop.xlane.xlu0 %260
    %v262 = vsub.f32 %v256, %v261
    %v263 = vmul.f32 %v262, %v242
    %v264 = vsel %vm233, %v263, 0.0
    %v265 = vadd.f32 %v258, %v264
    %s266 = scalar_lea.vmem [#allocation1], 8
    %267 = vst [vmem:[%s266] sm:$0xff] %v265
    %s268 = scalar_lea.vmem [#allocation0], 16
    %v269 = vld [vmem:[%s268] sm:$0xff]
    %s270 = scalar_lea.vmem [#allocation1], 16
    %v271 = vld [vmem:[%s270] sm:$0xff]
    %v272 = vmul.f32 %v271, %v235
    %273 = vadd.xlane.f32.xlu0 %v272
    %v274 = vpop.xlane.xlu0 %273
    %v275 = vsub.f32 %v269, %v274
    %v276 = vmul.f32 %v275, %v242
    %v277 = vsel %vm233, %v276, 0.0
    %v278 = vadd.f32 %v271, %v277
    %s279 = scalar_lea.vmem [#allocation1], 16
    %280 = vst [vmem:[%s279] sm:$0xff] %v278
    %s281 = scalar_lea.vmem [#allocation0], 24
    %v282 = vld [vmem:[%s281] sm:$0xff]
    %s283 = scalar_lea.vmem [#allocation1], 24
    %v284 = vld [vmem:[%s283] sm:$0xff]
    %v285 = vmul.f32 %v284, %v235
    %286 = vadd.xlane.f32.xlu0 %v285
    %v287 = vpop.xlane.xlu0 %286
    %v288 = vsub.f32 %v282, %v287
    %v289 = vmul.f32 %v288, %v242
    %v290 = vsel %vm233, %v289, 0.0
    %v291 = vadd.f32 %v284, %v290
    %s292 = scalar_lea.vmem [#allocation1], 24
    %293 = vst [vmem:[%s292] sm:$0xff] %v291
    %vm294 = vcmask 39968
    %s295 = scalar_lea.vmem [#allocation1], 4
    %v296 = vld [vmem:[%s295] ss:$0 sm:$0xff]
    %s297 = scalar_lea.vmem [#allocation0], 4
    %v298 = vld [vmem:[%s297] ss:$0 sm:$0xff]
    %v299 = vmul.f32 %v296, %v296
    %300 = vadd.xlane.f32.xlu0 %v299
    %v301 = vpop.xlane.xlu0 %300
    %v302 = vsub.f32 %v298, %v301
    %v303 = vrsqrt.pop %v302
    %v304 = vld [vmem:[#allocation0] sm:$0xff]
    %v305 = vld [vmem:[#allocation1] sm:$0xff]
    %v306 = vmul.f32 %v305, %v296
    %307 = vadd.xlane.f32.xlu0 %v306
    %v308 = vpop.xlane.xlu0 %307
    %v309 = vsub.f32 %v304, %v308
    %v310 = vmul.f32 %v309, %v303
    %vm311 = vcmask 1047556
    %vm312 = vmand %vm294, %vm311
    %v313 = vsel %vm312, %v310, 0.0
    %v314 = vadd.f32 %v305, %v313
    %315 = vst [vmem:[#allocation1] sm:$0xff] %v314
    %s316 = scalar_lea.vmem [#allocation0], 8
    %v317 = vld [vmem:[%s316] sm:$0xff]
    %s318 = scalar_lea.vmem [#allocation1], 8
    %v319 = vld [vmem:[%s318] sm:$0xff]
    %v320 = vmul.f32 %v319, %v296
    %321 = vadd.xlane.f32.xlu0 %v320
    %v322 = vpop.xlane.xlu0 %321
    %v323 = vsub.f32 %v317, %v322
    %v324 = vmul.f32 %v323, %v303
    %v325 = vsel %vm294, %v324, 0.0
    %v326 = vadd.f32 %v319, %v325
    %s327 = scalar_lea.vmem [#allocation1], 8
    %328 = vst [vmem:[%s327] sm:$0xff] %v326
    %s329 = scalar_lea.vmem [#allocation0], 16
    %v330 = vld [vmem:[%s329] sm:$0xff]
    %s331 = scalar_lea.vmem [#allocation1], 16
    %v332 = vld [vmem:[%s331] sm:$0xff]
    %v333 = vmul.f32 %v332, %v296
    %334 = vadd.xlane.f32.xlu0 %v333
    %v335 = vpop.xlane.xlu0 %334
    %v336 = vsub.f32 %v330, %v335
    %v337 = vmul.f32 %v336, %v303
    %v338 = vsel %vm294, %v337, 0.0
    %v339 = vadd.f32 %v332, %v338
    %s340 = scalar_lea.vmem [#allocation1], 16
    %341 = vst [vmem:[%s340] sm:$0xff] %v339
    %s342 = scalar_lea.vmem [#allocation0], 24
    %v343 = vld [vmem:[%s342] sm:$0xff]
    %s344 = scalar_lea.vmem [#allocation1], 24
    %v345 = vld [vmem:[%s344] sm:$0xff]
    %v346 = vmul.f32 %v345, %v296
    %347 = vadd.xlane.f32.xlu0 %v346
    %v348 = vpop.xlane.xlu0 %347
    %v349 = vsub.f32 %v343, %v348
    %v350 = vmul.f32 %v349, %v303
    %v351 = vsel %vm294, %v350, 0.0
    %v352 = vadd.f32 %v345, %v351
    %s353 = scalar_lea.vmem [#allocation1], 24
    %354 = vst [vmem:[%s353] sm:$0xff] %v352
    %vm355 = vcmask 48168
    %s356 = scalar_lea.vmem [#allocation1], 5
    %v357 = vld [vmem:[%s356] ss:$0 sm:$0xff]
    %s358 = scalar_lea.vmem [#allocation0], 5
    %v359 = vld [vmem:[%s358] ss:$0 sm:$0xff]
    %v360 = vmul.f32 %v357, %v357
    %361 = vadd.xlane.f32.xlu0 %v360
    %v362 = vpop.xlane.xlu0 %361
    %v363 = vsub.f32 %v359, %v362
    %v364 = vrsqrt.pop %v363
    %v365 = vld [vmem:[#allocation0] sm:$0xff]
    %v366 = vld [vmem:[#allocation1] sm:$0xff]
    %v367 = vmul.f32 %v366, %v357
    %368 = vadd.xlane.f32.xlu0 %v367
    %v369 = vpop.xlane.xlu0 %368
    %v370 = vsub.f32 %v365, %v369
    %v371 = vmul.f32 %v370, %v364
    %vm372 = vcmask 1047557
    %vm373 = vmand %vm355, %vm372
    %v374 = vsel %vm373, %v371, 0.0
    %v375 = vadd.f32 %v366, %v374
    %376 = vst [vmem:[#allocation1] sm:$0xff] %v375
    %s377 = scalar_lea.vmem [#allocation0], 8
    %v378 = vld [vmem:[%s377] sm:$0xff]
    %s379 = scalar_lea.vmem [#allocation1], 8
    %v380 = vld [vmem:[%s379] sm:$0xff]
    %v381 = vmul.f32 %v380, %v357
    %382 = vadd.xlane.f32.xlu0 %v381
    %v383 = vpop.xlane.xlu0 %382
    %v384 = vsub.f32 %v378, %v383
    %v385 = vmul.f32 %v384, %v364
    %v386 = vsel %vm355, %v385, 0.0
    %v387 = vadd.f32 %v380, %v386
    %s388 = scalar_lea.vmem [#allocation1], 8
    %389 = vst [vmem:[%s388] sm:$0xff] %v387
    %s390 = scalar_lea.vmem [#allocation0], 16
    %v391 = vld [vmem:[%s390] sm:$0xff]
    %s392 = scalar_lea.vmem [#allocation1], 16
    %v393 = vld [vmem:[%s392] sm:$0xff]
    %v394 = vmul.f32 %v393, %v357
    %395 = vadd.xlane.f32.xlu0 %v394
    %v396 = vpop.xlane.xlu0 %395
    %v397 = vsub.f32 %v391, %v396
    %v398 = vmul.f32 %v397, %v364
    %v399 = vsel %vm355, %v398, 0.0
    %v400 = vadd.f32 %v393, %v399
    %s401 = scalar_lea.vmem [#allocation1], 16
    %402 = vst [vmem:[%s401] sm:$0xff] %v400
    %s403 = scalar_lea.vmem [#allocation0], 24
    %v404 = vld [vmem:[%s403] sm:$0xff]
    %s405 = scalar_lea.vmem [#allocation1], 24
    %v406 = vld [vmem:[%s405] sm:$0xff]
    %v407 = vmul.f32 %v406, %v357
    %408 = vadd.xlane.f32.xlu0 %v407
    %v409 = vpop.xlane.xlu0 %408
    %v410 = vsub.f32 %v404, %v409
    %v411 = vmul.f32 %v410, %v364
    %v412 = vsel %vm355, %v411, 0.0
    %v413 = vadd.f32 %v406, %v412
    %s414 = scalar_lea.vmem [#allocation1], 24
    %415 = vst [vmem:[%s414] sm:$0xff] %v413
    %vm416 = vcmask 56368
    %s417 = scalar_lea.vmem [#allocation1], 6
    %v418 = vld [vmem:[%s417] ss:$0 sm:$0xff]
    %s419 = scalar_lea.vmem [#allocation0], 6
    %v420 = vld [vmem:[%s419] ss:$0 sm:$0xff]
    %v421 = vmul.f32 %v418, %v418
    %422 = vadd.xlane.f32.xlu0 %v421
    %v423 = vpop.xlane.xlu0 %422
    %v424 = vsub.f32 %v420, %v423
    %v425 = vrsqrt.pop %v424
    %v426 = vld [vmem:[#allocation0] sm:$0xff]
    %v427 = vld [vmem:[#allocation1] sm:$0xff]
    %v428 = vmul.f32 %v427, %v418
    %429 = vadd.xlane.f32.xlu0 %v428
    %v430 = vpop.xlane.xlu0 %429
    %v431 = vsub.f32 %v426, %v430
    %v432 = vmul.f32 %v431, %v425
    %vm433 = vcmask 1047558
    %vm434 = vmand %vm416, %vm433
    %v435 = vsel %vm434, %v432, 0.0
    %v436 = vadd.f32 %v427, %v435
    %437 = vst [vmem:[#allocation1] sm:$0xff] %v436
    %s438 = scalar_lea.vmem [#allocation0], 8
    %v439 = vld [vmem:[%s438] sm:$0xff]
    %s440 = scalar_lea.vmem [#allocation1], 8
    %v441 = vld [vmem:[%s440] sm:$0xff]
    %v442 = vmul.f32 %v441, %v418
    %443 = vadd.xlane.f32.xlu0 %v442
    %v444 = vpop.xlane.xlu0 %443
    %v445 = vsub.f32 %v439, %v444
    %v446 = vmul.f32 %v445, %v425
    %v447 = vsel %vm416, %v446, 0.0
    %v448 = vadd.f32 %v441, %v447
    %s449 = scalar_lea.vmem [#allocation1], 8
    %450 = vst [vmem:[%s449] sm:$0xff] %v448
    %s451 = scalar_lea.vmem [#allocation0], 16
    %v452 = vld [vmem:[%s451] sm:$0xff]
    %s453 = scalar_lea.vmem [#allocation1], 16
    %v454 = vld [vmem:[%s453] sm:$0xff]
    %v455 = vmul.f32 %v454, %v418
    %456 = vadd.xlane.f32.xlu0 %v455
    %v457 = vpop.xlane.xlu0 %456
    %v458 = vsub.f32 %v452, %v457
    %v459 = vmul.f32 %v458, %v425
    %v460 = vsel %vm416, %v459, 0.0
    %v461 = vadd.f32 %v454, %v460
    %s462 = scalar_lea.vmem [#allocation1], 16
    %463 = vst [vmem:[%s462] sm:$0xff] %v461
    %s464 = scalar_lea.vmem [#allocation0], 24
    %v465 = vld [vmem:[%s464] sm:$0xff]
    %s466 = scalar_lea.vmem [#allocation1], 24
    %v467 = vld [vmem:[%s466] sm:$0xff]
    %v468 = vmul.f32 %v467, %v418
    %469 = vadd.xlane.f32.xlu0 %v468
    %v470 = vpop.xlane.xlu0 %469
    %v471 = vsub.f32 %v465, %v470
    %v472 = vmul.f32 %v471, %v425
    %v473 = vsel %vm416, %v472, 0.0
    %v474 = vadd.f32 %v467, %v473
    %s475 = scalar_lea.vmem [#allocation1], 24
    %476 = vst [vmem:[%s475] sm:$0xff] %v474
    %vm477 = vcmask 64568
    %s478 = scalar_lea.vmem [#allocation1], 7
    %v479 = vld [vmem:[%s478] ss:$0 sm:$0xff]
    %s480 = scalar_lea.vmem [#allocation0], 7
    %v481 = vld [vmem:[%s480] ss:$0 sm:$0xff]
    %v482 = vmul.f32 %v479, %v479
    %483 = vadd.xlane.f32.xlu0 %v482
    %v484 = vpop.xlane.xlu0 %483
    %v485 = vsub.f32 %v481, %v484
    %v486 = vrsqrt.pop %v485
    %v487 = vld [vmem:[#allocation0] sm:$0xff]
    %v488 = vld [vmem:[#allocation1] sm:$0xff]
    %v489 = vmul.f32 %v488, %v479
    %490 = vadd.xlane.f32.xlu0 %v489
    %v491 = vpop.xlane.xlu0 %490
    %v492 = vsub.f32 %v487, %v491
    %v493 = vmul.f32 %v492, %v486
    %vm494 = vcmask 1047559
    %vm495 = vmand %vm477, %vm494
    %v496 = vsel %vm495, %v493, 0.0
    %v497 = vadd.f32 %v488, %v496
    %498 = vst [vmem:[#allocation1] sm:$0xff] %v497
    %s499 = scalar_lea.vmem [#allocation0], 8
    %v500 = vld [vmem:[%s499] sm:$0xff]
    %s501 = scalar_lea.vmem [#allocation1], 8
    %v502 = vld [vmem:[%s501] sm:$0xff]
    %v503 = vmul.f32 %v502, %v479
    %504 = vadd.xlane.f32.xlu0 %v503
    %v505 = vpop.xlane.xlu0 %504
    %v506 = vsub.f32 %v500, %v505
    %v507 = vmul.f32 %v506, %v486
    %v508 = vsel %vm477, %v507, 0.0
    %v509 = vadd.f32 %v502, %v508
    %s510 = scalar_lea.vmem [#allocation1], 8
    %511 = vst [vmem:[%s510] sm:$0xff] %v509
    %s512 = scalar_lea.vmem [#allocation0], 16
    %v513 = vld [vmem:[%s512] sm:$0xff]
    %s514 = scalar_lea.vmem [#allocation1], 16
    %v515 = vld [vmem:[%s514] sm:$0xff]
    %v516 = vmul.f32 %v515, %v479
    %517 = vadd.xlane.f32.xlu0 %v516
    %v518 = vpop.xlane.xlu0 %517
    %v519 = vsub.f32 %v513, %v518
    %v520 = vmul.f32 %v519, %v486
    %v521 = vsel %vm477, %v520, 0.0
    %v522 = vadd.f32 %v515, %v521
    %s523 = scalar_lea.vmem [#allocation1], 16
    %524 = vst [vmem:[%s523] sm:$0xff] %v522
    %s525 = scalar_lea.vmem [#allocation0], 24
    %v526 = vld [vmem:[%s525] sm:$0xff]
    %s527 = scalar_lea.vmem [#allocation1], 24
    %v528 = vld [vmem:[%s527] sm:$0xff]
    %v529 = vmul.f32 %v528, %v479
    %530 = vadd.xlane.f32.xlu0 %v529
    %v531 = vpop.xlane.xlu0 %530
    %v532 = vsub.f32 %v526, %v531
    %v533 = vmul.f32 %v532, %v486
    %v534 = vsel %vm477, %v533, 0.0
    %v535 = vadd.f32 %v528, %v534
    %s536 = scalar_lea.vmem [#allocation1], 24
    %537 = vst [vmem:[%s536] sm:$0xff] %v535
    %vm538 = vcmask 72768
    %s539 = scalar_lea.vmem [#allocation1], 8
    %v540 = vld [vmem:[%s539] ss:$0 sm:$0xff]
    %s541 = scalar_lea.vmem [#allocation0], 8
    %v542 = vld [vmem:[%s541] ss:$0 sm:$0xff]
    %v543 = vmul.f32 %v540, %v540
    %544 = vadd.xlane.f32.xlu0 %v543
    %v545 = vpop.xlane.xlu0 %544
    %v546 = vsub.f32 %v542, %v545
    %v547 = vrsqrt.pop %v546
    %s548 = scalar_lea.vmem [#allocation0], 8
    %v549 = vld [vmem:[%s548] sm:$0xff]
    %s550 = scalar_lea.vmem [#allocation1], 8
    %v551 = vld [vmem:[%s550] sm:$0xff]
    %v552 = vmul.f32 %v551, %v540
    %553 = vadd.xlane.f32.xlu0 %v552
    %v554 = vpop.xlane.xlu0 %553
    %v555 = vsub.f32 %v549, %v554
    %v556 = vmul.f32 %v555, %v547
    %v557 = vsel %vm538, %v556, 0.0
    %v558 = vadd.f32 %v551, %v557
    %s559 = scalar_lea.vmem [#allocation1], 8
    %560 = vst [vmem:[%s559] sm:$0xff] %v558
    %s561 = scalar_lea.vmem [#allocation0], 16
    %v562 = vld [vmem:[%s561] sm:$0xff]
    %s563 = scalar_lea.vmem [#allocation1], 16
    %v564 = vld [vmem:[%s563] sm:$0xff]
    %v565 = vmul.f32 %v564, %v540
    %566 = vadd.xlane.f32.xlu0 %v565
    %v567 = vpop.xlane.xlu0 %566
    %v568 = vsub.f32 %v562, %v567
    %v569 = vmul.f32 %v568, %v547
    %v570 = vsel %vm538, %v569, 0.0
    %v571 = vadd.f32 %v564, %v570
    %s572 = scalar_lea.vmem [#allocation1], 16
    %573 = vst [vmem:[%s572] sm:$0xff] %v571
    %s574 = scalar_lea.vmem [#allocation0], 24
    %v575 = vld [vmem:[%s574] sm:$0xff]
    %s576 = scalar_lea.vmem [#allocation1], 24
    %v577 = vld [vmem:[%s576] sm:$0xff]
    %v578 = vmul.f32 %v577, %v540
    %579 = vadd.xlane.f32.xlu0 %v578
    %v580 = vpop.xlane.xlu0 %579
    %v581 = vsub.f32 %v575, %v580
    %v582 = vmul.f32 %v581, %v547
    %v583 = vsel %vm538, %v582, 0.0
    %v584 = vadd.f32 %v577, %v583
    %s585 = scalar_lea.vmem [#allocation1], 24
    %586 = vst [vmem:[%s585] sm:$0xff] %v584
    %vm587 = vcmask 80968
    %s588 = scalar_lea.vmem [#allocation1], 9
    %v589 = vld [vmem:[%s588] ss:$0 sm:$0xff]
    %s590 = scalar_lea.vmem [#allocation0], 9
    %v591 = vld [vmem:[%s590] ss:$0 sm:$0xff]
    %v592 = vmul.f32 %v589, %v589
    %593 = vadd.xlane.f32.xlu0 %v592
    %v594 = vpop.xlane.xlu0 %593
    %v595 = vsub.f32 %v591, %v594
    %v596 = vrsqrt.pop %v595
    %s597 = scalar_lea.vmem [#allocation0], 8
    %v598 = vld [vmem:[%s597] sm:$0xff]
    %s599 = scalar_lea.vmem [#allocation1], 8
    %v600 = vld [vmem:[%s599] sm:$0xff]
    %v601 = vmul.f32 %v600, %v589
    %602 = vadd.xlane.f32.xlu0 %v601
    %v603 = vpop.xlane.xlu0 %602
    %v604 = vsub.f32 %v598, %v603
    %v605 = vmul.f32 %v604, %v596
    %vm606 = vcmask 1047553
    %vm607 = vmand %vm587, %vm606
    %v608 = vsel %vm607, %v605, 0.0
    %v609 = vadd.f32 %v600, %v608
    %s610 = scalar_lea.vmem [#allocation1], 8
    %611 = vst [vmem:[%s610] sm:$0xff] %v609
    %s612 = scalar_lea.vmem [#allocation0], 16
    %v613 = vld [vmem:[%s612] sm:$0xff]
    %s614 = scalar_lea.vmem [#allocation1], 16
    %v615 = vld [vmem:[%s614] sm:$0xff]
    %v616 = vmul.f32 %v615, %v589
    %617 = vadd.xlane.f32.xlu0 %v616
    %v618 = vpop.xlane.xlu0 %617
    %v619 = vsub.f32 %v613, %v618
    %v620 = vmul.f32 %v619, %v596
    %v621 = vsel %vm587, %v620, 0.0
    %v622 = vadd.f32 %v615, %v621
    %s623 = scalar_lea.vmem [#allocation1], 16
    %624 = vst [vmem:[%s623] sm:$0xff] %v622
    %s625 = scalar_lea.vmem [#allocation0], 24
    %v626 = vld [vmem:[%s625] sm:$0xff]
    %s627 = scalar_lea.vmem [#allocation1], 24
    %v628 = vld [vmem:[%s627] sm:$0xff]
    %v629 = vmul.f32 %v628, %v589
    %630 = vadd.xlane.f32.xlu0 %v629
    %v631 = vpop.xlane.xlu0 %630
    %v632 = vsub.f32 %v626, %v631
    %v633 = vmul.f32 %v632, %v596
    %v634 = vsel %vm587, %v633, 0.0
    %v635 = vadd.f32 %v628, %v634
    %s636 = scalar_lea.vmem [#allocation1], 24
    %637 = vst [vmem:[%s636] sm:$0xff] %v635
    %vm638 = vcmask 89168
    %s639 = scalar_lea.vmem [#allocation1], 10
    %v640 = vld [vmem:[%s639] ss:$0 sm:$0xff]
    %s641 = scalar_lea.vmem [#allocation0], 10
    %v642 = vld [vmem:[%s641] ss:$0 sm:$0xff]
    %v643 = vmul.f32 %v640, %v640
    %644 = vadd.xlane.f32.xlu0 %v643
    %v645 = vpop.xlane.xlu0 %644
    %v646 = vsub.f32 %v642, %v645
    %v647 = vrsqrt.pop %v646
    %s648 = scalar_lea.vmem [#allocation0], 8
    %v649 = vld [vmem:[%s648] sm:$0xff]
    %s650 = scalar_lea.vmem [#allocation1], 8
    %v651 = vld [vmem:[%s650] sm:$0xff]
    %v652 = vmul.f32 %v651, %v640
    %653 = vadd.xlane.f32.xlu0 %v652
    %v654 = vpop.xlane.xlu0 %653
    %v655 = vsub.f32 %v649, %v654
    %v656 = vmul.f32 %v655, %v647
    %vm657 = vcmask 1047554
    %vm658 = vmand %vm638, %vm657
    %v659 = vsel %vm658, %v656, 0.0
    %v660 = vadd.f32 %v651, %v659
    %s661 = scalar_lea.vmem [#allocation1], 8
    %662 = vst [vmem:[%s661] sm:$0xff] %v660
    %s663 = scalar_lea.vmem [#allocation0], 16
    %v664 = vld [vmem:[%s663] sm:$0xff]
    %s665 = scalar_lea.vmem [#allocation1], 16
    %v666 = vld [vmem:[%s665] sm:$0xff]
    %v667 = vmul.f32 %v666, %v640
    %668 = vadd.xlane.f32.xlu0 %v667
    %v669 = vpop.xlane.xlu0 %668
    %v670 = vsub.f32 %v664, %v669
    %v671 = vmul.f32 %v670, %v647
    %v672 = vsel %vm638, %v671, 0.0
    %v673 = vadd.f32 %v666, %v672
    %s674 = scalar_lea.vmem [#allocation1], 16
    %675 = vst [vmem:[%s674] sm:$0xff] %v673
    %s676 = scalar_lea.vmem [#allocation0], 24
    %v677 = vld [vmem:[%s676] sm:$0xff]
    %s678 = scalar_lea.vmem [#allocation1], 24
    %v679 = vld [vmem:[%s678] sm:$0xff]
    %v680 = vmul.f32 %v679, %v640
    %681 = vadd.xlane.f32.xlu0 %v680
    %v682 = vpop.xlane.xlu0 %681
    %v683 = vsub.f32 %v677, %v682
    %v684 = vmul.f32 %v683, %v647
    %v685 = vsel %vm638, %v684, 0.0
    %v686 = vadd.f32 %v679, %v685
    %s687 = scalar_lea.vmem [#allocation1], 24
    %688 = vst [vmem:[%s687] sm:$0xff] %v686
    %vm689 = vcmask 97368
    %s690 = scalar_lea.vmem [#allocation1], 11
    %v691 = vld [vmem:[%s690] ss:$0 sm:$0xff]
    %s692 = scalar_lea.vmem [#allocation0], 11
    %v693 = vld [vmem:[%s692] ss:$0 sm:$0xff]
    %v694 = vmul.f32 %v691, %v691
    %695 = vadd.xlane.f32.xlu0 %v694
    %v696 = vpop.xlane.xlu0 %695
    %v697 = vsub.f32 %v693, %v696
    %v698 = vrsqrt.pop %v697
    %s699 = scalar_lea.vmem [#allocation0], 8
    %v700 = vld [vmem:[%s699] sm:$0xff]
    %s701 = scalar_lea.vmem [#allocation1], 8
    %v702 = vld [vmem:[%s701] sm:$0xff]
    %v703 = vmul.f32 %v702, %v691
    %704 = vadd.xlane.f32.xlu0 %v703
    %v705 = vpop.xlane.xlu0 %704
    %v706 = vsub.f32 %v700, %v705
    %v707 = vmul.f32 %v706, %v698
    %vm708 = vcmask 1047555
    %vm709 = vmand %vm689, %vm708
    %v710 = vsel %vm709, %v707, 0.0
    %v711 = vadd.f32 %v702, %v710
    %s712 = scalar_lea.vmem [#allocation1], 8
    %713 = vst [vmem:[%s712] sm:$0xff] %v711
    %s714 = scalar_lea.vmem [#allocation0], 16
    %v715 = vld [vmem:[%s714] sm:$0xff]
    %s716 = scalar_lea.vmem [#allocation1], 16
    %v717 = vld [vmem:[%s716] sm:$0xff]
    %v718 = vmul.f32 %v717, %v691
    %719 = vadd.xlane.f32.xlu0 %v718
    %v720 = vpop.xlane.xlu0 %719
    %v721 = vsub.f32 %v715, %v720
    %v722 = vmul.f32 %v721, %v698
    %v723 = vsel %vm689, %v722, 0.0
    %v724 = vadd.f32 %v717, %v723
    %s725 = scalar_lea.vmem [#allocation1], 16
    %726 = vst [vmem:[%s725] sm:$0xff] %v724
    %s727 = scalar_lea.vmem [#allocation0], 24
    %v728 = vld [vmem:[%s727] sm:$0xff]
    %s729 = scalar_lea.vmem [#allocation1], 24
    %v730 = vld [vmem:[%s729] sm:$0xff]
    %v731 = vmul.f32 %v730, %v691
    %732 = vadd.xlane.f32.xlu0 %v731
    %v733 = vpop.xlane.xlu0 %732
    %v734 = vsub.f32 %v728, %v733
    %v735 = vmul.f32 %v734, %v698
    %v736 = vsel %vm689, %v735, 0.0
    %v737 = vadd.f32 %v730, %v736
    %s738 = scalar_lea.vmem [#allocation1], 24
    %739 = vst [vmem:[%s738] sm:$0xff] %v737
    %vm740 = vcmask 105568
    %s741 = scalar_lea.vmem [#allocation1], 12
    %v742 = vld [vmem:[%s741] ss:$0 sm:$0xff]
    %s743 = scalar_lea.vmem [#allocation0], 12
    %v744 = vld [vmem:[%s743] ss:$0 sm:$0xff]
    %v745 = vmul.f32 %v742, %v742
    %746 = vadd.xlane.f32.xlu0 %v745
    %v747 = vpop.xlane.xlu0 %746
    %v748 = vsub.f32 %v744, %v747
    %v749 = vrsqrt.pop %v748
    %s750 = scalar_lea.vmem [#allocation0], 8
    %v751 = vld [vmem:[%s750] sm:$0xff]
    %s752 = scalar_lea.vmem [#allocation1], 8
    %v753 = vld [vmem:[%s752] sm:$0xff]
    %v754 = vmul.f32 %v753, %v742
    %755 = vadd.xlane.f32.xlu0 %v754
    %v756 = vpop.xlane.xlu0 %755
    %v757 = vsub.f32 %v751, %v756
    %v758 = vmul.f32 %v757, %v749
    %vm759 = vcmask 1047556
    %vm760 = vmand %vm740, %vm759
    %v761 = vsel %vm760, %v758, 0.0
    %v762 = vadd.f32 %v753, %v761
    %s763 = scalar_lea.vmem [#allocation1], 8
    %764 = vst [vmem:[%s763] sm:$0xff] %v762
    %s765 = scalar_lea.vmem [#allocation0], 16
    %v766 = vld [vmem:[%s765] sm:$0xff]
    %s767 = scalar_lea.vmem [#allocation1], 16
    %v768 = vld [vmem:[%s767] sm:$0xff]
    %v769 = vmul.f32 %v768, %v742
    %770 = vadd.xlane.f32.xlu0 %v769
    %v771 = vpop.xlane.xlu0 %770
    %v772 = vsub.f32 %v766, %v771
    %v773 = vmul.f32 %v772, %v749
    %v774 = vsel %vm740, %v773, 0.0
    %v775 = vadd.f32 %v768, %v774
    %s776 = scalar_lea.vmem [#allocation1], 16
    %777 = vst [vmem:[%s776] sm:$0xff] %v775
    %s778 = scalar_lea.vmem [#allocation0], 24
    %v779 = vld [vmem:[%s778] sm:$0xff]
    %s780 = scalar_lea.vmem [#allocation1], 24
    %v781 = vld [vmem:[%s780] sm:$0xff]
    %v782 = vmul.f32 %v781, %v742
    %783 = vadd.xlane.f32.xlu0 %v782
    %v784 = vpop.xlane.xlu0 %783
    %v785 = vsub.f32 %v779, %v784
    %v786 = vmul.f32 %v785, %v749
    %v787 = vsel %vm740, %v786, 0.0
    %v788 = vadd.f32 %v781, %v787
    %s789 = scalar_lea.vmem [#allocation1], 24
    %790 = vst [vmem:[%s789] sm:$0xff] %v788
    %vm791 = vcmask 113768
    %s792 = scalar_lea.vmem [#allocation1], 13
    %v793 = vld [vmem:[%s792] ss:$0 sm:$0xff]
    %s794 = scalar_lea.vmem [#allocation0], 13
    %v795 = vld [vmem:[%s794] ss:$0 sm:$0xff]
    %v796 = vmul.f32 %v793, %v793
    %797 = vadd.xlane.f32.xlu0 %v796
    %v798 = vpop.xlane.xlu0 %797
    %v799 = vsub.f32 %v795, %v798
    %v800 = vrsqrt.pop %v799
    %s801 = scalar_lea.vmem [#allocation0], 8
    %v802 = vld [vmem:[%s801] sm:$0xff]
    %s803 = scalar_lea.vmem [#allocation1], 8
    %v804 = vld [vmem:[%s803] sm:$0xff]
    %v805 = vmul.f32 %v804, %v793
    %806 = vadd.xlane.f32.xlu0 %v805
    %v807 = vpop.xlane.xlu0 %806
    %v808 = vsub.f32 %v802, %v807
    %v809 = vmul.f32 %v808, %v800
    %vm810 = vcmask 1047557
    %vm811 = vmand %vm791, %vm810
    %v812 = vsel %vm811, %v809, 0.0
    %v813 = vadd.f32 %v804, %v812
    %s814 = scalar_lea.vmem [#allocation1], 8
    %815 = vst [vmem:[%s814] sm:$0xff] %v813
    %s816 = scalar_lea.vmem [#allocation0], 16
    %v817 = vld [vmem:[%s816] sm:$0xff]
    %s818 = scalar_lea.vmem [#allocation1], 16
    %v819 = vld [vmem:[%s818] sm:$0xff]
    %v820 = vmul.f32 %v819, %v793
    %821 = vadd.xlane.f32.xlu0 %v820
    %v822 = vpop.xlane.xlu0 %821
    %v823 = vsub.f32 %v817, %v822
    %v824 = vmul.f32 %v823, %v800
    %v825 = vsel %vm791, %v824, 0.0
    %v826 = vadd.f32 %v819, %v825
    %s827 = scalar_lea.vmem [#allocation1], 16
    %828 = vst [vmem:[%s827] sm:$0xff] %v826
    %s829 = scalar_lea.vmem [#allocation0], 24
    %v830 = vld [vmem:[%s829] sm:$0xff]
    %s831 = scalar_lea.vmem [#allocation1], 24
    %v832 = vld [vmem:[%s831] sm:$0xff]
    %v833 = vmul.f32 %v832, %v793
    %834 = vadd.xlane.f32.xlu0 %v833
    %v835 = vpop.xlane.xlu0 %834
    %v836 = vsub.f32 %v830, %v835
    %v837 = vmul.f32 %v836, %v800
    %v838 = vsel %vm791, %v837, 0.0
    %v839 = vadd.f32 %v832, %v838
    %s840 = scalar_lea.vmem [#allocation1], 24
    %841 = vst [vmem:[%s840] sm:$0xff] %v839
    %vm842 = vcmask 121968
    %s843 = scalar_lea.vmem [#allocation1], 14
    %v844 = vld [vmem:[%s843] ss:$0 sm:$0xff]
    %s845 = scalar_lea.vmem [#allocation0], 14
    %v846 = vld [vmem:[%s845] ss:$0 sm:$0xff]
    %v847 = vmul.f32 %v844, %v844
    %848 = vadd.xlane.f32.xlu0 %v847
    %v849 = vpop.xlane.xlu0 %848
    %v850 = vsub.f32 %v846, %v849
    %v851 = vrsqrt.pop %v850
    %s852 = scalar_lea.vmem [#allocation0], 8
    %v853 = vld [vmem:[%s852] sm:$0xff]
    %s854 = scalar_lea.vmem [#allocation1], 8
    %v855 = vld [vmem:[%s854] sm:$0xff]
    %v856 = vmul.f32 %v855, %v844
    %857 = vadd.xlane.f32.xlu0 %v856
    %v858 = vpop.xlane.xlu0 %857
    %v859 = vsub.f32 %v853, %v858
    %v860 = vmul.f32 %v859, %v851
    %vm861 = vcmask 1047558
    %vm862 = vmand %vm842, %vm861
    %v863 = vsel %vm862, %v860, 0.0
    %v864 = vadd.f32 %v855, %v863
    %s865 = scalar_lea.vmem [#allocation1], 8
    %866 = vst [vmem:[%s865] sm:$0xff] %v864
    %s867 = scalar_lea.vmem [#allocation0], 16
    %v868 = vld [vmem:[%s867] sm:$0xff]
    %s869 = scalar_lea.vmem [#allocation1], 16
    %v870 = vld [vmem:[%s869] sm:$0xff]
    %v871 = vmul.f32 %v870, %v844
    %872 = vadd.xlane.f32.xlu0 %v871
    %v873 = vpop.xlane.xlu0 %872
    %v874 = vsub.f32 %v868, %v873
    %v875 = vmul.f32 %v874, %v851
    %v876 = vsel %vm842, %v875, 0.0
    %v877 = vadd.f32 %v870, %v876
    %s878 = scalar_lea.vmem [#allocation1], 16
    %879 = vst [vmem:[%s878] sm:$0xff] %v877
    %s880 = scalar_lea.vmem [#allocation0], 24
    %v881 = vld [vmem:[%s880] sm:$0xff]
    %s882 = scalar_lea.vmem [#allocation1], 24
    %v883 = vld [vmem:[%s882] sm:$0xff]
    %v884 = vmul.f32 %v883, %v844
    %885 = vadd.xlane.f32.xlu0 %v884
    %v886 = vpop.xlane.xlu0 %885
    %v887 = vsub.f32 %v881, %v886
    %v888 = vmul.f32 %v887, %v851
    %v889 = vsel %vm842, %v888, 0.0
    %v890 = vadd.f32 %v883, %v889
    %s891 = scalar_lea.vmem [#allocation1], 24
    %892 = vst [vmem:[%s891] sm:$0xff] %v890
    %vm893 = vcmask 130168
    %s894 = scalar_lea.vmem [#allocation1], 15
    %v895 = vld [vmem:[%s894] ss:$0 sm:$0xff]
    %s896 = scalar_lea.vmem [#allocation0], 15
    %v897 = vld [vmem:[%s896] ss:$0 sm:$0xff]
    %v898 = vmul.f32 %v895, %v895
    %899 = vadd.xlane.f32.xlu0 %v898
    %v900 = vpop.xlane.xlu0 %899
    %v901 = vsub.f32 %v897, %v900
    %v902 = vrsqrt.pop %v901
    %s903 = scalar_lea.vmem [#allocation0], 8
    %v904 = vld [vmem:[%s903] sm:$0xff]
    %s905 = scalar_lea.vmem [#allocation1], 8
    %v906 = vld [vmem:[%s905] sm:$0xff]
    %v907 = vmul.f32 %v906, %v895
    %908 = vadd.xlane.f32.xlu0 %v907
    %v909 = vpop.xlane.xlu0 %908
    %v910 = vsub.f32 %v904, %v909
    %v911 = vmul.f32 %v910, %v902
    %vm912 = vcmask 1047559
    %vm913 = vmand %vm893, %vm912
    %v914 = vsel %vm913, %v911, 0.0
    %v915 = vadd.f32 %v906, %v914
    %s916 = scalar_lea.vmem [#allocation1], 8
    %917 = vst [vmem:[%s916] sm:$0xff] %v915
    %s918 = scalar_lea.vmem [#allocation0], 16
    %v919 = vld [vmem:[%s918] sm:$0xff]
    %s920 = scalar_lea.vmem [#allocation1], 16
    %v921 = vld [vmem:[%s920] sm:$0xff]
    %v922 = vmul.f32 %v921, %v895
    %923 = vadd.xlane.f32.xlu0 %v922
    %v924 = vpop.xlane.xlu0 %923
    %v925 = vsub.f32 %v919, %v924
    %v926 = vmul.f32 %v925, %v902
    %v927 = vsel %vm893, %v926, 0.0
    %v928 = vadd.f32 %v921, %v927
    %s929 = scalar_lea.vmem [#allocation1], 16
    %930 = vst [vmem:[%s929] sm:$0xff] %v928
    %s931 = scalar_lea.vmem [#allocation0], 24
    %v932 = vld [vmem:[%s931] sm:$0xff]
    %s933 = scalar_lea.vmem [#allocation1], 24
    %v934 = vld [vmem:[%s933] sm:$0xff]
    %v935 = vmul.f32 %v934, %v895
    %936 = vadd.xlane.f32.xlu0 %v935
    %v937 = vpop.xlane.xlu0 %936
    %v938 = vsub.f32 %v932, %v937
    %v939 = vmul.f32 %v938, %v902
    %v940 = vsel %vm893, %v939, 0.0
    %v941 = vadd.f32 %v934, %v940
    %s942 = scalar_lea.vmem [#allocation1], 24
    %943 = vst [vmem:[%s942] sm:$0xff] %v941
    %vm944 = vcmask 138368
    %s945 = scalar_lea.vmem [#allocation1], 16
    %v946 = vld [vmem:[%s945] ss:$0 sm:$0xff]
    %s947 = scalar_lea.vmem [#allocation0], 16
    %v948 = vld [vmem:[%s947] ss:$0 sm:$0xff]
    %v949 = vmul.f32 %v946, %v946
    %950 = vadd.xlane.f32.xlu0 %v949
    %v951 = vpop.xlane.xlu0 %950
    %v952 = vsub.f32 %v948, %v951
    %v953 = vrsqrt.pop %v952
    %s954 = scalar_lea.vmem [#allocation0], 16
    %v955 = vld [vmem:[%s954] sm:$0xff]
    %s956 = scalar_lea.vmem [#allocation1], 16
    %v957 = vld [vmem:[%s956] sm:$0xff]
    %v958 = vmul.f32 %v957, %v946
    %959 = vadd.xlane.f32.xlu0 %v958
    %v960 = vpop.xlane.xlu0 %959
    %v961 = vsub.f32 %v955, %v960
    %v962 = vmul.f32 %v961, %v953
    %v963 = vsel %vm944, %v962, 0.0
    %v964 = vadd.f32 %v957, %v963
    %s965 = scalar_lea.vmem [#allocation1], 16
    %966 = vst [vmem:[%s965] sm:$0xff] %v964
    %s967 = scalar_lea.vmem [#allocation0], 24
    %v968 = vld [vmem:[%s967] sm:$0xff]
    %s969 = scalar_lea.vmem [#allocation1], 24
    %v970 = vld [vmem:[%s969] sm:$0xff]
    %v971 = vmul.f32 %v970, %v946
    %972 = vadd.xlane.f32.xlu0 %v971
    %v973 = vpop.xlane.xlu0 %972
    %v974 = vsub.f32 %v968, %v973
    %v975 = vmul.f32 %v974, %v953
    %v976 = vsel %vm944, %v975, 0.0
    %v977 = vadd.f32 %v970, %v976
    %s978 = scalar_lea.vmem [#allocation1], 24
    %979 = vst [vmem:[%s978] sm:$0xff] %v977
    %vm980 = vcmask 146568
    %s981 = scalar_lea.vmem [#allocation1], 17
    %v982 = vld [vmem:[%s981] ss:$0 sm:$0xff]
    %s983 = scalar_lea.vmem [#allocation0], 17
    %v984 = vld [vmem:[%s983] ss:$0 sm:$0xff]
    %v985 = vmul.f32 %v982, %v982
    %986 = vadd.xlane.f32.xlu0 %v985
    %v987 = vpop.xlane.xlu0 %986
    %v988 = vsub.f32 %v984, %v987
    %v989 = vrsqrt.pop %v988
    %s990 = scalar_lea.vmem [#allocation0], 16
    %v991 = vld [vmem:[%s990] sm:$0xff]
    %s992 = scalar_lea.vmem [#allocation1], 16
    %v993 = vld [vmem:[%s992] sm:$0xff]
    %v994 = vmul.f32 %v993, %v982
    %995 = vadd.xlane.f32.xlu0 %v994
    %v996 = vpop.xlane.xlu0 %995
    %v997 = vsub.f32 %v991, %v996
    %v998 = vmul.f32 %v997, %v989
    %vm999 = vcmask 1047553
    %vm1000 = vmand %vm980, %vm999
    %v1001 = vsel %vm1000, %v998, 0.0
    %v1002 = vadd.f32 %v993, %v1001
    %s1003 = scalar_lea.vmem [#allocation1], 16
    %1004 = vst [vmem:[%s1003] sm:$0xff] %v1002
    %s1005 = scalar_lea.vmem [#allocation0], 24
    %v1006 = vld [vmem:[%s1005] sm:$0xff]
    %s1007 = scalar_lea.vmem [#allocation1], 24
    %v1008 = vld [vmem:[%s1007] sm:$0xff]
    %v1009 = vmul.f32 %v1008, %v982
    %1010 = vadd.xlane.f32.xlu0 %v1009
    %v1011 = vpop.xlane.xlu0 %1010
    %v1012 = vsub.f32 %v1006, %v1011
    %v1013 = vmul.f32 %v1012, %v989
    %v1014 = vsel %vm980, %v1013, 0.0
    %v1015 = vadd.f32 %v1008, %v1014
    %s1016 = scalar_lea.vmem [#allocation1], 24
    %1017 = vst [vmem:[%s1016] sm:$0xff] %v1015
    %vm1018 = vcmask 154768
    %s1019 = scalar_lea.vmem [#allocation1], 18
    %v1020 = vld [vmem:[%s1019] ss:$0 sm:$0xff]
    %s1021 = scalar_lea.vmem [#allocation0], 18
    %v1022 = vld [vmem:[%s1021] ss:$0 sm:$0xff]
    %v1023 = vmul.f32 %v1020, %v1020
    %1024 = vadd.xlane.f32.xlu0 %v1023
    %v1025 = vpop.xlane.xlu0 %1024
    %v1026 = vsub.f32 %v1022, %v1025
    %v1027 = vrsqrt.pop %v1026
    %s1028 = scalar_lea.vmem [#allocation0], 16
    %v1029 = vld [vmem:[%s1028] sm:$0xff]
    %s1030 = scalar_lea.vmem [#allocation1], 16
    %v1031 = vld [vmem:[%s1030] sm:$0xff]
    %v1032 = vmul.f32 %v1031, %v1020
    %1033 = vadd.xlane.f32.xlu0 %v1032
    %v1034 = vpop.xlane.xlu0 %1033
    %v1035 = vsub.f32 %v1029, %v1034
    %v1036 = vmul.f32 %v1035, %v1027
    %vm1037 = vcmask 1047554
    %vm1038 = vmand %vm1018, %vm1037
    %v1039 = vsel %vm1038, %v1036, 0.0
    %v1040 = vadd.f32 %v1031, %v1039
    %s1041 = scalar_lea.vmem [#allocation1], 16
    %1042 = vst [vmem:[%s1041] sm:$0xff] %v1040
    %s1043 = scalar_lea.vmem [#allocation0], 24
    %v1044 = vld [vmem:[%s1043] sm:$0xff]
    %s1045 = scalar_lea.vmem [#allocation1], 24
    %v1046 = vld [vmem:[%s1045] sm:$0xff]
    %v1047 = vmul.f32 %v1046, %v1020
    %1048 = vadd.xlane.f32.xlu0 %v1047
    %v1049 = vpop.xlane.xlu0 %1048
    %v1050 = vsub.f32 %v1044, %v1049
    %v1051 = vmul.f32 %v1050, %v1027
    %v1052 = vsel %vm1018, %v1051, 0.0
    %v1053 = vadd.f32 %v1046, %v1052
    %s1054 = scalar_lea.vmem [#allocation1], 24
    %1055 = vst [vmem:[%s1054] sm:$0xff] %v1053
    %vm1056 = vcmask 162968
    %s1057 = scalar_lea.vmem [#allocation1], 19
    %v1058 = vld [vmem:[%s1057] ss:$0 sm:$0xff]
    %s1059 = scalar_lea.vmem [#allocation0], 19
    %v1060 = vld [vmem:[%s1059] ss:$0 sm:$0xff]
    %v1061 = vmul.f32 %v1058, %v1058
    %1062 = vadd.xlane.f32.xlu0 %v1061
    %v1063 = vpop.xlane.xlu0 %1062
    %v1064 = vsub.f32 %v1060, %v1063
    %v1065 = vrsqrt.pop %v1064
    %s1066 = scalar_lea.vmem [#allocation0], 16
    %v1067 = vld [vmem:[%s1066] sm:$0xff]
    %s1068 = scalar_lea.vmem [#allocation1], 16
    %v1069 = vld [vmem:[%s1068] sm:$0xff]
    %v1070 = vmul.f32 %v1069, %v1058
    %1071 = vadd.xlane.f32.xlu0 %v1070
    %v1072 = vpop.xlane.xlu0 %1071
    %v1073 = vsub.f32 %v1067, %v1072
    %v1074 = vmul.f32 %v1073, %v1065
    %vm1075 = vcmask 1047555
    %vm1076 = vmand %vm1056, %vm1075
    %v1077 = vsel %vm1076, %v1074, 0.0
    %v1078 = vadd.f32 %v1069, %v1077
    %s1079 = scalar_lea.vmem [#allocation1], 16
    %1080 = vst [vmem:[%s1079] sm:$0xff] %v1078
    %s1081 = scalar_lea.vmem [#allocation0], 24
    %v1082 = vld [vmem:[%s1081] sm:$0xff]
    %s1083 = scalar_lea.vmem [#allocation1], 24
    %v1084 = vld [vmem:[%s1083] sm:$0xff]
    %v1085 = vmul.f32 %v1084, %v1058
    %1086 = vadd.xlane.f32.xlu0 %v1085
    %v1087 = vpop.xlane.xlu0 %1086
    %v1088 = vsub.f32 %v1082, %v1087
    %v1089 = vmul.f32 %v1088, %v1065
    %v1090 = vsel %vm1056, %v1089, 0.0
    %v1091 = vadd.f32 %v1084, %v1090
    %s1092 = scalar_lea.vmem [#allocation1], 24
    %1093 = vst [vmem:[%s1092] sm:$0xff] %v1091
    %vm1094 = vcmask 171168
    %s1095 = scalar_lea.vmem [#allocation1], 20
    %v1096 = vld [vmem:[%s1095] ss:$0 sm:$0xff]
    %s1097 = scalar_lea.vmem [#allocation0], 20
    %v1098 = vld [vmem:[%s1097] ss:$0 sm:$0xff]
    %v1099 = vmul.f32 %v1096, %v1096
    %1100 = vadd.xlane.f32.xlu0 %v1099
    %v1101 = vpop.xlane.xlu0 %1100
    %v1102 = vsub.f32 %v1098, %v1101
    %v1103 = vrsqrt.pop %v1102
    %s1104 = scalar_lea.vmem [#allocation0], 16
    %v1105 = vld [vmem:[%s1104] sm:$0xff]
    %s1106 = scalar_lea.vmem [#allocation1], 16
    %v1107 = vld [vmem:[%s1106] sm:$0xff]
    %v1108 = vmul.f32 %v1107, %v1096
    %1109 = vadd.xlane.f32.xlu0 %v1108
    %v1110 = vpop.xlane.xlu0 %1109
    %v1111 = vsub.f32 %v1105, %v1110
    %v1112 = vmul.f32 %v1111, %v1103
    %vm1113 = vcmask 1047556
    %vm1114 = vmand %vm1094, %vm1113
    %v1115 = vsel %vm1114, %v1112, 0.0
    %v1116 = vadd.f32 %v1107, %v1115
    %s1117 = scalar_lea.vmem [#allocation1], 16
    %1118 = vst [vmem:[%s1117] sm:$0xff] %v1116
    %s1119 = scalar_lea.vmem [#allocation0], 24
    %v1120 = vld [vmem:[%s1119] sm:$0xff]
    %s1121 = scalar_lea.vmem [#allocation1], 24
    %v1122 = vld [vmem:[%s1121] sm:$0xff]
    %v1123 = vmul.f32 %v1122, %v1096
    %1124 = vadd.xlane.f32.xlu0 %v1123
    %v1125 = vpop.xlane.xlu0 %1124
    %v1126 = vsub.f32 %v1120, %v1125
    %v1127 = vmul.f32 %v1126, %v1103
    %v1128 = vsel %vm1094, %v1127, 0.0
    %v1129 = vadd.f32 %v1122, %v1128
    %s1130 = scalar_lea.vmem [#allocation1], 24
    %1131 = vst [vmem:[%s1130] sm:$0xff] %v1129
    %vm1132 = vcmask 179368
    %s1133 = scalar_lea.vmem [#allocation1], 21
    %v1134 = vld [vmem:[%s1133] ss:$0 sm:$0xff]
    %s1135 = scalar_lea.vmem [#allocation0], 21
    %v1136 = vld [vmem:[%s1135] ss:$0 sm:$0xff]
    %v1137 = vmul.f32 %v1134, %v1134
    %1138 = vadd.xlane.f32.xlu0 %v1137
    %v1139 = vpop.xlane.xlu0 %1138
    %v1140 = vsub.f32 %v1136, %v1139
    %v1141 = vrsqrt.pop %v1140
    %s1142 = scalar_lea.vmem [#allocation0], 16
    %v1143 = vld [vmem:[%s1142] sm:$0xff]
    %s1144 = scalar_lea.vmem [#allocation1], 16
    %v1145 = vld [vmem:[%s1144] sm:$0xff]
    %v1146 = vmul.f32 %v1145, %v1134
    %1147 = vadd.xlane.f32.xlu0 %v1146
    %v1148 = vpop.xlane.xlu0 %1147
    %v1149 = vsub.f32 %v1143, %v1148
    %v1150 = vmul.f32 %v1149, %v1141
    %vm1151 = vcmask 1047557
    %vm1152 = vmand %vm1132, %vm1151
    %v1153 = vsel %vm1152, %v1150, 0.0
    %v1154 = vadd.f32 %v1145, %v1153
    %s1155 = scalar_lea.vmem [#allocation1], 16
    %1156 = vst [vmem:[%s1155] sm:$0xff] %v1154
    %s1157 = scalar_lea.vmem [#allocation0], 24
    %v1158 = vld [vmem:[%s1157] sm:$0xff]
    %s1159 = scalar_lea.vmem [#allocation1], 24
    %v1160 = vld [vmem:[%s1159] sm:$0xff]
    %v1161 = vmul.f32 %v1160, %v1134
    %1162 = vadd.xlane.f32.xlu0 %v1161
    %v1163 = vpop.xlane.xlu0 %1162
    %v1164 = vsub.f32 %v1158, %v1163
    %v1165 = vmul.f32 %v1164, %v1141
    %v1166 = vsel %vm1132, %v1165, 0.0
    %v1167 = vadd.f32 %v1160, %v1166
    %s1168 = scalar_lea.vmem [#allocation1], 24
    %1169 = vst [vmem:[%s1168] sm:$0xff] %v1167
    %vm1170 = vcmask 187568
    %s1171 = scalar_lea.vmem [#allocation1], 22
    %v1172 = vld [vmem:[%s1171] ss:$0 sm:$0xff]
    %s1173 = scalar_lea.vmem [#allocation0], 22
    %v1174 = vld [vmem:[%s1173] ss:$0 sm:$0xff]
    %v1175 = vmul.f32 %v1172, %v1172
    %1176 = vadd.xlane.f32.xlu0 %v1175
    %v1177 = vpop.xlane.xlu0 %1176
    %v1178 = vsub.f32 %v1174, %v1177
    %v1179 = vrsqrt.pop %v1178
    %s1180 = scalar_lea.vmem [#allocation0], 16
    %v1181 = vld [vmem:[%s1180] sm:$0xff]
    %s1182 = scalar_lea.vmem [#allocation1], 16
    %v1183 = vld [vmem:[%s1182] sm:$0xff]
    %v1184 = vmul.f32 %v1183, %v1172
    %1185 = vadd.xlane.f32.xlu0 %v1184
    %v1186 = vpop.xlane.xlu0 %1185
    %v1187 = vsub.f32 %v1181, %v1186
    %v1188 = vmul.f32 %v1187, %v1179
    %vm1189 = vcmask 1047558
    %vm1190 = vmand %vm1170, %vm1189
    %v1191 = vsel %vm1190, %v1188, 0.0
    %v1192 = vadd.f32 %v1183, %v1191
    %s1193 = scalar_lea.vmem [#allocation1], 16
    %1194 = vst [vmem:[%s1193] sm:$0xff] %v1192
    %s1195 = scalar_lea.vmem [#allocation0], 24
    %v1196 = vld [vmem:[%s1195] sm:$0xff]
    %s1197 = scalar_lea.vmem [#allocation1], 24
    %v1198 = vld [vmem:[%s1197] sm:$0xff]
    %v1199 = vmul.f32 %v1198, %v1172
    %1200 = vadd.xlane.f32.xlu0 %v1199
    %v1201 = vpop.xlane.xlu0 %1200
    %v1202 = vsub.f32 %v1196, %v1201
    %v1203 = vmul.f32 %v1202, %v1179
    %v1204 = vsel %vm1170, %v1203, 0.0
    %v1205 = vadd.f32 %v1198, %v1204
    %s1206 = scalar_lea.vmem [#allocation1], 24
    %1207 = vst [vmem:[%s1206] sm:$0xff] %v1205
    %vm1208 = vcmask 195768
    %s1209 = scalar_lea.vmem [#allocation1], 23
    %v1210 = vld [vmem:[%s1209] ss:$0 sm:$0xff]
    %s1211 = scalar_lea.vmem [#allocation0], 23
    %v1212 = vld [vmem:[%s1211] ss:$0 sm:$0xff]
    %v1213 = vmul.f32 %v1210, %v1210
    %1214 = vadd.xlane.f32.xlu0 %v1213
    %v1215 = vpop.xlane.xlu0 %1214
    %v1216 = vsub.f32 %v1212, %v1215
    %v1217 = vrsqrt.pop %v1216
    %s1218 = scalar_lea.vmem [#allocation0], 16
    %v1219 = vld [vmem:[%s1218] sm:$0xff]
    %s1220 = scalar_lea.vmem [#allocation1], 16
    %v1221 = vld [vmem:[%s1220] sm:$0xff]
    %v1222 = vmul.f32 %v1221, %v1210
    %1223 = vadd.xlane.f32.xlu0 %v1222
    %v1224 = vpop.xlane.xlu0 %1223
    %v1225 = vsub.f32 %v1219, %v1224
    %v1226 = vmul.f32 %v1225, %v1217
    %vm1227 = vcmask 1047559
    %vm1228 = vmand %vm1208, %vm1227
    %v1229 = vsel %vm1228, %v1226, 0.0
    %v1230 = vadd.f32 %v1221, %v1229
    %s1231 = scalar_lea.vmem [#allocation1], 16
    %1232 = vst [vmem:[%s1231] sm:$0xff] %v1230
    %s1233 = scalar_lea.vmem [#allocation0], 24
    %v1234 = vld [vmem:[%s1233] sm:$0xff]
    %s1235 = scalar_lea.vmem [#allocation1], 24
    %v1236 = vld [vmem:[%s1235] sm:$0xff]
    %v1237 = vmul.f32 %v1236, %v1210
    %1238 = vadd.xlane.f32.xlu0 %v1237
    %v1239 = vpop.xlane.xlu0 %1238
    %v1240 = vsub.f32 %v1234, %v1239
    %v1241 = vmul.f32 %v1240, %v1217
    %v1242 = vsel %vm1208, %v1241, 0.0
    %v1243 = vadd.f32 %v1236, %v1242
    %s1244 = scalar_lea.vmem [#allocation1], 24
    %1245 = vst [vmem:[%s1244] sm:$0xff] %v1243
    %vm1246 = vcmask 203968
    %s1247 = scalar_lea.vmem [#allocation1], 24
    %v1248 = vld [vmem:[%s1247] ss:$0 sm:$0xff]
    %s1249 = scalar_lea.vmem [#allocation0], 24
    %v1250 = vld [vmem:[%s1249] ss:$0 sm:$0xff]
    %v1251 = vmul.f32 %v1248, %v1248
    %1252 = vadd.xlane.f32.xlu0 %v1251
    %v1253 = vpop.xlane.xlu0 %1252
    %v1254 = vsub.f32 %v1250, %v1253
    %v1255 = vrsqrt.pop %v1254
    %s1256 = scalar_lea.vmem [#allocation0], 24
    %v1257 = vld [vmem:[%s1256] sm:$0xff]
    %s1258 = scalar_lea.vmem [#allocation1], 24
    %v1259 = vld [vmem:[%s1258] sm:$0xff]
    %v1260 = vmul.f32 %v1259, %v1248
    %1261 = vadd.xlane.f32.xlu0 %v1260
    %v1262 = vpop.xlane.xlu0 %1261
    %v1263 = vsub.f32 %v1257, %v1262
    %v1264 = vmul.f32 %v1263, %v1255
    %v1265 = vsel %vm1246, %v1264, 0.0
    %v1266 = vadd.f32 %v1259, %v1265
    %s1267 = scalar_lea.vmem [#allocation1], 24
    %1268 = vst [vmem:[%s1267] sm:$0xff] %v1266
    %vm1269 = vcmask 212168
    %s1270 = scalar_lea.vmem [#allocation1], 25
    %v1271 = vld [vmem:[%s1270] ss:$0 sm:$0xff]
    %s1272 = scalar_lea.vmem [#allocation0], 25
    %v1273 = vld [vmem:[%s1272] ss:$0 sm:$0xff]
    %v1274 = vmul.f32 %v1271, %v1271
    %1275 = vadd.xlane.f32.xlu0 %v1274
    %v1276 = vpop.xlane.xlu0 %1275
    %v1277 = vsub.f32 %v1273, %v1276
    %v1278 = vrsqrt.pop %v1277
    %s1279 = scalar_lea.vmem [#allocation0], 24
    %v1280 = vld [vmem:[%s1279] sm:$0xff]
    %s1281 = scalar_lea.vmem [#allocation1], 24
    %v1282 = vld [vmem:[%s1281] sm:$0xff]
    %v1283 = vmul.f32 %v1282, %v1271
    %1284 = vadd.xlane.f32.xlu0 %v1283
    %v1285 = vpop.xlane.xlu0 %1284
    %v1286 = vsub.f32 %v1280, %v1285
    %v1287 = vmul.f32 %v1286, %v1278
    %vm1288 = vcmask 1047553
    %vm1289 = vmand %vm1269, %vm1288
    %v1290 = vsel %vm1289, %v1287, 0.0
    %v1291 = vadd.f32 %v1282, %v1290
    %s1292 = scalar_lea.vmem [#allocation1], 24
    %1293 = vst [vmem:[%s1292] sm:$0xff] %v1291
    %vm1294 = vcmask 220368
    %s1295 = scalar_lea.vmem [#allocation1], 26
    %v1296 = vld [vmem:[%s1295] ss:$0 sm:$0xff]
    %s1297 = scalar_lea.vmem [#allocation0], 26
    %v1298 = vld [vmem:[%s1297] ss:$0 sm:$0xff]
    %v1299 = vmul.f32 %v1296, %v1296
    %1300 = vadd.xlane.f32.xlu0 %v1299
    %v1301 = vpop.xlane.xlu0 %1300
    %v1302 = vsub.f32 %v1298, %v1301
    %v1303 = vrsqrt.pop %v1302
    %s1304 = scalar_lea.vmem [#allocation0], 24
    %v1305 = vld [vmem:[%s1304] sm:$0xff]
    %s1306 = scalar_lea.vmem [#allocation1], 24
    %v1307 = vld [vmem:[%s1306] sm:$0xff]
    %v1308 = vmul.f32 %v1307, %v1296
    %1309 = vadd.xlane.f32.xlu0 %v1308
    %v1310 = vpop.xlane.xlu0 %1309
    %v1311 = vsub.f32 %v1305, %v1310
    %v1312 = vmul.f32 %v1311, %v1303
    %vm1313 = vcmask 1047554
    %vm1314 = vmand %vm1294, %vm1313
    %v1315 = vsel %vm1314, %v1312, 0.0
    %v1316 = vadd.f32 %v1307, %v1315
    %s1317 = scalar_lea.vmem [#allocation1], 24
    %1318 = vst [vmem:[%s1317] sm:$0xff] %v1316
    %vm1319 = vcmask 228568
    %s1320 = scalar_lea.vmem [#allocation1], 27
    %v1321 = vld [vmem:[%s1320] ss:$0 sm:$0xff]
    %s1322 = scalar_lea.vmem [#allocation0], 27
    %v1323 = vld [vmem:[%s1322] ss:$0 sm:$0xff]
    %v1324 = vmul.f32 %v1321, %v1321
    %1325 = vadd.xlane.f32.xlu0 %v1324
    %v1326 = vpop.xlane.xlu0 %1325
    %v1327 = vsub.f32 %v1323, %v1326
    %v1328 = vrsqrt.pop %v1327
    %s1329 = scalar_lea.vmem [#allocation0], 24
    %v1330 = vld [vmem:[%s1329] sm:$0xff]
    %s1331 = scalar_lea.vmem [#allocation1], 24
    %v1332 = vld [vmem:[%s1331] sm:$0xff]
    %v1333 = vmul.f32 %v1332, %v1321
    %1334 = vadd.xlane.f32.xlu0 %v1333
    %v1335 = vpop.xlane.xlu0 %1334
    %v1336 = vsub.f32 %v1330, %v1335
    %v1337 = vmul.f32 %v1336, %v1328
    %vm1338 = vcmask 1047555
    %vm1339 = vmand %vm1319, %vm1338
    %v1340 = vsel %vm1339, %v1337, 0.0
    %v1341 = vadd.f32 %v1332, %v1340
    %s1342 = scalar_lea.vmem [#allocation1], 24
    %1343 = vst [vmem:[%s1342] sm:$0xff] %v1341
    %vm1344 = vcmask 236768
    %s1345 = scalar_lea.vmem [#allocation1], 28
    %v1346 = vld [vmem:[%s1345] ss:$0 sm:$0xff]
    %s1347 = scalar_lea.vmem [#allocation0], 28
    %v1348 = vld [vmem:[%s1347] ss:$0 sm:$0xff]
    %v1349 = vmul.f32 %v1346, %v1346
    %1350 = vadd.xlane.f32.xlu0 %v1349
    %v1351 = vpop.xlane.xlu0 %1350
    %v1352 = vsub.f32 %v1348, %v1351
    %v1353 = vrsqrt.pop %v1352
    %s1354 = scalar_lea.vmem [#allocation0], 24
    %v1355 = vld [vmem:[%s1354] sm:$0xff]
    %s1356 = scalar_lea.vmem [#allocation1], 24
    %v1357 = vld [vmem:[%s1356] sm:$0xff]
    %v1358 = vmul.f32 %v1357, %v1346
    %1359 = vadd.xlane.f32.xlu0 %v1358
    %v1360 = vpop.xlane.xlu0 %1359
    %v1361 = vsub.f32 %v1355, %v1360
    %v1362 = vmul.f32 %v1361, %v1353
    %vm1363 = vcmask 1047556
    %vm1364 = vmand %vm1344, %vm1363
    %v1365 = vsel %vm1364, %v1362, 0.0
    %v1366 = vadd.f32 %v1357, %v1365
    %s1367 = scalar_lea.vmem [#allocation1], 24
    %1368 = vst [vmem:[%s1367] sm:$0xff] %v1366
    %vm1369 = vcmask 244968
    %s1370 = scalar_lea.vmem [#allocation1], 29
    %v1371 = vld [vmem:[%s1370] ss:$0 sm:$0xff]
    %s1372 = scalar_lea.vmem [#allocation0], 29
    %v1373 = vld [vmem:[%s1372] ss:$0 sm:$0xff]
    %v1374 = vmul.f32 %v1371, %v1371
    %1375 = vadd.xlane.f32.xlu0 %v1374
    %v1376 = vpop.xlane.xlu0 %1375
    %v1377 = vsub.f32 %v1373, %v1376
    %v1378 = vrsqrt.pop %v1377
    %s1379 = scalar_lea.vmem [#allocation0], 24
    %v1380 = vld [vmem:[%s1379] sm:$0xff]
    %s1381 = scalar_lea.vmem [#allocation1], 24
    %v1382 = vld [vmem:[%s1381] sm:$0xff]
    %v1383 = vmul.f32 %v1382, %v1371
    %1384 = vadd.xlane.f32.xlu0 %v1383
    %v1385 = vpop.xlane.xlu0 %1384
    %v1386 = vsub.f32 %v1380, %v1385
    %v1387 = vmul.f32 %v1386, %v1378
    %vm1388 = vcmask 1047557
    %vm1389 = vmand %vm1369, %vm1388
    %v1390 = vsel %vm1389, %v1387, 0.0
    %v1391 = vadd.f32 %v1382, %v1390
    %s1392 = scalar_lea.vmem [#allocation1], 24
    %1393 = vst [vmem:[%s1392] sm:$0xff] %v1391
    %vm1394 = vcmask 253168
    %s1395 = scalar_lea.vmem [#allocation1], 30
    %v1396 = vld [vmem:[%s1395] ss:$0 sm:$0xff]
    %s1397 = scalar_lea.vmem [#allocation0], 30
    %v1398 = vld [vmem:[%s1397] ss:$0 sm:$0xff]
    %v1399 = vmul.f32 %v1396, %v1396
    %1400 = vadd.xlane.f32.xlu0 %v1399
    %v1401 = vpop.xlane.xlu0 %1400
    %v1402 = vsub.f32 %v1398, %v1401
    %v1403 = vrsqrt.pop %v1402
    %s1404 = scalar_lea.vmem [#allocation0], 24
    %v1405 = vld [vmem:[%s1404] sm:$0xff]
    %s1406 = scalar_lea.vmem [#allocation1], 24
    %v1407 = vld [vmem:[%s1406] sm:$0xff]
    %v1408 = vmul.f32 %v1407, %v1396
    %1409 = vadd.xlane.f32.xlu0 %v1408
    %v1410 = vpop.xlane.xlu0 %1409
    %v1411 = vsub.f32 %v1405, %v1410
    %v1412 = vmul.f32 %v1411, %v1403
    %vm1413 = vcmask 1047558
    %vm1414 = vmand %vm1394, %vm1413
    %v1415 = vsel %vm1414, %v1412, 0.0
    %v1416 = vadd.f32 %v1407, %v1415
    %s1417 = scalar_lea.vmem [#allocation1], 24
    %1418 = vst [vmem:[%s1417] sm:$0xff] %v1416
    %vm1419 = vcmask 261368
    %s1420 = scalar_lea.vmem [#allocation1], 31
    %v1421 = vld [vmem:[%s1420] ss:$0 sm:$0xff]
    %s1422 = scalar_lea.vmem [#allocation0], 31
    %v1423 = vld [vmem:[%s1422] ss:$0 sm:$0xff]
    %v1424 = vmul.f32 %v1421, %v1421
    %1425 = vadd.xlane.f32.xlu0 %v1424
    %v1426 = vpop.xlane.xlu0 %1425
    %v1427 = vsub.f32 %v1423, %v1426
    %v1428 = vrsqrt.pop %v1427
    %s1429 = scalar_lea.vmem [#allocation0], 24
    %v1430 = vld [vmem:[%s1429] sm:$0xff]
    %s1431 = scalar_lea.vmem [#allocation1], 24
    %v1432 = vld [vmem:[%s1431] sm:$0xff]
    %v1433 = vmul.f32 %v1432, %v1421
    %1434 = vadd.xlane.f32.xlu0 %v1433
    %v1435 = vpop.xlane.xlu0 %1434
    %v1436 = vsub.f32 %v1430, %v1435
    %v1437 = vmul.f32 %v1436, %v1428
    %vm1438 = vcmask 1047559
    %vm1439 = vmand %vm1419, %vm1438
    %v1440 = vsel %vm1439, %v1437, 0.0
    %v1441 = vadd.f32 %v1432, %v1440
    %s1442 = scalar_lea.vmem [#allocation1], 24
    %1443 = vst [vmem:[%s1442] sm:$0xff] %v1441
    // Predicated region
    $region36: #{custom-call.8} parent=1 // pred_check
      _
    $region37: #{custom-call.8} parent=1 // pred_check_branch
      %1445 = sbr.rel (0) target = $region39
    $region38: #{custom-call.8} parent=1 // pred_region
      // Predicated region
      $region40: #{custom-call.8} parent=38 // pred_check
        _
      $region41: #{custom-call.8} parent=38 // pred_check_branch
        %1447 = sbr.rel (0) target = $region43
      $region42: #{custom-call.8} parent=38 // pred_region
        // Predicated region
        $region55: #{custom-call.8} parent=42 // pred_check
          _
        $region56: #{custom-call.8} parent=42 // pred_check_branch
          %1469 = sbr.rel (0) target = $region58
        $region57: #{custom-call.8} parent=42 // pred_region
          loop: start=0, step=1, limit=1
          $region59: #{custom-call.8} parent=57 // loop_pre_header
            _
          $region60: #{custom-call.8} parent=57 // loop_header
            %s1471 = sphi 0, %s1475
            %p1472 = scmp.ge.s32.totalorder %s1471, 1
            %s1476 = sphi [#allocation1], [#allocation1]
            %s1477 = sphi %s1, %s1
          $region61: #{custom-call.8} parent=57 // loop_header_branch
            %1474 = sbr.rel (%p1472) target = $region65
          $region62: #{custom-call.8} parent=57 // loop_body
            %v1478 = vld [vmem:[%s1476] sm:$0xff]
            %1479 = vst [vmem:[%s1477] sm:$0xff] %v1478
            %v1480 = vld [vmem:[%s1476 + $0x8] sm:$0xff]
            %1481 = vst [vmem:[%s1477 + $0x8] sm:$0xff] %v1480
            %v1482 = vld [vmem:[%s1476 + $0x10] sm:$0xff]
            %1483 = vst [vmem:[%s1477 + $0x10] sm:$0xff] %v1482
            %v1484 = vld [vmem:[%s1476 + $0x18] sm:$0xff]
            %1485 = vst [vmem:[%s1477 + $0x18] sm:$0xff] %v1484
          $region63: #{custom-call.8} parent=57 // loop_footer
            %s1475 = sadd.s32 1, %s1471
          $region64: #{custom-call.8} parent=57 // loop_footer_branch
            %1470 = sbr.rel target = $region60
          $region65: #{custom-call.8} parent=57 // loop_exit
            _
        $region58: #{custom-call.8} parent=42 // pred_fallthru
          _
        // Predicated region
        $region66: #{custom-call.8} parent=42 // pred_check
          _
        $region67: #{custom-call.8} parent=42 // pred_check_branch
          %1487 = sbr.rel target = $region69
        $region68: #{custom-call.8} parent=42 // pred_region
          _
        $region69: #{custom-call.8} parent=42 // pred_fallthru
          _
      $region43: #{custom-call.8} parent=38 // pred_fallthru
        _
      // Predicated region
      $region44: #{custom-call.8} parent=38 // pred_check
        _
      $region45: #{custom-call.8} parent=38 // pred_check_branch
        %1449 = sbr.rel target = $region47
      $region46: #{custom-call.8} parent=38 // pred_region
        %s1451 = ssub.s32 256, 1
        loop: start=0, step=1, limit=1
        $region48: #{custom-call.8} parent=46 // loop_pre_header
          _
        $region49: #{custom-call.8} parent=46 // loop_header
          %s1453 = sphi 0, %s1457
          %p1454 = scmp.ge.s32.totalorder %s1453, 1
          %s1458 = sphi [#allocation1], [#allocation1]
          %s1459 = sphi %s1, %s1
        $region50: #{custom-call.8} parent=46 // loop_header_branch
          %1456 = sbr.rel (%p1454) target = $region54
        $region51: #{custom-call.8} parent=46 // loop_body
          %v1460 = vld [vmem:[%s1458] sm:%s1451]
          %1461 = vst [vmem:[%s1459] sm:%s1451] %v1460
          %v1462 = vld [vmem:[%s1458 + $0x8] sm:%s1451]
          %1463 = vst [vmem:[%s1459 + $0x8] sm:%s1451] %v1462
          %v1464 = vld [vmem:[%s1458 + $0x10] sm:%s1451]
          %1465 = vst [vmem:[%s1459 + $0x10] sm:%s1451] %v1464
          %v1466 = vld [vmem:[%s1458 + $0x18] sm:%s1451]
          %1467 = vst [vmem:[%s1459 + $0x18] sm:%s1451] %v1466
        $region52: #{custom-call.8} parent=46 // loop_footer
          %s1457 = sadd.s32 1, %s1453
        $region53: #{custom-call.8} parent=46 // loop_footer_branch
          %1452 = sbr.rel target = $region49
        $region54: #{custom-call.8} parent=46 // loop_exit
          _
      $region47: #{custom-call.8} parent=38 // pred_fallthru
        _
    $region39: #{custom-call.8} parent=1 // pred_fallthru
      _
    %1488 = vnop

// kernel: custom-call.9
$region0: #{custom-call.9}
  %s0 = inlined_call_operand.vmem [shape: f32[1,32,32], index: 0, kind: input, shape index: {}]
  %s1 = inlined_call_operand.vmem [shape: f32[1,32,32], index: 1, kind: output, shape index: {}]
  $region1: #{custom-call.9} parent=0
    #allocation0 [shape = 'u8[16384]{0}', space=vmem, size = 0x4000, scoped, tag = 'operand span for operand 0']
    #allocation1 [shape = 'u8[16384]{0}', space=vmem, size = 0x4000, scoped, tag = 'operand span for operand 1']
    #allocation2 [shape = 'f32[32,32]{1,0}', space=vmem, size = 0x4000, scoped, tag = 'rescaled input a']
    // Predicated region
    $region2: #{custom-call.9} parent=1 // pred_check
      _
    $region3: #{custom-call.9} parent=1 // pred_check_branch
      %3 = sbr.rel (0) target = $region5
    $region4: #{custom-call.9} parent=1 // pred_region
      // Predicated region
      $region6: #{custom-call.9} parent=4 // pred_check
        _
      $region7: #{custom-call.9} parent=4 // pred_check_branch
        %5 = sbr.rel (0) target = $region9
      $region8: #{custom-call.9} parent=4 // pred_region
        // Predicated region
        $region21: #{custom-call.9} parent=8 // pred_check
          _
        $region22: #{custom-call.9} parent=8 // pred_check_branch
          %27 = sbr.rel (0) target = $region24
        $region23: #{custom-call.9} parent=8 // pred_region
          loop: start=0, step=1, limit=1
          $region25: #{custom-call.9} parent=23 // loop_pre_header
            _
          $region26: #{custom-call.9} parent=23 // loop_header
            %s29 = sphi 0, %s33
            %p30 = scmp.ge.s32.totalorder %s29, 1
            %s34 = sphi %s0, %s0
            %s35 = sphi [#allocation0], [#allocation0]
          $region27: #{custom-call.9} parent=23 // loop_header_branch
            %32 = sbr.rel (%p30) target = $region31
          $region28: #{custom-call.9} parent=23 // loop_body
            %v36 = vld [vmem:[%s34] sm:$0xff]
            %37 = vst [vmem:[%s35] sm:$0xff] %v36
            %v38 = vld [vmem:[%s34 + $0x8] sm:$0xff]
            %39 = vst [vmem:[%s35 + $0x8] sm:$0xff] %v38
            %v40 = vld [vmem:[%s34 + $0x10] sm:$0xff]
            %41 = vst [vmem:[%s35 + $0x10] sm:$0xff] %v40
            %v42 = vld [vmem:[%s34 + $0x18] sm:$0xff]
            %43 = vst [vmem:[%s35 + $0x18] sm:$0xff] %v42
          $region29: #{custom-call.9} parent=23 // loop_footer
            %s33 = sadd.s32 1, %s29
          $region30: #{custom-call.9} parent=23 // loop_footer_branch
            %28 = sbr.rel target = $region26
          $region31: #{custom-call.9} parent=23 // loop_exit
            _
        $region24: #{custom-call.9} parent=8 // pred_fallthru
          _
        // Predicated region
        $region32: #{custom-call.9} parent=8 // pred_check
          _
        $region33: #{custom-call.9} parent=8 // pred_check_branch
          %45 = sbr.rel target = $region35
        $region34: #{custom-call.9} parent=8 // pred_region
          _
        $region35: #{custom-call.9} parent=8 // pred_fallthru
          _
      $region9: #{custom-call.9} parent=4 // pred_fallthru
        _
      // Predicated region
      $region10: #{custom-call.9} parent=4 // pred_check
        _
      $region11: #{custom-call.9} parent=4 // pred_check_branch
        %7 = sbr.rel target = $region13
      $region12: #{custom-call.9} parent=4 // pred_region
        %s9 = ssub.s32 256, 1
        loop: start=0, step=1, limit=1
        $region14: #{custom-call.9} parent=12 // loop_pre_header
          _
        $region15: #{custom-call.9} parent=12 // loop_header
          %s11 = sphi 0, %s15
          %p12 = scmp.ge.s32.totalorder %s11, 1
          %s16 = sphi %s0, %s0
          %s17 = sphi [#allocation0], [#allocation0]
        $region16: #{custom-call.9} parent=12 // loop_header_branch
          %14 = sbr.rel (%p12) target = $region20
        $region17: #{custom-call.9} parent=12 // loop_body
          %v18 = vld [vmem:[%s16] sm:%s9]
          %19 = vst [vmem:[%s17] sm:%s9] %v18
          %v20 = vld [vmem:[%s16 + $0x8] sm:%s9]
          %21 = vst [vmem:[%s17 + $0x8] sm:%s9] %v20
          %v22 = vld [vmem:[%s16 + $0x10] sm:%s9]
          %23 = vst [vmem:[%s17 + $0x10] sm:%s9] %v22
          %v24 = vld [vmem:[%s16 + $0x18] sm:%s9]
          %25 = vst [vmem:[%s17 + $0x18] sm:%s9] %v24
        $region18: #{custom-call.9} parent=12 // loop_footer
          %s15 = sadd.s32 1, %s11
        $region19: #{custom-call.9} parent=12 // loop_footer_branch
          %10 = sbr.rel target = $region15
        $region20: #{custom-call.9} parent=12 // loop_exit
          _
      $region13: #{custom-call.9} parent=4 // pred_fallthru
        _
    $region5: #{custom-call.9} parent=1 // pred_fallthru
      _
    %46 = vnop
    %v47 = vlaneseq
    %v48 = vand.u32 %v47, 127
    %vm49 = vcmp.lt.s32.totalorder %v48, 32
    %v50 = vlaneseq
    %v51 = vshrl.u32 %v50, 7
    %vm53 = vcmp.eq.s32.totalorder %v51, %v48
    %v54 = vld [vmem:[#allocation0] sm:$0xff]
    %v55 = vsel %vm53, %v54, 0.0
    %56 = vadd.xlane.f32.xlu0 %v55
    %v57 = vpop.xlane.xlu0 %56
    %vm58 = vcmp.ge.s32.totalorder %v51, %v48
    %vm59 = vmand %vm58, %vm49
    %v60 = vsel %vm59, %v54, 0.0
    %v61 = vrcp.pop %v57
    %v62 = vmul.f32 %v60, %v61
    %63 = vst [vmem:[#allocation2] sm:$0xff] %v62
    %s64 = scalar_lea.vmem [#allocation0], 8
    %s65 = scalar_lea.vmem [#allocation2], 8
    %v66 = vlaneseq
    %v67 = vshrl.u32 %v66, 7
    %v68 = vadd.s32 %v67, 8
    %vm69 = vcmp.eq.s32.totalorder %v68, %v48
    %v70 = vld [vmem:[%s64] sm:$0xff]
    %v71 = vsel %vm69, %v70, 0.0
    %72 = vadd.xlane.f32.xlu0 %v71
    %v73 = vpop.xlane.xlu0 %72
    %vm74 = vcmp.ge.s32.totalorder %v68, %v48
    %vm75 = vmand %vm74, %vm49
    %v76 = vsel %vm75, %v70, 0.0
    %v77 = vrcp.pop %v73
    %v78 = vmul.f32 %v76, %v77
    %79 = vst [vmem:[%s65] sm:$0xff] %v78
    %s80 = scalar_lea.vmem [#allocation0], 16
    %s81 = scalar_lea.vmem [#allocation2], 16
    %v82 = vlaneseq
    %v83 = vshrl.u32 %v82, 7
    %v84 = vadd.s32 %v83, 16
    %vm85 = vcmp.eq.s32.totalorder %v84, %v48
    %v86 = vld [vmem:[%s80] sm:$0xff]
    %v87 = vsel %vm85, %v86, 0.0
    %88 = vadd.xlane.f32.xlu0 %v87
    %v89 = vpop.xlane.xlu0 %88
    %vm90 = vcmp.ge.s32.totalorder %v84, %v48
    %vm91 = vmand %vm90, %vm49
    %v92 = vsel %vm91, %v86, 0.0
    %v93 = vrcp.pop %v89
    %v94 = vmul.f32 %v92, %v93
    %95 = vst [vmem:[%s81] sm:$0xff] %v94
    %s96 = scalar_lea.vmem [#allocation0], 24
    %s97 = scalar_lea.vmem [#allocation2], 24
    %v98 = vlaneseq
    %v99 = vshrl.u32 %v98, 7
    %v100 = vadd.s32 %v99, 24
    %vm101 = vcmp.eq.s32.totalorder %v100, %v48
    %v102 = vld [vmem:[%s96] sm:$0xff]
    %v103 = vsel %vm101, %v102, 0.0
    %104 = vadd.xlane.f32.xlu0 %v103
    %v105 = vpop.xlane.xlu0 %104
    %vm106 = vcmp.ge.s32.totalorder %v100, %v48
    %vm107 = vmand %vm106, %vm49
    %v108 = vsel %vm107, %v102, 0.0
    %v109 = vrcp.pop %v105
    %v110 = vmul.f32 %v108, %v109
    %111 = vst [vmem:[%s97] sm:$0xff] %v110
    %v112 = vlaneseq
    %v113 = vand.u32 %v112, 127
    %v114 = vlaneseq
    %v115 = vshrl.u32 %v114, 7
    %vm117 = vcmp.eq.s32.totalorder %v113, %v115
    %v118 = vlaneseq
    %v119 = vand.u32 %v118, 127
    %vm120 = vcmp.eq.s32.totalorder %v119, 0
    %v121 = vsel %vm120, 1.0, -1.0
    %v122 = vsel %vm117, %v121, 0.0
    %v123 = vlaneseq
    %v124 = vand.u32 %v123, 127
    %v125 = vlaneseq
    %v126 = vshrl.u32 %v125, 7
    %v127 = vadd.s32 %v126, 8
    %vm128 = vcmp.eq.s32.totalorder %v124, %v127
    %v129 = vsel %vm128, -1.0, 0.0
    %v130 = vlaneseq
    %v131 = vand.u32 %v130, 127
    %v132 = vlaneseq
    %v133 = vshrl.u32 %v132, 7
    %v134 = vadd.s32 %v133, 16
    %vm135 = vcmp.eq.s32.totalorder %v131, %v134
    %v136 = vsel %vm135, -1.0, 0.0
    %v137 = vlaneseq
    %v138 = vand.u32 %v137, 127
    %v139 = vlaneseq
    %v140 = vshrl.u32 %v139, 7
    %v141 = vadd.s32 %v140, 24
    %vm142 = vcmp.eq.s32.totalorder %v138, %v141
    %v143 = vsel %vm142, -1.0, 0.0
    %s144 = scalar_lea.vmem [#allocation2], 1
    %v145 = vld [vmem:[%s144] ss:$0 sm:$0xff]
    %v146 = vxor.u32 %v145, 2147483648
    %v147 = vlaneseq
    %v148 = vand.u32 %v147, 127
    %vm149 = vcmp.eq.s32.totalorder %v148, 1
    %v150 = vmul.f32 %v146, %v122
    %151 = vadd.xlane.f32.xlu0 %v150
    %v152 = vpop.xlane.xlu0 %151
    %v153 = vsel %vm149, %v152, %v122
    %s154 = scalar_lea.vmem [#allocation2], 2
    %v155 = vld [vmem:[%s154] ss:$0 sm:$0xff]
    %v156 = vxor.u32 %v155, 2147483648
    %v157 = vlaneseq
    %v158 = vand.u32 %v157, 127
    %vm159 = vcmp.eq.s32.totalorder %v158, 2
    %v160 = vmul.f32 %v156, %v153
    %161 = vadd.xlane.f32.xlu0 %v160
    %v162 = vpop.xlane.xlu0 %161
    %v163 = vsel %vm159, %v162, %v153
    %s164 = scalar_lea.vmem [#allocation2], 3
    %v165 = vld [vmem:[%s164] ss:$0 sm:$0xff]
    %v166 = vxor.u32 %v165, 2147483648
    %v167 = vlaneseq
    %v168 = vand.u32 %v167, 127
    %vm169 = vcmp.eq.s32.totalorder %v168, 3
    %v170 = vmul.f32 %v166, %v163
    %171 = vadd.xlane.f32.xlu0 %v170
    %v172 = vpop.xlane.xlu0 %171
    %v173 = vsel %vm169, %v172, %v163
    %s174 = scalar_lea.vmem [#allocation2], 4
    %v175 = vld [vmem:[%s174] ss:$0 sm:$0xff]
    %v176 = vxor.u32 %v175, 2147483648
    %v177 = vlaneseq
    %v178 = vand.u32 %v177, 127
    %vm179 = vcmp.eq.s32.totalorder %v178, 4
    %v180 = vmul.f32 %v176, %v173
    %181 = vadd.xlane.f32.xlu0 %v180
    %v182 = vpop.xlane.xlu0 %181
    %v183 = vsel %vm179, %v182, %v173
    %s184 = scalar_lea.vmem [#allocation2], 5
    %v185 = vld [vmem:[%s184] ss:$0 sm:$0xff]
    %v186 = vxor.u32 %v185, 2147483648
    %v187 = vlaneseq
    %v188 = vand.u32 %v187, 127
    %vm189 = vcmp.eq.s32.totalorder %v188, 5
    %v190 = vmul.f32 %v186, %v183
    %191 = vadd.xlane.f32.xlu0 %v190
    %v192 = vpop.xlane.xlu0 %191
    %v193 = vsel %vm189, %v192, %v183
    %s194 = scalar_lea.vmem [#allocation2], 6
    %v195 = vld [vmem:[%s194] ss:$0 sm:$0xff]
    %v196 = vxor.u32 %v195, 2147483648
    %v197 = vlaneseq
    %v198 = vand.u32 %v197, 127
    %vm199 = vcmp.eq.s32.totalorder %v198, 6
    %v200 = vmul.f32 %v196, %v193
    %201 = vadd.xlane.f32.xlu0 %v200
    %v202 = vpop.xlane.xlu0 %201
    %v203 = vsel %vm199, %v202, %v193
    %s204 = scalar_lea.vmem [#allocation2], 7
    %v205 = vld [vmem:[%s204] ss:$0 sm:$0xff]
    %v206 = vxor.u32 %v205, 2147483648
    %v207 = vlaneseq
    %v208 = vand.u32 %v207, 127
    %vm209 = vcmp.eq.s32.totalorder %v208, 7
    %v210 = vmul.f32 %v206, %v203
    %211 = vadd.xlane.f32.xlu0 %v210
    %v212 = vpop.xlane.xlu0 %211
    %v213 = vsel %vm209, %v212, %v203
    %s214 = scalar_lea.vmem [#allocation2], 8
    %v215 = vld [vmem:[%s214] ss:$0 sm:$0xff]
    %v216 = vxor.u32 %v215, 2147483648
    %v217 = vlaneseq
    %v218 = vand.u32 %v217, 127
    %vm219 = vcmp.eq.s32.totalorder %v218, 8
    %v220 = vmul.f32 %v216, %v213
    %221 = vadd.xlane.f32.xlu0 %v220
    %v222 = vpop.xlane.xlu0 %221
    %v223 = vsel %vm219, %v222, %v213
    %v224 = vmul.f32 %v216, %v129
    %225 = vadd.xlane.f32.xlu0 %v224
    %v226 = vpop.xlane.xlu0 %225
    %v227 = vsel %vm219, %v226, %v129
    %s228 = scalar_lea.vmem [#allocation2], 9
    %v229 = vld [vmem:[%s228] ss:$0 sm:$0xff]
    %v230 = vxor.u32 %v229, 2147483648
    %v231 = vlaneseq
    %v232 = vand.u32 %v231, 127
    %vm233 = vcmp.eq.s32.totalorder %v232, 9
    %v234 = vmul.f32 %v230, %v223
    %235 = vadd.xlane.f32.xlu0 %v234
    %v236 = vpop.xlane.xlu0 %235
    %v237 = vsel %vm233, %v236, %v223
    %v238 = vmul.f32 %v230, %v227
    %239 = vadd.xlane.f32.xlu0 %v238
    %v240 = vpop.xlane.xlu0 %239
    %v241 = vsel %vm233, %v240, %v227
    %s242 = scalar_lea.vmem [#allocation2], 10
    %v243 = vld [vmem:[%s242] ss:$0 sm:$0xff]
    %v244 = vxor.u32 %v243, 2147483648
    %v245 = vlaneseq
    %v246 = vand.u32 %v245, 127
    %vm247 = vcmp.eq.s32.totalorder %v246, 10
    %v248 = vmul.f32 %v244, %v237
    %249 = vadd.xlane.f32.xlu0 %v248
    %v250 = vpop.xlane.xlu0 %249
    %v251 = vsel %vm247, %v250, %v237
    %v252 = vmul.f32 %v244, %v241
    %253 = vadd.xlane.f32.xlu0 %v252
    %v254 = vpop.xlane.xlu0 %253
    %v255 = vsel %vm247, %v254, %v241
    %s256 = scalar_lea.vmem [#allocation2], 11
    %v257 = vld [vmem:[%s256] ss:$0 sm:$0xff]
    %v258 = vxor.u32 %v257, 2147483648
    %v259 = vlaneseq
    %v260 = vand.u32 %v259, 127
    %vm261 = vcmp.eq.s32.totalorder %v260, 11
    %v262 = vmul.f32 %v258, %v251
    %263 = vadd.xlane.f32.xlu0 %v262
    %v264 = vpop.xlane.xlu0 %263
    %v265 = vsel %vm261, %v264, %v251
    %v266 = vmul.f32 %v258, %v255
    %267 = vadd.xlane.f32.xlu0 %v266
    %v268 = vpop.xlane.xlu0 %267
    %v269 = vsel %vm261, %v268, %v255
    %s270 = scalar_lea.vmem [#allocation2], 12
    %v271 = vld [vmem:[%s270] ss:$0 sm:$0xff]
    %v272 = vxor.u32 %v271, 2147483648
    %v273 = vlaneseq
    %v274 = vand.u32 %v273, 127
    %vm275 = vcmp.eq.s32.totalorder %v274, 12
    %v276 = vmul.f32 %v272, %v265
    %277 = vadd.xlane.f32.xlu0 %v276
    %v278 = vpop.xlane.xlu0 %277
    %v279 = vsel %vm275, %v278, %v265
    %v280 = vmul.f32 %v272, %v269
    %281 = vadd.xlane.f32.xlu0 %v280
    %v282 = vpop.xlane.xlu0 %281
    %v283 = vsel %vm275, %v282, %v269
    %s284 = scalar_lea.vmem [#allocation2], 13
    %v285 = vld [vmem:[%s284] ss:$0 sm:$0xff]
    %v286 = vxor.u32 %v285, 2147483648
    %v287 = vlaneseq
    %v288 = vand.u32 %v287, 127
    %vm289 = vcmp.eq.s32.totalorder %v288, 13
    %v290 = vmul.f32 %v286, %v279
    %291 = vadd.xlane.f32.xlu0 %v290
    %v292 = vpop.xlane.xlu0 %291
    %v293 = vsel %vm289, %v292, %v279
    %v294 = vmul.f32 %v286, %v283
    %295 = vadd.xlane.f32.xlu0 %v294
    %v296 = vpop.xlane.xlu0 %295
    %v297 = vsel %vm289, %v296, %v283
    %s298 = scalar_lea.vmem [#allocation2], 14
    %v299 = vld [vmem:[%s298] ss:$0 sm:$0xff]
    %v300 = vxor.u32 %v299, 2147483648
    %v301 = vlaneseq
    %v302 = vand.u32 %v301, 127
    %vm303 = vcmp.eq.s32.totalorder %v302, 14
    %v304 = vmul.f32 %v300, %v293
    %305 = vadd.xlane.f32.xlu0 %v304
    %v306 = vpop.xlane.xlu0 %305
    %v307 = vsel %vm303, %v306, %v293
    %v308 = vmul.f32 %v300, %v297
    %309 = vadd.xlane.f32.xlu0 %v308
    %v310 = vpop.xlane.xlu0 %309
    %v311 = vsel %vm303, %v310, %v297
    %s312 = scalar_lea.vmem [#allocation2], 15
    %v313 = vld [vmem:[%s312] ss:$0 sm:$0xff]
    %v314 = vxor.u32 %v313, 2147483648
    %v315 = vlaneseq
    %v316 = vand.u32 %v315, 127
    %vm317 = vcmp.eq.s32.totalorder %v316, 15
    %v318 = vmul.f32 %v314, %v307
    %319 = vadd.xlane.f32.xlu0 %v318
    %v320 = vpop.xlane.xlu0 %319
    %v321 = vsel %vm317, %v320, %v307
    %v322 = vmul.f32 %v314, %v311
    %323 = vadd.xlane.f32.xlu0 %v322
    %v324 = vpop.xlane.xlu0 %323
    %v325 = vsel %vm317, %v324, %v311
    %s326 = scalar_lea.vmem [#allocation2], 16
    %v327 = vld [vmem:[%s326] ss:$0 sm:$0xff]
    %v328 = vxor.u32 %v327, 2147483648
    %v329 = vlaneseq
    %v330 = vand.u32 %v329, 127
    %vm331 = vcmp.eq.s32.totalorder %v330, 16
    %v332 = vmul.f32 %v328, %v321
    %333 = vadd.xlane.f32.xlu0 %v332
    %v334 = vpop.xlane.xlu0 %333
    %v335 = vsel %vm331, %v334, %v321
    %v336 = vmul.f32 %v328, %v325
    %337 = vadd.xlane.f32.xlu0 %v336
    %v338 = vpop.xlane.xlu0 %337
    %v339 = vsel %vm331, %v338, %v325
    %v340 = vmul.f32 %v328, %v136
    %341 = vadd.xlane.f32.xlu0 %v340
    %v342 = vpop.xlane.xlu0 %341
    %v343 = vsel %vm331, %v342, %v136
    %s344 = scalar_lea.vmem [#allocation2], 17
    %v345 = vld [vmem:[%s344] ss:$0 sm:$0xff]
    %v346 = vxor.u32 %v345, 2147483648
    %v347 = vlaneseq
    %v348 = vand.u32 %v347, 127
    %vm349 = vcmp.eq.s32.totalorder %v348, 17
    %v350 = vmul.f32 %v346, %v335
    %351 = vadd.xlane.f32.xlu0 %v350
    %v352 = vpop.xlane.xlu0 %351
    %v353 = vsel %vm349, %v352, %v335
    %v354 = vmul.f32 %v346, %v339
    %355 = vadd.xlane.f32.xlu0 %v354
    %v356 = vpop.xlane.xlu0 %355
    %v357 = vsel %vm349, %v356, %v339
    %v358 = vmul.f32 %v346, %v343
    %359 = vadd.xlane.f32.xlu0 %v358
    %v360 = vpop.xlane.xlu0 %359
    %v361 = vsel %vm349, %v360, %v343
    %s362 = scalar_lea.vmem [#allocation2], 18
    %v363 = vld [vmem:[%s362] ss:$0 sm:$0xff]
    %v364 = vxor.u32 %v363, 2147483648
    %v365 = vlaneseq
    %v366 = vand.u32 %v365, 127
    %vm367 = vcmp.eq.s32.totalorder %v366, 18
    %v368 = vmul.f32 %v364, %v353
    %369 = vadd.xlane.f32.xlu0 %v368
    %v370 = vpop.xlane.xlu0 %369
    %v371 = vsel %vm367, %v370, %v353
    %v372 = vmul.f32 %v364, %v357
    %373 = vadd.xlane.f32.xlu0 %v372
    %v374 = vpop.xlane.xlu0 %373
    %v375 = vsel %vm367, %v374, %v357
    %v376 = vmul.f32 %v364, %v361
    %377 = vadd.xlane.f32.xlu0 %v376
    %v378 = vpop.xlane.xlu0 %377
    %v379 = vsel %vm367, %v378, %v361
    %s380 = scalar_lea.vmem [#allocation2], 19
    %v381 = vld [vmem:[%s380] ss:$0 sm:$0xff]
    %v382 = vxor.u32 %v381, 2147483648
    %v383 = vlaneseq
    %v384 = vand.u32 %v383, 127
    %vm385 = vcmp.eq.s32.totalorder %v384, 19
    %v386 = vmul.f32 %v382, %v371
    %387 = vadd.xlane.f32.xlu0 %v386
    %v388 = vpop.xlane.xlu0 %387
    %v389 = vsel %vm385, %v388, %v371
    %v390 = vmul.f32 %v382, %v375
    %391 = vadd.xlane.f32.xlu0 %v390
    %v392 = vpop.xlane.xlu0 %391
    %v393 = vsel %vm385, %v392, %v375
    %v394 = vmul.f32 %v382, %v379
    %395 = vadd.xlane.f32.xlu0 %v394
    %v396 = vpop.xlane.xlu0 %395
    %v397 = vsel %vm385, %v396, %v379
    %s398 = scalar_lea.vmem [#allocation2], 20
    %v399 = vld [vmem:[%s398] ss:$0 sm:$0xff]
    %v400 = vxor.u32 %v399, 2147483648
    %v401 = vlaneseq
    %v402 = vand.u32 %v401, 127
    %vm403 = vcmp.eq.s32.totalorder %v402, 20
    %v404 = vmul.f32 %v400, %v389
    %405 = vadd.xlane.f32.xlu0 %v404
    %v406 = vpop.xlane.xlu0 %405
    %v407 = vsel %vm403, %v406, %v389
    %v408 = vmul.f32 %v400, %v393
    %409 = vadd.xlane.f32.xlu0 %v408
    %v410 = vpop.xlane.xlu0 %409
    %v411 = vsel %vm403, %v410, %v393
    %v412 = vmul.f32 %v400, %v397
    %413 = vadd.xlane.f32.xlu0 %v412
    %v414 = vpop.xlane.xlu0 %413
    %v415 = vsel %vm403, %v414, %v397
    %s416 = scalar_lea.vmem [#allocation2], 21
    %v417 = vld [vmem:[%s416] ss:$0 sm:$0xff]
    %v418 = vxor.u32 %v417, 2147483648
    %v419 = vlaneseq
    %v420 = vand.u32 %v419, 127
    %vm421 = vcmp.eq.s32.totalorder %v420, 21
    %v422 = vmul.f32 %v418, %v407
    %423 = vadd.xlane.f32.xlu0 %v422
    %v424 = vpop.xlane.xlu0 %423
    %v425 = vsel %vm421, %v424, %v407
    %v426 = vmul.f32 %v418, %v411
    %427 = vadd.xlane.f32.xlu0 %v426
    %v428 = vpop.xlane.xlu0 %427
    %v429 = vsel %vm421, %v428, %v411
    %v430 = vmul.f32 %v418, %v415
    %431 = vadd.xlane.f32.xlu0 %v430
    %v432 = vpop.xlane.xlu0 %431
    %v433 = vsel %vm421, %v432, %v415
    %s434 = scalar_lea.vmem [#allocation2], 22
    %v435 = vld [vmem:[%s434] ss:$0 sm:$0xff]
    %v436 = vxor.u32 %v435, 2147483648
    %v437 = vlaneseq
    %v438 = vand.u32 %v437, 127
    %vm439 = vcmp.eq.s32.totalorder %v438, 22
    %v440 = vmul.f32 %v436, %v425
    %441 = vadd.xlane.f32.xlu0 %v440
    %v442 = vpop.xlane.xlu0 %441
    %v443 = vsel %vm439, %v442, %v425
    %v444 = vmul.f32 %v436, %v429
    %445 = vadd.xlane.f32.xlu0 %v444
    %v446 = vpop.xlane.xlu0 %445
    %v447 = vsel %vm439, %v446, %v429
    %v448 = vmul.f32 %v436, %v433
    %449 = vadd.xlane.f32.xlu0 %v448
    %v450 = vpop.xlane.xlu0 %449
    %v451 = vsel %vm439, %v450, %v433
    %s452 = scalar_lea.vmem [#allocation2], 23
    %v453 = vld [vmem:[%s452] ss:$0 sm:$0xff]
    %v454 = vxor.u32 %v453, 2147483648
    %v455 = vlaneseq
    %v456 = vand.u32 %v455, 127
    %vm457 = vcmp.eq.s32.totalorder %v456, 23
    %v458 = vmul.f32 %v454, %v443
    %459 = vadd.xlane.f32.xlu0 %v458
    %v460 = vpop.xlane.xlu0 %459
    %v461 = vsel %vm457, %v460, %v443
    %v462 = vmul.f32 %v454, %v447
    %463 = vadd.xlane.f32.xlu0 %v462
    %v464 = vpop.xlane.xlu0 %463
    %v465 = vsel %vm457, %v464, %v447
    %v466 = vmul.f32 %v454, %v451
    %467 = vadd.xlane.f32.xlu0 %v466
    %v468 = vpop.xlane.xlu0 %467
    %v469 = vsel %vm457, %v468, %v451
    %s470 = scalar_lea.vmem [#allocation2], 24
    %v471 = vld [vmem:[%s470] ss:$0 sm:$0xff]
    %v472 = vxor.u32 %v471, 2147483648
    %v473 = vlaneseq
    %v474 = vand.u32 %v473, 127
    %vm475 = vcmp.eq.s32.totalorder %v474, 24
    %v476 = vmul.f32 %v472, %v461
    %477 = vadd.xlane.f32.xlu0 %v476
    %v478 = vpop.xlane.xlu0 %477
    %v479 = vsel %vm475, %v478, %v461
    %v480 = vmul.f32 %v472, %v465
    %481 = vadd.xlane.f32.xlu0 %v480
    %v482 = vpop.xlane.xlu0 %481
    %v483 = vsel %vm475, %v482, %v465
    %v484 = vmul.f32 %v472, %v469
    %485 = vadd.xlane.f32.xlu0 %v484
    %v486 = vpop.xlane.xlu0 %485
    %v487 = vsel %vm475, %v486, %v469
    %v488 = vmul.f32 %v472, %v143
    %489 = vadd.xlane.f32.xlu0 %v488
    %v490 = vpop.xlane.xlu0 %489
    %v491 = vsel %vm475, %v490, %v143
    %s492 = scalar_lea.vmem [#allocation2], 25
    %v493 = vld [vmem:[%s492] ss:$0 sm:$0xff]
    %v494 = vxor.u32 %v493, 2147483648
    %v495 = vlaneseq
    %v496 = vand.u32 %v495, 127
    %vm497 = vcmp.eq.s32.totalorder %v496, 25
    %v498 = vmul.f32 %v494, %v479
    %499 = vadd.xlane.f32.xlu0 %v498
    %v500 = vpop.xlane.xlu0 %499
    %v501 = vsel %vm497, %v500, %v479
    %v502 = vmul.f32 %v494, %v483
    %503 = vadd.xlane.f32.xlu0 %v502
    %v504 = vpop.xlane.xlu0 %503
    %v505 = vsel %vm497, %v504, %v483
    %v506 = vmul.f32 %v494, %v487
    %507 = vadd.xlane.f32.xlu0 %v506
    %v508 = vpop.xlane.xlu0 %507
    %v509 = vsel %vm497, %v508, %v487
    %v510 = vmul.f32 %v494, %v491
    %511 = vadd.xlane.f32.xlu0 %v510
    %v512 = vpop.xlane.xlu0 %511
    %v513 = vsel %vm497, %v512, %v491
    %s514 = scalar_lea.vmem [#allocation2], 26
    %v515 = vld [vmem:[%s514] ss:$0 sm:$0xff]
    %v516 = vxor.u32 %v515, 2147483648
    %v517 = vlaneseq
    %v518 = vand.u32 %v517, 127
    %vm519 = vcmp.eq.s32.totalorder %v518, 26
    %v520 = vmul.f32 %v516, %v501
    %521 = vadd.xlane.f32.xlu0 %v520
    %v522 = vpop.xlane.xlu0 %521
    %v523 = vsel %vm519, %v522, %v501
    %v524 = vmul.f32 %v516, %v505
    %525 = vadd.xlane.f32.xlu0 %v524
    %v526 = vpop.xlane.xlu0 %525
    %v527 = vsel %vm519, %v526, %v505
    %v528 = vmul.f32 %v516, %v509
    %529 = vadd.xlane.f32.xlu0 %v528
    %v530 = vpop.xlane.xlu0 %529
    %v531 = vsel %vm519, %v530, %v509
    %v532 = vmul.f32 %v516, %v513
    %533 = vadd.xlane.f32.xlu0 %v532
    %v534 = vpop.xlane.xlu0 %533
    %v535 = vsel %vm519, %v534, %v513
    %s536 = scalar_lea.vmem [#allocation2], 27
    %v537 = vld [vmem:[%s536] ss:$0 sm:$0xff]
    %v538 = vxor.u32 %v537, 2147483648
    %v539 = vlaneseq
    %v540 = vand.u32 %v539, 127
    %vm541 = vcmp.eq.s32.totalorder %v540, 27
    %v542 = vmul.f32 %v538, %v523
    %543 = vadd.xlane.f32.xlu0 %v542
    %v544 = vpop.xlane.xlu0 %543
    %v545 = vsel %vm541, %v544, %v523
    %v546 = vmul.f32 %v538, %v527
    %547 = vadd.xlane.f32.xlu0 %v546
    %v548 = vpop.xlane.xlu0 %547
    %v549 = vsel %vm541, %v548, %v527
    %v550 = vmul.f32 %v538, %v531
    %551 = vadd.xlane.f32.xlu0 %v550
    %v552 = vpop.xlane.xlu0 %551
    %v553 = vsel %vm541, %v552, %v531
    %v554 = vmul.f32 %v538, %v535
    %555 = vadd.xlane.f32.xlu0 %v554
    %v556 = vpop.xlane.xlu0 %555
    %v557 = vsel %vm541, %v556, %v535
    %s558 = scalar_lea.vmem [#allocation2], 28
    %v559 = vld [vmem:[%s558] ss:$0 sm:$0xff]
    %v560 = vxor.u32 %v559, 2147483648
    %v561 = vlaneseq
    %v562 = vand.u32 %v561, 127
    %vm563 = vcmp.eq.s32.totalorder %v562, 28
    %v564 = vmul.f32 %v560, %v545
    %565 = vadd.xlane.f32.xlu0 %v564
    %v566 = vpop.xlane.xlu0 %565
    %v567 = vsel %vm563, %v566, %v545
    %v568 = vmul.f32 %v560, %v549
    %569 = vadd.xlane.f32.xlu0 %v568
    %v570 = vpop.xlane.xlu0 %569
    %v571 = vsel %vm563, %v570, %v549
    %v572 = vmul.f32 %v560, %v553
    %573 = vadd.xlane.f32.xlu0 %v572
    %v574 = vpop.xlane.xlu0 %573
    %v575 = vsel %vm563, %v574, %v553
    %v576 = vmul.f32 %v560, %v557
    %577 = vadd.xlane.f32.xlu0 %v576
    %v578 = vpop.xlane.xlu0 %577
    %v579 = vsel %vm563, %v578, %v557
    %s580 = scalar_lea.vmem [#allocation2], 29
    %v581 = vld [vmem:[%s580] ss:$0 sm:$0xff]
    %v582 = vxor.u32 %v581, 2147483648
    %v583 = vlaneseq
    %v584 = vand.u32 %v583, 127
    %vm585 = vcmp.eq.s32.totalorder %v584, 29
    %v586 = vmul.f32 %v582, %v567
    %587 = vadd.xlane.f32.xlu0 %v586
    %v588 = vpop.xlane.xlu0 %587
    %v589 = vsel %vm585, %v588, %v567
    %v590 = vmul.f32 %v582, %v571
    %591 = vadd.xlane.f32.xlu0 %v590
    %v592 = vpop.xlane.xlu0 %591
    %v593 = vsel %vm585, %v592, %v571
    %v594 = vmul.f32 %v582, %v575
    %595 = vadd.xlane.f32.xlu0 %v594
    %v596 = vpop.xlane.xlu0 %595
    %v597 = vsel %vm585, %v596, %v575
    %v598 = vmul.f32 %v582, %v579
    %599 = vadd.xlane.f32.xlu0 %v598
    %v600 = vpop.xlane.xlu0 %599
    %v601 = vsel %vm585, %v600, %v579
    %s602 = scalar_lea.vmem [#allocation2], 30
    %v603 = vld [vmem:[%s602] ss:$0 sm:$0xff]
    %v604 = vxor.u32 %v603, 2147483648
    %v605 = vlaneseq
    %v606 = vand.u32 %v605, 127
    %vm607 = vcmp.eq.s32.totalorder %v606, 30
    %v608 = vmul.f32 %v604, %v589
    %609 = vadd.xlane.f32.xlu0 %v608
    %v610 = vpop.xlane.xlu0 %609
    %v611 = vsel %vm607, %v610, %v589
    %v612 = vmul.f32 %v604, %v593
    %613 = vadd.xlane.f32.xlu0 %v612
    %v614 = vpop.xlane.xlu0 %613
    %v615 = vsel %vm607, %v614, %v593
    %v616 = vmul.f32 %v604, %v597
    %617 = vadd.xlane.f32.xlu0 %v616
    %v618 = vpop.xlane.xlu0 %617
    %v619 = vsel %vm607, %v618, %v597
    %v620 = vmul.f32 %v604, %v601
    %621 = vadd.xlane.f32.xlu0 %v620
    %v622 = vpop.xlane.xlu0 %621
    %v623 = vsel %vm607, %v622, %v601
    %s624 = scalar_lea.vmem [#allocation2], 31
    %v625 = vld [vmem:[%s624] ss:$0 sm:$0xff]
    %v626 = vxor.u32 %v625, 2147483648
    %v627 = vlaneseq
    %v628 = vand.u32 %v627, 127
    %vm629 = vcmp.eq.s32.totalorder %v628, 31
    %v630 = vmul.f32 %v626, %v611
    %631 = vadd.xlane.f32.xlu0 %v630
    %v632 = vpop.xlane.xlu0 %631
    %v633 = vsel %vm629, %v632, %v611
    %v634 = vmul.f32 %v626, %v615
    %635 = vadd.xlane.f32.xlu0 %v634
    %v636 = vpop.xlane.xlu0 %635
    %v637 = vsel %vm629, %v636, %v615
    %v638 = vmul.f32 %v626, %v619
    %639 = vadd.xlane.f32.xlu0 %v638
    %v640 = vpop.xlane.xlu0 %639
    %v641 = vsel %vm629, %v640, %v619
    %v642 = vmul.f32 %v626, %v623
    %643 = vadd.xlane.f32.xlu0 %v642
    %v644 = vpop.xlane.xlu0 %643
    %v645 = vsel %vm629, %v644, %v623
    %v646 = vrcp.pop %v57
    %v647 = vmul.f32 %v633, %v646
    %vm648 = vweird.f32 %v57
    %v649 = vsel %vm648, %v633, %v647
    %650 = vst [vmem:[#allocation1] sm:$0xff] %v649
    %v651 = vrcp.pop %v73
    %v652 = vmul.f32 %v637, %v651
    %vm653 = vweird.f32 %v73
    %v654 = vsel %vm653, %v637, %v652
    %s655 = scalar_lea.vmem [#allocation1], 8
    %656 = vst [vmem:[%s655] sm:$0xff] %v654
    %v657 = vrcp.pop %v89
    %v658 = vmul.f32 %v641, %v657
    %vm659 = vweird.f32 %v89
    %v660 = vsel %vm659, %v641, %v658
    %s661 = scalar_lea.vmem [#allocation1], 16
    %662 = vst [vmem:[%s661] sm:$0xff] %v660
    %v663 = vrcp.pop %v105
    %v664 = vmul.f32 %v645, %v663
    %vm665 = vweird.f32 %v105
    %v666 = vsel %vm665, %v645, %v664
    %s667 = scalar_lea.vmem [#allocation1], 24
    %668 = vst [vmem:[%s667] sm:$0xff] %v666
    // Predicated region
    $region36: #{custom-call.9} parent=1 // pred_check
      _
    $region37: #{custom-call.9} parent=1 // pred_check_branch
      %670 = sbr.rel (0) target = $region39
    $region38: #{custom-call.9} parent=1 // pred_region
      // Predicated region
      $region40: #{custom-call.9} parent=38 // pred_check
        _
      $region41: #{custom-call.9} parent=38 // pred_check_branch
        %672 = sbr.rel (0) target = $region43
      $region42: #{custom-call.9} parent=38 // pred_region
        // Predicated region
        $region55: #{custom-call.9} parent=42 // pred_check
          _
        $region56: #{custom-call.9} parent=42 // pred_check_branch
          %694 = sbr.rel (0) target = $region58
        $region57: #{custom-call.9} parent=42 // pred_region
          loop: start=0, step=1, limit=1
          $region59: #{custom-call.9} parent=57 // loop_pre_header
            _
          $region60: #{custom-call.9} parent=57 // loop_header
            %s696 = sphi 0, %s700
            %p697 = scmp.ge.s32.totalorder %s696, 1
            %s701 = sphi [#allocation1], [#allocation1]
            %s702 = sphi %s1, %s1
          $region61: #{custom-call.9} parent=57 // loop_header_branch
            %699 = sbr.rel (%p697) target = $region65
          $region62: #{custom-call.9} parent=57 // loop_body
            %v703 = vld [vmem:[%s701] sm:$0xff]
            %704 = vst [vmem:[%s702] sm:$0xff] %v703
            %v705 = vld [vmem:[%s701 + $0x8] sm:$0xff]
            %706 = vst [vmem:[%s702 + $0x8] sm:$0xff] %v705
            %v707 = vld [vmem:[%s701 + $0x10] sm:$0xff]
            %708 = vst [vmem:[%s702 + $0x10] sm:$0xff] %v707
            %v709 = vld [vmem:[%s701 + $0x18] sm:$0xff]
            %710 = vst [vmem:[%s702 + $0x18] sm:$0xff] %v709
          $region63: #{custom-call.9} parent=57 // loop_footer
            %s700 = sadd.s32 1, %s696
          $region64: #{custom-call.9} parent=57 // loop_footer_branch
            %695 = sbr.rel target = $region60
          $region65: #{custom-call.9} parent=57 // loop_exit
            _
        $region58: #{custom-call.9} parent=42 // pred_fallthru
          _
        // Predicated region
        $region66: #{custom-call.9} parent=42 // pred_check
          _
        $region67: #{custom-call.9} parent=42 // pred_check_branch
          %712 = sbr.rel target = $region69
        $region68: #{custom-call.9} parent=42 // pred_region
          _
        $region69: #{custom-call.9} parent=42 // pred_fallthru
          _
      $region43: #{custom-call.9} parent=38 // pred_fallthru
        _
      // Predicated region
      $region44: #{custom-call.9} parent=38 // pred_check
        _
      $region45: #{custom-call.9} parent=38 // pred_check_branch
        %674 = sbr.rel target = $region47
      $region46: #{custom-call.9} parent=38 // pred_region
        %s676 = ssub.s32 256, 1
        loop: start=0, step=1, limit=1
        $region48: #{custom-call.9} parent=46 // loop_pre_header
          _
        $region49: #{custom-call.9} parent=46 // loop_header
          %s678 = sphi 0, %s682
          %p679 = scmp.ge.s32.totalorder %s678, 1
          %s683 = sphi [#allocation1], [#allocation1]
          %s684 = sphi %s1, %s1
        $region50: #{custom-call.9} parent=46 // loop_header_branch
          %681 = sbr.rel (%p679) target = $region54
        $region51: #{custom-call.9} parent=46 // loop_body
          %v685 = vld [vmem:[%s683] sm:%s676]
          %686 = vst [vmem:[%s684] sm:%s676] %v685
          %v687 = vld [vmem:[%s683 + $0x8] sm:%s676]
          %688 = vst [vmem:[%s684 + $0x8] sm:%s676] %v687
          %v689 = vld [vmem:[%s683 + $0x10] sm:%s676]
          %690 = vst [vmem:[%s684 + $0x10] sm:%s676] %v689
          %v691 = vld [vmem:[%s683 + $0x18] sm:%s676]
          %692 = vst [vmem:[%s684 + $0x18] sm:%s676] %v691
        $region52: #{custom-call.9} parent=46 // loop_footer
          %s682 = sadd.s32 1, %s678
        $region53: #{custom-call.9} parent=46 // loop_footer_branch
          %677 = sbr.rel target = $region49
        $region54: #{custom-call.9} parent=46 // loop_exit
          _
      $region47: #{custom-call.9} parent=38 // pred_fallthru
        _
    $region39: #{custom-call.9} parent=1 // pred_fallthru
      _
    %713 = vnop

// kernel: senn_forward.4
$region0: #{senn_forward.4}
  #allocation0 [shape = 'u32[]', space=smem, size = 0x4, offset = 0x4, fixed_abs, tag = 'smem constant byte address 0x4 - core index']
  #allocation1 [shape = 'u32[144,128]{1,0:T(1,128)}', space=vmem, size = 0x12000, scoped, tag = 'internal scratch']
  %s0 = inlined_call_operand.vmem [shape: f32[32,1], index: 0, kind: input, shape index: {}]
  %s1 = inlined_call_operand.vmem [shape: f32[1,32], index: 1, kind: input, shape index: {}]
  %s2 = inlined_call_operand.vmem [shape: f32[1,48], index: 2, kind: input, shape index: {}]
  %s3 = inlined_call_operand.vmem [shape: f32[1,32], index: 3, kind: input, shape index: {}]
  %s4 = inlined_call_operand.vmem [shape: f32[1,48], index: 4, kind: input, shape index: {}]
  %s5 = inlined_call_operand.vmem [shape: f32[32,32], index: 5, kind: output, shape index: {0}]
  %s6 = inlined_call_operand.vmem [shape: f32[32,48], index: 6, kind: output, shape index: {1}]
  %7 = xla_tuple %s5, %s6
  %s8 = sld [smem:[#allocation0]]
  $region61: #{senn_forward.4} parent=0
    _
  %s10 = ssub.s32 1, %s8
  %s11 = scalar_select 0, %s10, %s8
  loop: start=0, step=1, limit=4
  $region2: #{senn_forward.4} parent=0 // loop_pre_header
    _
  $region3: #{senn_forward.4} parent=0 // loop_header
    %s13 = sphi 0, %s17
    %p14 = scmp.ge.s32.totalorder %s13, 4
    %s23 = sphi 0, %s25
    %s26 = sphi 0, %s23
    %s27 = sphi 0, %s26
    %s43 = sphi 0, %s27
    %s47 = sphi 0, %s47
    %s49 = sphi 0, %s47
    %s50 = sphi 0, %s49
    %s64 = sphi 0, %s50
    %s68 = sphi 0, %s68
    %s70 = sphi 0, %s68
    %s71 = sphi 0, %s70
    %s85 = sphi 0, %s71
    %s89 = sphi 0, %s89
    %s91 = sphi 0, %s89
    %s92 = sphi 0, %s91
    %s106 = sphi 0, %s92
    %s110 = sphi 0, %s110
    %s112 = sphi 0, %s110
    %s113 = sphi 0, %s112
    %s127 = sphi 0, %s113
    %s133 = sphi 0, %s135
    %s136 = sphi 0, %s133
    %s137 = sphi 0, %s136
    %s153 = sphi 0, %s137
    %s159 = sphi 0, %s161
    %s162 = sphi 0, %s159
    %s163 = sphi 0, %s162
    %s179 = sphi 0, %s163
  $region4: #{senn_forward.4} parent=0 // loop_header_branch
    %16 = sbr.rel (%p14) target = $region8
  $region5: #{senn_forward.4} parent=0 // loop_body
    %s18 = ssub.s32 %s13, 1
    %s19 = ssub.s32 %s13, 2
    %s20 = sadd.s32 %s13, 1
    %s21 = ssub.s32 %s13, %s20
    %p22 = scmp.eq.s32.totalorder %s21, 0
    %s24 = sadd.s32 %s23, 1
    %s25 = scalar_select %p22, %s23, %s24
    %p28 = pneg %p22
    %p29 = scmp.eq.s32.totalorder %s13, 1
    %p30 = por %p28, %p29
    %p31 = scmp.ne.s32.totalorder %s23, %s26
    %p32 = scmp.eq.s32.totalorder %s13, 0
    %p33 = por %p31, %p32
    %p34 = scmp.ne.s32.totalorder %s23, %s26
    %p35 = scmp.eq.s32.totalorder %s18, 1
    %p36 = por %p34, %p35
    %p37 = scmp.ne.s32.totalorder %s26, %s27
    %p38 = scmp.eq.s32.totalorder %s18, 0
    %p39 = por %p37, %p38
    %p40 = scmp.ne.s32.totalorder %s26, %s27
    %p41 = scmp.eq.s32.totalorder %s19, 1
    %p42 = por %p40, %p41
    %p44 = scmp.ne.s32.totalorder %s27, %s43
    %p45 = scmp.eq.s32.totalorder %s19, 0
    %p46 = por %p44, %p45
    %s48 = sadd.s32 %s47, 1
    %p51 = scmp.eq.s32.totalorder %s13, 1
    %p52 = scmp.ne.s32.totalorder %s47, %s49
    %p53 = scmp.eq.s32.totalorder %s13, 0
    %p54 = por %p52, %p53
    %p55 = scmp.ne.s32.totalorder %s47, %s49
    %p56 = scmp.eq.s32.totalorder %s18, 1
    %p57 = por %p55, %p56
    %p58 = scmp.ne.s32.totalorder %s49, %s50
    %p59 = scmp.eq.s32.totalorder %s18, 0
    %p60 = por %p58, %p59
    %p61 = scmp.ne.s32.totalorder %s49, %s50
    %p62 = scmp.eq.s32.totalorder %s19, 1
    %p63 = por %p61, %p62
    %p65 = scmp.ne.s32.totalorder %s50, %s64
    %p66 = scmp.eq.s32.totalorder %s19, 0
    %p67 = por %p65, %p66
    %s69 = sadd.s32 %s68, 1
    %p72 = scmp.eq.s32.totalorder %s13, 1
    %p73 = scmp.ne.s32.totalorder %s68, %s70
    %p74 = scmp.eq.s32.totalorder %s13, 0
    %p75 = por %p73, %p74
    %p76 = scmp.ne.s32.totalorder %s68, %s70
    %p77 = scmp.eq.s32.totalorder %s18, 1
    %p78 = por %p76, %p77
    %p79 = scmp.ne.s32.totalorder %s70, %s71
    %p80 = scmp.eq.s32.totalorder %s18, 0
    %p81 = por %p79, %p80
    %p82 = scmp.ne.s32.totalorder %s70, %s71
    %p83 = scmp.eq.s32.totalorder %s19, 1
    %p84 = por %p82, %p83
    %p86 = scmp.ne.s32.totalorder %s71, %s85
    %p87 = scmp.eq.s32.totalorder %s19, 0
    %p88 = por %p86, %p87
    %s90 = sadd.s32 %s89, 1
    %p93 = scmp.eq.s32.totalorder %s13, 1
    %p94 = scmp.ne.s32.totalorder %s89, %s91
    %p95 = scmp.eq.s32.totalorder %s13, 0
    %p96 = por %p94, %p95
    %p97 = scmp.ne.s32.totalorder %s89, %s91
    %p98 = scmp.eq.s32.totalorder %s18, 1
    %p99 = por %p97, %p98
    %p100 = scmp.ne.s32.totalorder %s91, %s92
    %p101 = scmp.eq.s32.totalorder %s18, 0
    %p102 = por %p100, %p101
    %p103 = scmp.ne.s32.totalorder %s91, %s92
    %p104 = scmp.eq.s32.totalorder %s19, 1
    %p105 = por %p103, %p104
    %p107 = scmp.ne.s32.totalorder %s92, %s106
    %p108 = scmp.eq.s32.totalorder %s19, 0
    %p109 = por %p107, %p108
    %s111 = sadd.s32 %s110, 1
    %p114 = scmp.eq.s32.totalorder %s13, 1
    %p115 = scmp.ne.s32.totalorder %s110, %s112
    %p116 = scmp.eq.s32.totalorder %s13, 0
    %p117 = por %p115, %p116
    %p118 = scmp.ne.s32.totalorder %s110, %s112
    %p119 = scmp.eq.s32.totalorder %s18, 1
    %p120 = por %p118, %p119
    %p121 = scmp.ne.s32.totalorder %s112, %s113
    %p122 = scmp.eq.s32.totalorder %s18, 0
    %p123 = por %p121, %p122
    %p124 = scmp.ne.s32.totalorder %s112, %s113
    %p125 = scmp.eq.s32.totalorder %s19, 1
    %p126 = por %p124, %p125
    %p128 = scmp.ne.s32.totalorder %s113, %s127
    %p129 = scmp.eq.s32.totalorder %s19, 0
    %p130 = por %p128, %p129
    %s131 = ssub.s32 %s13, %s20
    %p132 = scmp.eq.s32.totalorder %s131, 0
    %s134 = sadd.s32 %s133, 1
    %s135 = scalar_select %p132, %s133, %s134
    %p138 = pneg %p132
    %p139 = scmp.eq.s32.totalorder %s13, 1
    %p140 = por %p138, %p139
    %p141 = scmp.ne.s32.totalorder %s133, %s136
    %p142 = scmp.eq.s32.totalorder %s13, 0
    %p143 = por %p141, %p142
    %p144 = scmp.ne.s32.totalorder %s133, %s136
    %p145 = scmp.eq.s32.totalorder %s18, 1
    %p146 = por %p144, %p145
    %p147 = scmp.ne.s32.totalorder %s136, %s137
    %p148 = scmp.eq.s32.totalorder %s18, 0
    %p149 = por %p147, %p148
    %p150 = scmp.ne.s32.totalorder %s136, %s137
    %p151 = scmp.eq.s32.totalorder %s19, 1
    %p152 = por %p150, %p151
    %p154 = scmp.ne.s32.totalorder %s137, %s153
    %p155 = scmp.eq.s32.totalorder %s19, 0
    %p156 = por %p154, %p155
    %s157 = ssub.s32 %s13, %s20
    %p158 = scmp.eq.s32.totalorder %s157, 0
    %s160 = sadd.s32 %s159, 1
    %s161 = scalar_select %p158, %s159, %s160
    %p164 = pneg %p158
    %p165 = scmp.eq.s32.totalorder %s13, 1
    %p166 = por %p164, %p165
    %p167 = scmp.ne.s32.totalorder %s159, %s162
    %p168 = scmp.eq.s32.totalorder %s13, 0
    %p169 = por %p167, %p168
    %p170 = scmp.ne.s32.totalorder %s159, %s162
    %p171 = scmp.eq.s32.totalorder %s18, 1
    %p172 = por %p170, %p171
    %p173 = scmp.ne.s32.totalorder %s162, %s163
    %p174 = scmp.eq.s32.totalorder %s18, 0
    %p175 = por %p173, %p174
    %p176 = scmp.ne.s32.totalorder %s162, %s163
    %p177 = scmp.eq.s32.totalorder %s19, 1
    %p178 = por %p176, %p177
    %p180 = scmp.ne.s32.totalorder %s163, %s179
    %p181 = scmp.eq.s32.totalorder %s19, 0
    %p182 = por %p180, %p181
    %p183 = scmp.le.s32.totalorder 1, %s13
    %p184 = scmp.lt.s32.totalorder %s13, 3
    %p185 = pnand %p183, %p184
    %p186 = pneg %p185
    // Predicated region
    $region9: #{senn_forward.4} parent=5 // pred_check
      _
    $region10: #{senn_forward.4} parent=5 // pred_check_branch
      %188 = sbr.rel (%p185) target = $region12
    $region11: #{senn_forward.4} parent=5 // pred_region
      %s189 = ssub.s32 %s13, 1
      // Predicated region
      $region13: #{senn_forward.4} parent=11 // pred_check
        %p190 = pneg %p60
      $region14: #{senn_forward.4} parent=11 // pred_check_branch
        %192 = sbr.rel (%p190) target = $region16
      $region15: #{senn_forward.4} parent=11 // pred_region
        _
      $region16: #{senn_forward.4} parent=11 // pred_fallthru
        _
      // Predicated region
      $region17: #{senn_forward.4} parent=11 // pred_check
        %p193 = pneg %p81
      $region18: #{senn_forward.4} parent=11 // pred_check_branch
        %195 = sbr.rel (%p193) target = $region20
      $region19: #{senn_forward.4} parent=11 // pred_region
        _
      $region20: #{senn_forward.4} parent=11 // pred_fallthru
        _
      // Predicated region
      $region21: #{senn_forward.4} parent=11 // pred_check
        %p196 = pneg %p102
      $region22: #{senn_forward.4} parent=11 // pred_check_branch
        %198 = sbr.rel (%p196) target = $region24
      $region23: #{senn_forward.4} parent=11 // pred_region
        _
      $region24: #{senn_forward.4} parent=11 // pred_fallthru
        _
      // Predicated region
      $region25: #{senn_forward.4} parent=11 // pred_check
        %p199 = pneg %p123
      $region26: #{senn_forward.4} parent=11 // pred_check_branch
        %201 = sbr.rel (%p199) target = $region28
      $region27: #{senn_forward.4} parent=11 // pred_region
        _
      $region28: #{senn_forward.4} parent=11 // pred_fallthru
        _
    $region12: #{senn_forward.4} parent=5 // pred_fallthru
      _
    %p202 = scmp.lt.s32.totalorder %s13, 2
    // Predicated region
    $region29: #{senn_forward.4} parent=5 // pred_check
      %p203 = pneg %p202
    $region30: #{senn_forward.4} parent=5 // pred_check_branch
      %205 = sbr.rel (%p203) target = $region32
    $region31: #{senn_forward.4} parent=5 // pred_region
      // Predicated region
      $region33: #{senn_forward.4} parent=31 // pred_check
        %p206 = pneg %p33
      $region34: #{senn_forward.4} parent=31 // pred_check_branch
        %208 = sbr.rel (%p206) target = $region36
      $region35: #{senn_forward.4} parent=31 // pred_region
        %s209 = smul.u32 2, %s13
        %p210 = scmp.lt.s32.totalorder %s209, 3
        %s211 = scalar_select %p210, %s209, 3
        %s212 = smul.addr %s211, 8
        %s213 = scalar_lea.vmem %s0, %s212
        %s214 = smul.u32 2, %s13
      $region36: #{senn_forward.4} parent=31 // pred_fallthru
        _
    $region32: #{senn_forward.4} parent=5 // pred_fallthru
      _
    %p215 = scmp.le.s32.totalorder 1, %s13
    %p216 = scmp.lt.s32.totalorder %s13, 3
    %p217 = pnand %p215, %p216
    %p218 = pneg %p217
    // Predicated region
    $region37: #{senn_forward.4} parent=5 // pred_check
      _
    $region38: #{senn_forward.4} parent=5 // pred_check_branch
      %220 = sbr.rel (%p217) target = $region40
    $region39: #{senn_forward.4} parent=5 // pred_region
      %s221 = ssub.s32 %s13, 1
      %s222 = smul.u32 2, %s18
      %p223 = scmp.lt.s32.totalorder %s222, 3
      %s224 = scalar_select %p223, %s222, 3
      %s225 = smul.addr %s224, 8
      %s226 = scalar_lea.vmem %s0, %s225
      %p227 = pneg %p39
      %p228 = pneg %p36
      %p229 = pneg %p60
      %p230 = pneg %p57
      %p231 = pneg %p81
      %p232 = pneg %p78
      %p233 = pneg %p102
      %p234 = pneg %p99
      %p235 = pneg %p123
      %p236 = pneg %p120
      %p237 = pneg %p149
      %p238 = pneg %p146
      %s239 = smul.u32 2, %s18
      %p240 = scmp.lt.s32.totalorder %s239, 3
      %s241 = scalar_select %p240, %s239, 3
      %s242 = smul.addr %s241, 8
      %s243 = scalar_lea.vmem %s5, %s242
      %p244 = pneg %p175
      %p245 = pneg %p172
      %s246 = smul.u32 2, %s18
      %p247 = scmp.lt.s32.totalorder %s246, 3
      %s248 = scalar_select %p247, %s246, 3
      %s249 = smul.addr %s248, 8
      %s250 = scalar_lea.vmem %s6, %s249
      %s251 = smul.u32 2, %s18
      %p252 = scmp.lt.s32.totalorder %s251, 3
      %s253 = scalar_select %p252, %s251, 3
      %s254 = smul.addr %s253, 8
      %s255 = scalar_lea.vmem %s0, %s254
      %s256 = smul.u32 2, %s18
      %s257 = smul.u32 2, %s18
      %p258 = scmp.lt.s32.totalorder %s257, 3
      %s259 = scalar_select %p258, %s257, 3
      %s260 = smul.addr %s259, 8
      %s261 = scalar_lea.vmem %s5, %s260
      %s262 = smul.u32 2, %s18
      %s263 = smul.u32 2, %s18
      %p264 = scmp.lt.s32.totalorder %s263, 3
      %s265 = scalar_select %p264, %s263, 3
      %s266 = smul.addr %s265, 8
      %s267 = scalar_lea.vmem %s6, %s266
      %s268 = smul.u32 2, %s18
      %v269 = vld [vmem:[%s3] sm:$0x1]
      %v270 = vld [vmem:[%s4] sm:$0x1]
      %v271 = vld [vmem:[%s255] sm:$0xff]
      %v272 = vld [vmem:[%s255 + $0x8] sm:$0xff]
      %v273 = vld [vmem:[%s1] sm:$0x1]
      %v274 = vmul.f32 %v271, 50.0
      %v275 = vmul.f32 %v272, 50.0
      %277 = vset.pattern.permute.xlu0 0
      %278 = vperm.xlu0 %277, %v274
      %v279 = vpop.permute.xlu0 %278
      %282 = vset.pattern.permute.xlu0 0
      %283 = vperm.xlu0 %282, %v275
      %v284 = vpop.permute.xlu0 %283
      %v287 = vlaneseq
      %v288 = vshrl.u32 %v287, 7
      %v289 = vsub.s32 0, %v288
      %v290 = vrot.slane %v273, %v289
      %v292 = vmul.f32 %v279, %v290
      %v293 = vmul.f32 %v284, %v290
      %v294 = vadd.f32 %v292, 10.0
      %v295 = vadd.f32 %v293, 10.0
      %v296 = vmul.f32 %v294, 2.0
      %v297 = vmul.f32 %v295, 2.0
      %v298 = vmul.f32 %v274, %v271
      %v299 = vmul.f32 %v275, %v272
      %v300 = vadd.f32 %v298, 10.0
      %v301 = vadd.f32 %v299, 10.0
      %v302 = vmul.f32 %v300, 2.0
      %v303 = vmul.f32 %v301, 2.0
      %v304 = vadd.f32 %v302, 1.0
      %v305 = vadd.f32 %v303, 1.0
      %v306 = vrsqrt.pop %v304
      %v307 = vrsqrt.pop %v305
      %309 = vset.pattern.permute.xlu0 0
      %310 = vperm.xlu0 %309, %v306
      %v311 = vpop.permute.xlu0 %310
      %314 = vset.pattern.permute.xlu0 0
      %315 = vperm.xlu0 %314, %v307
      %v316 = vpop.permute.xlu0 %315
      %v318 = vmul.f32 %v296, %v311
      %v319 = vmul.f32 %v297, %v316
      %v321 = vlaneseq
      %v322 = vshrl.u32 %v321, 7
      %v323 = vsub.s32 0, %v322
      %v324 = vrot.slane %v269, %v323
      %v326 = vmul.f32 %v318, %v324
      %v327 = vmul.f32 %v319, %v324
      %v328 = vmax.f32 %v326, -1.0
      %v329 = vmax.f32 %v327, -1.0
      %v330 = vmin.f32 %v328, 1.0
      %v331 = vmin.f32 %v329, 1.0
      %v332 = vand.u32 2147483647, %v330
      %v333 = vand.u32 2147483647, %v331
      %v334 = vmax.f32 %v332, 0.0
      %v335 = vmax.f32 %v333, 0.0
      %v336 = vmin.f32 %v334, 1.0
      %v337 = vmin.f32 %v335, 1.0
      %v338 = vmul.f32 %v336, -0.0012624911
      %v339 = vmul.f32 %v337, -0.0012624911
      %v340 = vadd.f32 %v338, 0.00667009
      %v341 = vadd.f32 %v339, 0.00667009
      %v342 = vmul.f32 %v340, %v336
      %v343 = vmul.f32 %v341, %v337
      %v344 = vadd.f32 %v342, -0.017088126
      %v345 = vadd.f32 %v343, -0.017088126
      %v346 = vmul.f32 %v344, %v336
      %v347 = vmul.f32 %v345, %v337
      %v348 = vadd.f32 %v346, 0.03089188
      %v349 = vadd.f32 %v347, 0.03089188
      %v350 = vmul.f32 %v348, %v336
      %v351 = vmul.f32 %v349, %v337
      %v352 = vadd.f32 %v350, -0.050174303
      %v353 = vadd.f32 %v351, -0.050174303
      %v354 = vmul.f32 %v352, %v336
      %v355 = vmul.f32 %v353, %v337
      %v356 = vadd.f32 %v354, 0.08897899
      %v357 = vadd.f32 %v355, 0.08897899
      %v358 = vmul.f32 %v356, %v336
      %v359 = vmul.f32 %v357, %v337
      %v360 = vadd.f32 %v358, -0.2145988
      %v361 = vadd.f32 %v359, -0.2145988
      %v362 = vmul.f32 %v360, %v336
      %v363 = vmul.f32 %v361, %v337
      %v364 = vadd.f32 %v362, 1.5707963
      %v365 = vadd.f32 %v363, 1.5707963
      %v366 = vsub.f32 1.0, %v336
      %v367 = vsub.f32 1.0, %v337
      %v368 = vrsqrt.pop %v366
      %v369 = vmul.f32 %v366, %v368
      %vm370 = vcmp.eq.f32.partialorder %v366, inf
      %v371 = vsel %vm370, %v366, %v369
      %vm372 = vcmp.eq.f32.partialorder %v366, 0.0
      %v373 = vand.u32 %v366, 2147483648
      %v374 = vsel %vm372, %v373, %v371
      %v375 = vrsqrt.pop %v367
      %v376 = vmul.f32 %v367, %v375
      %vm377 = vcmp.eq.f32.partialorder %v367, inf
      %v378 = vsel %vm377, %v367, %v376
      %vm379 = vcmp.eq.f32.partialorder %v367, 0.0
      %v380 = vand.u32 %v367, 2147483648
      %v381 = vsel %vm379, %v380, %v378
      %v382 = vmul.f32 %v374, %v364
      %v383 = vmul.f32 %v381, %v365
      %v384 = vsub.f32 1.5707964, %v382
      %v385 = vsub.f32 1.5707964, %v383
      %v388 = vand.u32 %v330, 2147483648
      %v389 = vand.u32 %v331, 2147483648
      %v392 = vor.u32 %v384, %v388
      %v393 = vor.u32 %v385, %v389
      %v396 = vmul.f32 %v392, 0.63661975
      %v397 = vmul.f32 %v393, 0.63661975
      %s398 = smul.u32 %s18, 16
      %v399 = vlaneseq
      %v400 = vshrl.u32 %v399, 7
      %v401 = vadd.s32 %v400, 8
      %v402 = vstv %s398
      %v403 = vadd.s32 %v402, %v400
      %v404 = vadd.s32 %v402, %v401
      %v405 = vlaneseq
      %v406 = vand.u32 %v405, 127
      %vm407 = vcmp.eq.s32.totalorder %v403, %v406
      %vm408 = vcmp.eq.s32.totalorder %v404, %v406
      %v409 = vadd.f32 %v396, 0.0001
      %v410 = vadd.f32 %v397, 0.0001
      %v411 = vsel %vm407, %v409, %v396
      %v412 = vsel %vm408, %v410, %v397
      %vm413 = vcmask 261120
      %414 = vst.msk [vmem:[%s261] sm:$0xff] %vm413, %v411
      %415 = vst.msk [vmem:[%s261 + $0x8] sm:$0xff] %vm413, %v412
      %v416 = vld [vmem:[%s2] sm:$0x1]
      %v418 = vlaneseq
      %v419 = vshrl.u32 %v418, 7
      %v420 = vsub.s32 0, %v419
      %v421 = vrot.slane %v416, %v420
      %v423 = vmul.f32 %v279, %v421
      %v424 = vmul.f32 %v284, %v421
      %v425 = vadd.f32 %v423, 10.0
      %v426 = vadd.f32 %v424, 10.0
      %v427 = vmul.f32 %v425, 2.0
      %v428 = vmul.f32 %v426, 2.0
      %v429 = vmul.f32 %v427, %v311
      %v430 = vmul.f32 %v428, %v316
      %v432 = vlaneseq
      %v433 = vshrl.u32 %v432, 7
      %v434 = vsub.s32 0, %v433
      %v435 = vrot.slane %v270, %v434
      %v437 = vmul.f32 %v429, %v435
      %v438 = vmul.f32 %v430, %v435
      %v439 = vmax.f32 %v437, -1.0
      %v440 = vmax.f32 %v438, -1.0
      %v441 = vmin.f32 %v439, 1.0
      %v442 = vmin.f32 %v440, 1.0
      %v443 = vand.u32 2147483647, %v441
      %v444 = vand.u32 2147483647, %v442
      %v445 = vmax.f32 %v443, 0.0
      %v446 = vmax.f32 %v444, 0.0
      %v447 = vmin.f32 %v445, 1.0
      %v448 = vmin.f32 %v446, 1.0
      %v449 = vmul.f32 %v447, -0.0012624911
      %v450 = vmul.f32 %v448, -0.0012624911
      %v451 = vadd.f32 %v449, 0.00667009
      %v452 = vadd.f32 %v450, 0.00667009
      %v453 = vmul.f32 %v451, %v447
      %v454 = vmul.f32 %v452, %v448
      %v455 = vadd.f32 %v453, -0.017088126
      %v456 = vadd.f32 %v454, -0.017088126
      %v457 = vmul.f32 %v455, %v447
      %v458 = vmul.f32 %v456, %v448
      %v459 = vadd.f32 %v457, 0.03089188
      %v460 = vadd.f32 %v458, 0.03089188
      %v461 = vmul.f32 %v459, %v447
      %v462 = vmul.f32 %v460, %v448
      %v463 = vadd.f32 %v461, -0.050174303
      %v464 = vadd.f32 %v462, -0.050174303
      %v465 = vmul.f32 %v463, %v447
      %v466 = vmul.f32 %v464, %v448
      %v467 = vadd.f32 %v465, 0.08897899
      %v468 = vadd.f32 %v466, 0.08897899
      %v469 = vmul.f32 %v467, %v447
      %v470 = vmul.f32 %v468, %v448
      %v471 = vadd.f32 %v469, -0.2145988
      %v472 = vadd.f32 %v470, -0.2145988
      %v473 = vmul.f32 %v471, %v447
      %v474 = vmul.f32 %v472, %v448
      %v475 = vadd.f32 %v473, 1.5707963
      %v476 = vadd.f32 %v474, 1.5707963
      %v477 = vsub.f32 1.0, %v447
      %v478 = vsub.f32 1.0, %v448
      %v479 = vrsqrt.pop %v477
      %v480 = vmul.f32 %v477, %v479
      %vm481 = vcmp.eq.f32.partialorder %v477, inf
      %v482 = vsel %vm481, %v477, %v480
      %vm483 = vcmp.eq.f32.partialorder %v477, 0.0
      %v484 = vand.u32 %v477, 2147483648
      %v485 = vsel %vm483, %v484, %v482
      %v486 = vrsqrt.pop %v478
      %v487 = vmul.f32 %v478, %v486
      %vm488 = vcmp.eq.f32.partialorder %v478, inf
      %v489 = vsel %vm488, %v478, %v487
      %vm490 = vcmp.eq.f32.partialorder %v478, 0.0
      %v491 = vand.u32 %v478, 2147483648
      %v492 = vsel %vm490, %v491, %v489
      %v493 = vmul.f32 %v485, %v475
      %v494 = vmul.f32 %v492, %v476
      %v495 = vsub.f32 1.5707964, %v493
      %v496 = vsub.f32 1.5707964, %v494
      %v499 = vand.u32 %v441, 2147483648
      %v500 = vand.u32 %v442, 2147483648
      %v503 = vor.u32 %v495, %v499
      %v504 = vor.u32 %v496, %v500
      %v507 = vmul.f32 %v503, 0.63661975
      %v508 = vmul.f32 %v504, 0.63661975
      %vm509 = vcmask 392192
      %510 = vst.msk [vmem:[%s267] sm:$0xff] %vm509, %v507
      %511 = vst.msk [vmem:[%s267 + $0x8] sm:$0xff] %vm509, %v508
      %s512 = smul.u32 2, %s18
      %p513 = scmp.lt.s32.totalorder %s512, 3
      %s514 = scalar_select %p513, %s512, 3
      %s515 = smul.addr %s514, 8
      %s516 = scalar_lea.vmem %s5, %s515
      %s517 = smul.u32 2, %s18
      %p518 = scmp.lt.s32.totalorder %s517, 3
      %s519 = scalar_select %p518, %s517, 3
      %s520 = smul.addr %s519, 8
      %s521 = scalar_lea.vmem %s6, %s520
      // Predicated region
      $region41: #{senn_forward.4} parent=39 // pred_check
        %p522 = pneg %p146
      $region42: #{senn_forward.4} parent=39 // pred_check_branch
        %524 = sbr.rel (%p522) target = $region44
      $region43: #{senn_forward.4} parent=39 // pred_region
        %s525 = smul.u32 2, %s18
      $region44: #{senn_forward.4} parent=39 // pred_fallthru
        _
      // Predicated region
      $region45: #{senn_forward.4} parent=39 // pred_check
        %p526 = pneg %p172
      $region46: #{senn_forward.4} parent=39 // pred_check_branch
        %528 = sbr.rel (%p526) target = $region48
      $region47: #{senn_forward.4} parent=39 // pred_region
        %s529 = smul.u32 2, %s18
      $region48: #{senn_forward.4} parent=39 // pred_fallthru
        _
    $region40: #{senn_forward.4} parent=5 // pred_fallthru
      _
    %p530 = scmp.le.s32.totalorder 2, %s13
    // Predicated region
    $region49: #{senn_forward.4} parent=5 // pred_check
      %p531 = pneg %p530
    $region50: #{senn_forward.4} parent=5 // pred_check_branch
      %533 = sbr.rel (%p531) target = $region52
    $region51: #{senn_forward.4} parent=5 // pred_region
      %s534 = ssub.s32 %s13, 2
      // Predicated region
      $region53: #{senn_forward.4} parent=51 // pred_check
        %p535 = pneg %p152
      $region54: #{senn_forward.4} parent=51 // pred_check_branch
        %537 = sbr.rel (%p535) target = $region56
      $region55: #{senn_forward.4} parent=51 // pred_region
        %s538 = smul.u32 2, %s19
        %p539 = scmp.lt.s32.totalorder %s538, 3
        %s540 = scalar_select %p539, %s538, 3
        %s541 = smul.addr %s540, 8
        %s542 = scalar_lea.vmem %s5, %s541
      $region56: #{senn_forward.4} parent=51 // pred_fallthru
        _
      // Predicated region
      $region57: #{senn_forward.4} parent=51 // pred_check
        %p543 = pneg %p178
      $region58: #{senn_forward.4} parent=51 // pred_check_branch
        %545 = sbr.rel (%p543) target = $region60
      $region59: #{senn_forward.4} parent=51 // pred_region
        %s546 = smul.u32 2, %s19
        %p547 = scmp.lt.s32.totalorder %s546, 3
        %s548 = scalar_select %p547, %s546, 3
        %s549 = smul.addr %s548, 8
        %s550 = scalar_lea.vmem %s6, %s549
      $region60: #{senn_forward.4} parent=51 // pred_fallthru
        _
    $region52: #{senn_forward.4} parent=5 // pred_fallthru
      _
  $region6: #{senn_forward.4} parent=0 // loop_footer
    %s17 = sadd.s32 1, %s13
  $region7: #{senn_forward.4} parent=0 // loop_footer_branch
    %12 = sbr.rel target = $region3
  $region8: #{senn_forward.4} parent=0 // loop_exit
    _

// kernel: senn_forward.5
$region0: #{senn_forward.5}
  #allocation0 [shape = 'u32[]', space=smem, size = 0x4, offset = 0x4, fixed_abs, tag = 'smem constant byte address 0x4 - core index']
  #allocation1 [shape = 'u32[144,128]{1,0:T(1,128)}', space=vmem, size = 0x12000, scoped, tag = 'internal scratch']
  #allocation2 [shape = 'f32[1,48]{1,0:T(1,128)}', space=vmem, size = 0x200, scoped, tag = 'scratch operand']
  %s0 = inlined_call_operand.vmem [shape: f32[1,32], index: 0, kind: input, shape index: {}]
  %s1 = inlined_call_operand.vmem [shape: f32[32,48], index: 1, kind: input, shape index: {}]
  %s2 = inlined_call_operand.vmem [shape: f32[1,48], index: 2, kind: output, shape index: {}]
  %s3 = sld [smem:[#allocation0]]
  $region26: #{senn_forward.5} parent=0
    _
  %s5 = ssub.s32 1, %s3
  %s6 = scalar_select 0, %s5, %s3
  // Predicated region
  $region2: #{senn_forward.5} parent=0 // pred_check
    _
  $region3: #{senn_forward.5} parent=0 // pred_check_branch
    %8 = sbr.rel (0) target = $region5
  $region4: #{senn_forward.5} parent=0 // pred_region
    _
  $region5: #{senn_forward.5} parent=0 // pred_fallthru
    _
  // Predicated region
  $region6: #{senn_forward.5} parent=0 // pred_check
    _
  $region7: #{senn_forward.5} parent=0 // pred_check_branch
    %10 = sbr.rel (0) target = $region9
  $region8: #{senn_forward.5} parent=0 // pred_region
    _
  $region9: #{senn_forward.5} parent=0 // pred_fallthru
    _
  %p11 = scmp.eq.s32.totalorder 0, 0
  // Predicated region
  $region10: #{senn_forward.5} parent=0 // pred_check
    %p12 = pneg %p11
  $region11: #{senn_forward.5} parent=0 // pred_check_branch
    %14 = sbr.rel (%p12) target = $region13
  $region12: #{senn_forward.5} parent=0 // pred_region
    %vm15 = vcmask 385024
    %16 = vst.msk [vmem:[#allocation2] sm:$0x1] %vm15, 0.0
  $region13: #{senn_forward.5} parent=0 // pred_fallthru
    _
  %v17 = vld [vmem:[#allocation2] sm:$0x1]
  %v18 = vld [vmem:[%s0] sm:$0x1]
  %v19 = vld [vmem:[%s1] sm:$0xff]
  %v20 = vld [vmem:[%s1 + $0x8] sm:$0xff]
  %v21 = vld [vmem:[%s1 + $0x10] sm:$0xff]
  %v22 = vld [vmem:[%s1 + $0x18] sm:$0xff]
  %vm23 = vcmask 261120
  %v25 = vsel %vm23, %v18, 0
  %27 = vmatprep.subr.mxu0 0.0
  %28 = vmatpush1.msra.mxu0 0.0
  %29 = vmatprep.subr.mxu0 0.0
  %30 = vmatpush1.msra.mxu0 0.0
  %31 = vmatprep.subr.mxu0 0.0
  %32 = vmatpush1.msra.mxu0 0.0
  %33 = vmatprep.subr.mxu0 0.0
  %34 = vmatpush1.msra.mxu0 0.0
  %35 = vmatprep.subr.mxu0 0.0
  %36 = vmatpush1.msra.mxu0 0.0
  %37 = vmatprep.subr.mxu0 0.0
  %38 = vmatpush1.msra.mxu0 0.0
  %39 = vmatprep.subr.mxu0 0.0
  %40 = vmatpush1.msra.mxu0 0.0
  %41 = vmatprep.subr.mxu0 0.0
  %42 = vmatpush1.msra.mxu0 0.0
  %43 = vmatprep.subr.mxu0 0.0
  %44 = vmatpush1.msra.mxu0 0.0
  %45 = vmatprep.subr.mxu0 0.0
  %46 = vmatpush1.msra.mxu0 0.0
  %47 = vmatprep.subr.mxu0 0.0
  %48 = vmatpush1.msra.mxu0 0.0
  %49 = vmatprep.subr.mxu0 0.0
  %50 = vmatpush1.msra.mxu0 0.0
  %51 = vmatprep.subr.mxu0 0.0
  %52 = vmatpush1.msra.mxu0 %v22
  %53 = vmatprep.subr.mxu0 0.0
  %54 = vmatpush1.msra.mxu0 %v21
  %55 = vmatprep.subr.mxu0 0.0
  %56 = vmatpush1.msra.mxu0 %v20
  %57 = vmatprep.subr.mxu0 0.0
  %58 = vmatpush1.msra.mxu0 %v19
  %59 = vmatprep.subr.mxu0 0.0
  %60 = vmatpush2.msra.mxu0 0.0
  %61 = vmatprep.subr.mxu0 0.0
  %62 = vmatpush2.msra.mxu0 0.0
  %63 = vmatprep.subr.mxu0 0.0
  %64 = vmatpush2.msra.mxu0 0.0
  %65 = vmatprep.subr.mxu0 0.0
  %66 = vmatpush2.msra.mxu0 0.0
  %67 = vmatprep.subr.mxu0 0.0
  %68 = vmatpush2.msra.mxu0 0.0
  %69 = vmatprep.subr.mxu0 0.0
  %70 = vmatpush2.msra.mxu0 0.0
  %71 = vmatprep.subr.mxu0 0.0
  %72 = vmatpush2.msra.mxu0 0.0
  %73 = vmatprep.subr.mxu0 0.0
  %74 = vmatpush2.msra.mxu0 0.0
  %75 = vmatprep.subr.mxu0 0.0
  %76 = vmatpush2.msra.mxu0 0.0
  %77 = vmatprep.subr.mxu0 0.0
  %78 = vmatpush2.msra.mxu0 0.0
  %79 = vmatprep.subr.mxu0 0.0
  %80 = vmatpush2.msra.mxu0 0.0
  %81 = vmatprep.subr.mxu0 0.0
  %82 = vmatpush2.msra.mxu0 0.0
  %83 = vmatprep.subr.mxu0 0.0
  %84 = vmatpush2.msra.mxu0 0.0
  %85 = vmatprep.subr.mxu0 0.0
  %86 = vmatpush2.msra.mxu0 0.0
  %87 = vmatprep.subr.mxu0 0.0
  %88 = vmatpush2.msra.mxu0 0.0
  %89 = vmatprep.subr.mxu0 0.0
  %90 = vmatpush2.msra.mxu0 0.0
  %91 = vmatprep.mubr.f32.mxu0 0.0
  %92 = vmatmul.mubr.f32.gmra.mxu0 %v25
  %v93 = vpop.f32.mrf.mxu0
  %v94 = vadd.f32 0.0, %v93
  %v95 = vpop.f32.mrf.mxu0
  %96 = vdwg.mxu0
  %v97 = vadd.f32 %v17, %v94
  %vm98 = vcmask 385024
  %99 = vst.msk [vmem:[#allocation2] sm:$0x1] %vm98, %v97
  // Predicated region
  $region14: #{senn_forward.5} parent=0 // pred_check
    %p100 = pneg %p11
  $region15: #{senn_forward.5} parent=0 // pred_check_branch
    %102 = sbr.rel (%p100) target = $region17
  $region16: #{senn_forward.5} parent=0 // pred_region
    %v103 = vld [vmem:[#allocation2] sm:$0x1]
    %104 = vst.msk [vmem:[%s2] sm:$0x1] %vm98, %v103
  $region17: #{senn_forward.5} parent=0 // pred_fallthru
    _
  // Predicated region
  $region18: #{senn_forward.5} parent=0 // pred_check
    _
  $region19: #{senn_forward.5} parent=0 // pred_check_branch
    %106 = sbr.rel (0) target = $region21
  $region20: #{senn_forward.5} parent=0 // pred_region
    _
  $region21: #{senn_forward.5} parent=0 // pred_fallthru
    _
  // Predicated region
  $region22: #{senn_forward.5} parent=0 // pred_check
    _
  $region23: #{senn_forward.5} parent=0 // pred_check_branch
    %108 = sbr.rel (0) target = $region25
  $region24: #{senn_forward.5} parent=0 // pred_region
    _
  $region25: #{senn_forward.5} parent=0 // pred_fallthru
    _

// kernel: senn_forward.6
$region0: #{senn_forward.6}
  #allocation0 [shape = 'u32[]', space=smem, size = 0x4, offset = 0x4, fixed_abs, tag = 'smem constant byte address 0x4 - core index']
  #allocation1 [shape = 'u32[144,128]{1,0:T(1,128)}', space=vmem, size = 0x12000, scoped, tag = 'internal scratch']
  %s0 = inlined_call_operand.vmem [shape: f32[32,1], index: 0, kind: input, shape index: {}]
  %s1 = inlined_call_operand.vmem [shape: f32[1,32], index: 1, kind: input, shape index: {}]
  %s2 = inlined_call_operand.vmem [shape: f32[1,48], index: 2, kind: input, shape index: {}]
  %s3 = inlined_call_operand.vmem [shape: f32[32,32], index: 3, kind: output, shape index: {0}]
  %s4 = inlined_call_operand.vmem [shape: f32[32,48], index: 4, kind: output, shape index: {1}]
  %5 = xla_tuple %s3, %s4
  %s6 = sld [smem:[#allocation0]]
  $region53: #{senn_forward.6} parent=0
    _
  %s8 = ssub.s32 1, %s6
  %s9 = scalar_select 0, %s8, %s6
  loop: start=0, step=1, limit=4
  $region2: #{senn_forward.6} parent=0 // loop_pre_header
    _
  $region3: #{senn_forward.6} parent=0 // loop_header
    %s11 = sphi 0, %s15
    %p12 = scmp.ge.s32.totalorder %s11, 4
    %s21 = sphi 0, %s23
    %s24 = sphi 0, %s21
    %s25 = sphi 0, %s24
    %s41 = sphi 0, %s25
    %s45 = sphi 0, %s45
    %s47 = sphi 0, %s45
    %s48 = sphi 0, %s47
    %s62 = sphi 0, %s48
    %s66 = sphi 0, %s66
    %s68 = sphi 0, %s66
    %s69 = sphi 0, %s68
    %s83 = sphi 0, %s69
    %s89 = sphi 0, %s91
    %s92 = sphi 0, %s89
    %s93 = sphi 0, %s92
    %s109 = sphi 0, %s93
    %s115 = sphi 0, %s117
    %s118 = sphi 0, %s115
    %s119 = sphi 0, %s118
    %s135 = sphi 0, %s119
  $region4: #{senn_forward.6} parent=0 // loop_header_branch
    %14 = sbr.rel (%p12) target = $region8
  $region5: #{senn_forward.6} parent=0 // loop_body
    %s16 = ssub.s32 %s11, 1
    %s17 = ssub.s32 %s11, 2
    %s18 = sadd.s32 %s11, 1
    %s19 = ssub.s32 %s11, %s18
    %p20 = scmp.eq.s32.totalorder %s19, 0
    %s22 = sadd.s32 %s21, 1
    %s23 = scalar_select %p20, %s21, %s22
    %p26 = pneg %p20
    %p27 = scmp.eq.s32.totalorder %s11, 1
    %p28 = por %p26, %p27
    %p29 = scmp.ne.s32.totalorder %s21, %s24
    %p30 = scmp.eq.s32.totalorder %s11, 0
    %p31 = por %p29, %p30
    %p32 = scmp.ne.s32.totalorder %s21, %s24
    %p33 = scmp.eq.s32.totalorder %s16, 1
    %p34 = por %p32, %p33
    %p35 = scmp.ne.s32.totalorder %s24, %s25
    %p36 = scmp.eq.s32.totalorder %s16, 0
    %p37 = por %p35, %p36
    %p38 = scmp.ne.s32.totalorder %s24, %s25
    %p39 = scmp.eq.s32.totalorder %s17, 1
    %p40 = por %p38, %p39
    %p42 = scmp.ne.s32.totalorder %s25, %s41
    %p43 = scmp.eq.s32.totalorder %s17, 0
    %p44 = por %p42, %p43
    %s46 = sadd.s32 %s45, 1
    %p49 = scmp.eq.s32.totalorder %s11, 1
    %p50 = scmp.ne.s32.totalorder %s45, %s47
    %p51 = scmp.eq.s32.totalorder %s11, 0
    %p52 = por %p50, %p51
    %p53 = scmp.ne.s32.totalorder %s45, %s47
    %p54 = scmp.eq.s32.totalorder %s16, 1
    %p55 = por %p53, %p54
    %p56 = scmp.ne.s32.totalorder %s47, %s48
    %p57 = scmp.eq.s32.totalorder %s16, 0
    %p58 = por %p56, %p57
    %p59 = scmp.ne.s32.totalorder %s47, %s48
    %p60 = scmp.eq.s32.totalorder %s17, 1
    %p61 = por %p59, %p60
    %p63 = scmp.ne.s32.totalorder %s48, %s62
    %p64 = scmp.eq.s32.totalorder %s17, 0
    %p65 = por %p63, %p64
    %s67 = sadd.s32 %s66, 1
    %p70 = scmp.eq.s32.totalorder %s11, 1
    %p71 = scmp.ne.s32.totalorder %s66, %s68
    %p72 = scmp.eq.s32.totalorder %s11, 0
    %p73 = por %p71, %p72
    %p74 = scmp.ne.s32.totalorder %s66, %s68
    %p75 = scmp.eq.s32.totalorder %s16, 1
    %p76 = por %p74, %p75
    %p77 = scmp.ne.s32.totalorder %s68, %s69
    %p78 = scmp.eq.s32.totalorder %s16, 0
    %p79 = por %p77, %p78
    %p80 = scmp.ne.s32.totalorder %s68, %s69
    %p81 = scmp.eq.s32.totalorder %s17, 1
    %p82 = por %p80, %p81
    %p84 = scmp.ne.s32.totalorder %s69, %s83
    %p85 = scmp.eq.s32.totalorder %s17, 0
    %p86 = por %p84, %p85
    %s87 = ssub.s32 %s11, %s18
    %p88 = scmp.eq.s32.totalorder %s87, 0
    %s90 = sadd.s32 %s89, 1
    %s91 = scalar_select %p88, %s89, %s90
    %p94 = pneg %p88
    %p95 = scmp.eq.s32.totalorder %s11, 1
    %p96 = por %p94, %p95
    %p97 = scmp.ne.s32.totalorder %s89, %s92
    %p98 = scmp.eq.s32.totalorder %s11, 0
    %p99 = por %p97, %p98
    %p100 = scmp.ne.s32.totalorder %s89, %s92
    %p101 = scmp.eq.s32.totalorder %s16, 1
    %p102 = por %p100, %p101
    %p103 = scmp.ne.s32.totalorder %s92, %s93
    %p104 = scmp.eq.s32.totalorder %s16, 0
    %p105 = por %p103, %p104
    %p106 = scmp.ne.s32.totalorder %s92, %s93
    %p107 = scmp.eq.s32.totalorder %s17, 1
    %p108 = por %p106, %p107
    %p110 = scmp.ne.s32.totalorder %s93, %s109
    %p111 = scmp.eq.s32.totalorder %s17, 0
    %p112 = por %p110, %p111
    %s113 = ssub.s32 %s11, %s18
    %p114 = scmp.eq.s32.totalorder %s113, 0
    %s116 = sadd.s32 %s115, 1
    %s117 = scalar_select %p114, %s115, %s116
    %p120 = pneg %p114
    %p121 = scmp.eq.s32.totalorder %s11, 1
    %p122 = por %p120, %p121
    %p123 = scmp.ne.s32.totalorder %s115, %s118
    %p124 = scmp.eq.s32.totalorder %s11, 0
    %p125 = por %p123, %p124
    %p126 = scmp.ne.s32.totalorder %s115, %s118
    %p127 = scmp.eq.s32.totalorder %s16, 1
    %p128 = por %p126, %p127
    %p129 = scmp.ne.s32.totalorder %s118, %s119
    %p130 = scmp.eq.s32.totalorder %s16, 0
    %p131 = por %p129, %p130
    %p132 = scmp.ne.s32.totalorder %s118, %s119
    %p133 = scmp.eq.s32.totalorder %s17, 1
    %p134 = por %p132, %p133
    %p136 = scmp.ne.s32.totalorder %s119, %s135
    %p137 = scmp.eq.s32.totalorder %s17, 0
    %p138 = por %p136, %p137
    %p139 = scmp.le.s32.totalorder 1, %s11
    %p140 = scmp.lt.s32.totalorder %s11, 3
    %p141 = pnand %p139, %p140
    %p142 = pneg %p141
    // Predicated region
    $region9: #{senn_forward.6} parent=5 // pred_check
      _
    $region10: #{senn_forward.6} parent=5 // pred_check_branch
      %144 = sbr.rel (%p141) target = $region12
    $region11: #{senn_forward.6} parent=5 // pred_region
      %s145 = ssub.s32 %s11, 1
      // Predicated region
      $region13: #{senn_forward.6} parent=11 // pred_check
        %p146 = pneg %p58
      $region14: #{senn_forward.6} parent=11 // pred_check_branch
        %148 = sbr.rel (%p146) target = $region16
      $region15: #{senn_forward.6} parent=11 // pred_region
        _
      $region16: #{senn_forward.6} parent=11 // pred_fallthru
        _
      // Predicated region
      $region17: #{senn_forward.6} parent=11 // pred_check
        %p149 = pneg %p79
      $region18: #{senn_forward.6} parent=11 // pred_check_branch
        %151 = sbr.rel (%p149) target = $region20
      $region19: #{senn_forward.6} parent=11 // pred_region
        _
      $region20: #{senn_forward.6} parent=11 // pred_fallthru
        _
    $region12: #{senn_forward.6} parent=5 // pred_fallthru
      _
    %p152 = scmp.lt.s32.totalorder %s11, 2
    // Predicated region
    $region21: #{senn_forward.6} parent=5 // pred_check
      %p153 = pneg %p152
    $region22: #{senn_forward.6} parent=5 // pred_check_branch
      %155 = sbr.rel (%p153) target = $region24
    $region23: #{senn_forward.6} parent=5 // pred_region
      // Predicated region
      $region25: #{senn_forward.6} parent=23 // pred_check
        %p156 = pneg %p31
      $region26: #{senn_forward.6} parent=23 // pred_check_branch
        %158 = sbr.rel (%p156) target = $region28
      $region27: #{senn_forward.6} parent=23 // pred_region
        %s159 = smul.u32 2, %s11
        %p160 = scmp.lt.s32.totalorder %s159, 3
        %s161 = scalar_select %p160, %s159, 3
        %s162 = smul.addr %s161, 8
        %s163 = scalar_lea.vmem %s0, %s162
        %s164 = smul.u32 2, %s11
      $region28: #{senn_forward.6} parent=23 // pred_fallthru
        _
    $region24: #{senn_forward.6} parent=5 // pred_fallthru
      _
    %p165 = scmp.le.s32.totalorder 1, %s11
    %p166 = scmp.lt.s32.totalorder %s11, 3
    %p167 = pnand %p165, %p166
    %p168 = pneg %p167
    // Predicated region
    $region29: #{senn_forward.6} parent=5 // pred_check
      _
    $region30: #{senn_forward.6} parent=5 // pred_check_branch
      %170 = sbr.rel (%p167) target = $region32
    $region31: #{senn_forward.6} parent=5 // pred_region
      %s171 = ssub.s32 %s11, 1
      %s172 = smul.u32 2, %s16
      %p173 = scmp.lt.s32.totalorder %s172, 3
      %s174 = scalar_select %p173, %s172, 3
      %s175 = smul.addr %s174, 8
      %s176 = scalar_lea.vmem %s0, %s175
      %p177 = pneg %p37
      %p178 = pneg %p34
      %p179 = pneg %p58
      %p180 = pneg %p55
      %p181 = pneg %p79
      %p182 = pneg %p76
      %p183 = pneg %p105
      %p184 = pneg %p102
      %s185 = smul.u32 2, %s16
      %p186 = scmp.lt.s32.totalorder %s185, 3
      %s187 = scalar_select %p186, %s185, 3
      %s188 = smul.addr %s187, 8
      %s189 = scalar_lea.vmem %s3, %s188
      %p190 = pneg %p131
      %p191 = pneg %p128
      %s192 = smul.u32 2, %s16
      %p193 = scmp.lt.s32.totalorder %s192, 3
      %s194 = scalar_select %p193, %s192, 3
      %s195 = smul.addr %s194, 8
      %s196 = scalar_lea.vmem %s4, %s195
      %s197 = smul.u32 2, %s16
      %p198 = scmp.lt.s32.totalorder %s197, 3
      %s199 = scalar_select %p198, %s197, 3
      %s200 = smul.addr %s199, 8
      %s201 = scalar_lea.vmem %s0, %s200
      %s202 = smul.u32 2, %s16
      %s203 = smul.u32 2, %s16
      %p204 = scmp.lt.s32.totalorder %s203, 3
      %s205 = scalar_select %p204, %s203, 3
      %s206 = smul.addr %s205, 8
      %s207 = scalar_lea.vmem %s3, %s206
      %s208 = smul.u32 2, %s16
      %s209 = smul.u32 2, %s16
      %p210 = scmp.lt.s32.totalorder %s209, 3
      %s211 = scalar_select %p210, %s209, 3
      %s212 = smul.addr %s211, 8
      %s213 = scalar_lea.vmem %s4, %s212
      %s214 = smul.u32 2, %s16
      %v215 = vld [vmem:[%s201] sm:$0xff]
      %v216 = vld [vmem:[%s201 + $0x8] sm:$0xff]
      %v217 = vld [vmem:[%s1] sm:$0x1]
      %219 = vset.pattern.permute.xlu0 0
      %220 = vperm.xlu0 %219, %v215
      %v221 = vpop.permute.xlu0 %220
      %224 = vset.pattern.permute.xlu0 0
      %225 = vperm.xlu0 %224, %v216
      %v226 = vpop.permute.xlu0 %225
      %v229 = vlaneseq
      %v230 = vshrl.u32 %v229, 7
      %v231 = vsub.s32 0, %v230
      %v232 = vrot.slane %v217, %v231
      %v234 = vsub.f32 %v221, %v232
      %v235 = vsub.f32 %v226, %v232
      %v236 = vmul.f32 %v234, -0.5
      %v237 = vmul.f32 %v235, -0.5
      %v238 = vmul.f32 %v236, %v234
      %v239 = vmul.f32 %v237, %v235
      %v240 = vmul.f32 %v238, 1.442695
      %v241 = vpow.pop %v240
      %v242 = vmul.f32 %v239, 1.442695
      %v243 = vpow.pop %v242
      %s244 = smul.u32 %s16, 16
      %v245 = vlaneseq
      %v246 = vshrl.u32 %v245, 7
      %v247 = vadd.s32 %v246, 8
      %v248 = vstv %s244
      %v249 = vadd.s32 %v248, %v246
      %v250 = vadd.s32 %v248, %v247
      %v251 = vlaneseq
      %v252 = vand.u32 %v251, 127
      %vm253 = vcmp.eq.s32.totalorder %v249, %v252
      %vm254 = vcmp.eq.s32.totalorder %v250, %v252
      %v255 = vadd.f32 %v241, 0.0001
      %v256 = vadd.f32 %v243, 0.0001
      %v257 = vsel %vm253, %v255, %v241
      %v258 = vsel %vm254, %v256, %v243
      %vm259 = vcmask 261120
      %260 = vst.msk [vmem:[%s207] sm:$0xff] %vm259, %v257
      %261 = vst.msk [vmem:[%s207 + $0x8] sm:$0xff] %vm259, %v258
      %v262 = vld [vmem:[%s2] sm:$0x1]
      %v264 = vlaneseq
      %v265 = vshrl.u32 %v264, 7
      %v266 = vsub.s32 0, %v265
      %v267 = vrot.slane %v262, %v266
      %v269 = vsub.f32 %v221, %v267
      %v270 = vsub.f32 %v226, %v267
      %v271 = vmul.f32 %v269, -0.5
      %v272 = vmul.f32 %v270, -0.5
      %v273 = vmul.f32 %v271, %v269
      %v274 = vmul.f32 %v272, %v270
      %v275 = vmul.f32 %v273, 1.442695
      %v276 = vpow.pop %v275
      %v277 = vmul.f32 %v274, 1.442695
      %v278 = vpow.pop %v277
      %vm279 = vcmask 392192
      %280 = vst.msk [vmem:[%s213] sm:$0xff] %vm279, %v276
      %281 = vst.msk [vmem:[%s213 + $0x8] sm:$0xff] %vm279, %v278
      %s282 = smul.u32 2, %s16
      %p283 = scmp.lt.s32.totalorder %s282, 3
      %s284 = scalar_select %p283, %s282, 3
      %s285 = smul.addr %s284, 8
      %s286 = scalar_lea.vmem %s3, %s285
      %s287 = smul.u32 2, %s16
      %p288 = scmp.lt.s32.totalorder %s287, 3
      %s289 = scalar_select %p288, %s287, 3
      %s290 = smul.addr %s289, 8
      %s291 = scalar_lea.vmem %s4, %s290
      // Predicated region
      $region33: #{senn_forward.6} parent=31 // pred_check
        %p292 = pneg %p102
      $region34: #{senn_forward.6} parent=31 // pred_check_branch
        %294 = sbr.rel (%p292) target = $region36
      $region35: #{senn_forward.6} parent=31 // pred_region
        %s295 = smul.u32 2, %s16
      $region36: #{senn_forward.6} parent=31 // pred_fallthru
        _
      // Predicated region
      $region37: #{senn_forward.6} parent=31 // pred_check
        %p296 = pneg %p128
      $region38: #{senn_forward.6} parent=31 // pred_check_branch
        %298 = sbr.rel (%p296) target = $region40
      $region39: #{senn_forward.6} parent=31 // pred_region
        %s299 = smul.u32 2, %s16
      $region40: #{senn_forward.6} parent=31 // pred_fallthru
        _
    $region32: #{senn_forward.6} parent=5 // pred_fallthru
      _
    %p300 = scmp.le.s32.totalorder 2, %s11
    // Predicated region
    $region41: #{senn_forward.6} parent=5 // pred_check
      %p301 = pneg %p300
    $region42: #{senn_forward.6} parent=5 // pred_check_branch
      %303 = sbr.rel (%p301) target = $region44
    $region43: #{senn_forward.6} parent=5 // pred_region
      %s304 = ssub.s32 %s11, 2
      // Predicated region
      $region45: #{senn_forward.6} parent=43 // pred_check
        %p305 = pneg %p108
      $region46: #{senn_forward.6} parent=43 // pred_check_branch
        %307 = sbr.rel (%p305) target = $region48
      $region47: #{senn_forward.6} parent=43 // pred_region
        %s308 = smul.u32 2, %s17
        %p309 = scmp.lt.s32.totalorder %s308, 3
        %s310 = scalar_select %p309, %s308, 3
        %s311 = smul.addr %s310, 8
        %s312 = scalar_lea.vmem %s3, %s311
      $region48: #{senn_forward.6} parent=43 // pred_fallthru
        _
      // Predicated region
      $region49: #{senn_forward.6} parent=43 // pred_check
        %p313 = pneg %p134
      $region50: #{senn_forward.6} parent=43 // pred_check_branch
        %315 = sbr.rel (%p313) target = $region52
      $region51: #{senn_forward.6} parent=43 // pred_region
        %s316 = smul.u32 2, %s17
        %p317 = scmp.lt.s32.totalorder %s316, 3
        %s318 = scalar_select %p317, %s316, 3
        %s319 = smul.addr %s318, 8
        %s320 = scalar_lea.vmem %s4, %s319
      $region52: #{senn_forward.6} parent=43 // pred_fallthru
        _
    $region44: #{senn_forward.6} parent=5 // pred_fallthru
      _
  $region6: #{senn_forward.6} parent=0 // loop_footer
    %s15 = sadd.s32 1, %s11
  $region7: #{senn_forward.6} parent=0 // loop_footer_branch
    %10 = sbr.rel target = $region3
  $region8: #{senn_forward.6} parent=0 // loop_exit
    _

// kernel: senn_forward.7
$region0: #{senn_forward.7}
  #allocation0 [shape = 'u32[]', space=smem, size = 0x4, offset = 0x4, fixed_abs, tag = 'smem constant byte address 0x4 - core index']
  #allocation1 [shape = 'u32[144,128]{1,0:T(1,128)}', space=vmem, size = 0x12000, scoped, tag = 'internal scratch']
  #allocation2 [shape = 'f32[1,48]{1,0:T(1,128)}', space=vmem, size = 0x200, scoped, tag = 'scratch operand']
  %s0 = inlined_call_operand.vmem [shape: f32[1,32], index: 0, kind: input, shape index: {}]
  %s1 = inlined_call_operand.vmem [shape: f32[32,48], index: 1, kind: input, shape index: {}]
  %s2 = inlined_call_operand.hbm [shape: f32[1,48], index: 2, kind: output, shape index: {}]
  %s3 = sld [smem:[#allocation0]]
  $region26: #{senn_forward.7} parent=0
    _
  %s5 = ssub.s32 1, %s3
  %s6 = scalar_select 0, %s5, %s3
  $region1: #{senn_forward.7} parent=0
    #allocation3 [shape = 'u8[512]{0}', space=vmem, size = 0x400, scoped, tag = 'output window, operand 0, single buffered']
    #allocation4 [shape = 's32[1]{0}', space=sflag, size = 0x4, scoped, tag = 'scoped memory for senn_forward.7']
    %7 = vsyncpa [#allocation4], 0
    // Predicated region
    $region2: #{senn_forward.7} parent=1 // pred_check
      _
    $region3: #{senn_forward.7} parent=1 // pred_check_branch
      %9 = sbr.rel (0) target = $region5
    $region4: #{senn_forward.7} parent=1 // pred_region
      _
    $region5: #{senn_forward.7} parent=1 // pred_fallthru
      _
    // Predicated region
    $region6: #{senn_forward.7} parent=1 // pred_check
      _
    $region7: #{senn_forward.7} parent=1 // pred_check_branch
      %11 = sbr.rel (0) target = $region9
    $region8: #{senn_forward.7} parent=1 // pred_region
      _
    $region9: #{senn_forward.7} parent=1 // pred_fallthru
      _
    %p12 = scmp.eq.s32.totalorder 0, 0
    // Predicated region
    $region10: #{senn_forward.7} parent=1 // pred_check
      %p13 = pneg %p12
    $region11: #{senn_forward.7} parent=1 // pred_check_branch
      %15 = sbr.rel (%p13) target = $region13
    $region12: #{senn_forward.7} parent=1 // pred_region
      %vm16 = vcmask 385024
      %17 = vst.msk [vmem:[#allocation2] sm:$0x1] %vm16, 0.0
    $region13: #{senn_forward.7} parent=1 // pred_fallthru
      _
    %v18 = vld [vmem:[#allocation2] sm:$0x1]
    %v19 = vld [vmem:[%s0] sm:$0x1]
    %v20 = vld [vmem:[%s1] sm:$0xff]
    %v21 = vld [vmem:[%s1 + $0x8] sm:$0xff]
    %v22 = vld [vmem:[%s1 + $0x10] sm:$0xff]
    %v23 = vld [vmem:[%s1 + $0x18] sm:$0xff]
    %vm24 = vcmask 261120
    %v26 = vsel %vm24, %v19, 0
    %28 = vmatprep.subr.mxu0 0.0
    %29 = vmatpush1.msra.mxu0 0.0
    %30 = vmatprep.subr.mxu0 0.0
    %31 = vmatpush1.msra.mxu0 0.0
    %32 = vmatprep.subr.mxu0 0.0
    %33 = vmatpush1.msra.mxu0 0.0
    %34 = vmatprep.subr.mxu0 0.0
    %35 = vmatpush1.msra.mxu0 0.0
    %36 = vmatprep.subr.mxu0 0.0
    %37 = vmatpush1.msra.mxu0 0.0
    %38 = vmatprep.subr.mxu0 0.0
    %39 = vmatpush1.msra.mxu0 0.0
    %40 = vmatprep.subr.mxu0 0.0
    %41 = vmatpush1.msra.mxu0 0.0
    %42 = vmatprep.subr.mxu0 0.0
    %43 = vmatpush1.msra.mxu0 0.0
    %44 = vmatprep.subr.mxu0 0.0
    %45 = vmatpush1.msra.mxu0 0.0
    %46 = vmatprep.subr.mxu0 0.0
    %47 = vmatpush1.msra.mxu0 0.0
    %48 = vmatprep.subr.mxu0 0.0
    %49 = vmatpush1.msra.mxu0 0.0
    %50 = vmatprep.subr.mxu0 0.0
    %51 = vmatpush1.msra.mxu0 0.0
    %52 = vmatprep.subr.mxu0 0.0
    %53 = vmatpush1.msra.mxu0 %v23
    %54 = vmatprep.subr.mxu0 0.0
    %55 = vmatpush1.msra.mxu0 %v22
    %56 = vmatprep.subr.mxu0 0.0
    %57 = vmatpush1.msra.mxu0 %v21
    %58 = vmatprep.subr.mxu0 0.0
    %59 = vmatpush1.msra.mxu0 %v20
    %60 = vmatprep.subr.mxu0 0.0
    %61 = vmatpush2.msra.mxu0 0.0
    %62 = vmatprep.subr.mxu0 0.0
    %63 = vmatpush2.msra.mxu0 0.0
    %64 = vmatprep.subr.mxu0 0.0
    %65 = vmatpush2.msra.mxu0 0.0
    %66 = vmatprep.subr.mxu0 0.0
    %67 = vmatpush2.msra.mxu0 0.0
    %68 = vmatprep.subr.mxu0 0.0
    %69 = vmatpush2.msra.mxu0 0.0
    %70 = vmatprep.subr.mxu0 0.0
    %71 = vmatpush2.msra.mxu0 0.0
    %72 = vmatprep.subr.mxu0 0.0
    %73 = vmatpush2.msra.mxu0 0.0
    %74 = vmatprep.subr.mxu0 0.0
    %75 = vmatpush2.msra.mxu0 0.0
    %76 = vmatprep.subr.mxu0 0.0
    %77 = vmatpush2.msra.mxu0 0.0
    %78 = vmatprep.subr.mxu0 0.0
    %79 = vmatpush2.msra.mxu0 0.0
    %80 = vmatprep.subr.mxu0 0.0
    %81 = vmatpush2.msra.mxu0 0.0
    %82 = vmatprep.subr.mxu0 0.0
    %83 = vmatpush2.msra.mxu0 0.0
    %84 = vmatprep.subr.mxu0 0.0
    %85 = vmatpush2.msra.mxu0 0.0
    %86 = vmatprep.subr.mxu0 0.0
    %87 = vmatpush2.msra.mxu0 0.0
    %88 = vmatprep.subr.mxu0 0.0
    %89 = vmatpush2.msra.mxu0 0.0
    %90 = vmatprep.subr.mxu0 0.0
    %91 = vmatpush2.msra.mxu0 0.0
    %92 = vmatprep.mubr.f32.mxu0 0.0
    %93 = vmatmul.mubr.f32.gmra.mxu0 %v26
    %v94 = vpop.f32.mrf.mxu0
    %v95 = vadd.f32 0.0, %v94
    %v96 = vpop.f32.mrf.mxu0
    %97 = vdwg.mxu0
    %v98 = vadd.f32 %v18, %v95
    %vm99 = vcmask 385024
    %100 = vst.msk [vmem:[#allocation2] sm:$0x1] %vm99, %v98
    // Predicated region
    $region14: #{senn_forward.7} parent=1 // pred_check
      %p101 = pneg %p12
    $region15: #{senn_forward.7} parent=1 // pred_check_branch
      %103 = sbr.rel (%p101) target = $region17
    $region16: #{senn_forward.7} parent=1 // pred_region
      %v104 = vld [vmem:[#allocation2] sm:$0x1]
      %105 = vst.msk [vmem:[#allocation3] sm:$0x1] %vm99, %v104
    $region17: #{senn_forward.7} parent=1 // pred_fallthru
      _
    // Predicated region
    $region18: #{senn_forward.7} parent=1 // pred_check
      _
    $region19: #{senn_forward.7} parent=1 // pred_check_branch
      %107 = sbr.rel (0) target = $region21
    $region20: #{senn_forward.7} parent=1 // pred_region
      %s109 = ssub.s32 16, 16
      %110 = vsyncadd [#allocation4], %s109
      %s112 = sshll.u32 [#allocation3], 4
      %s113 = int_to_ptr.vmem [resolvable:$true] %s112
      %115 = dma.vmem_to_hbm [thread:$0]  %s113, 16, %s2, [#allocation4]
    $region21: #{senn_forward.7} parent=1 // pred_fallthru
      _
    // Predicated region
    $region22: #{senn_forward.7} parent=1 // pred_check
      _
    $region23: #{senn_forward.7} parent=1 // pred_check_branch
      %117 = sbr.rel (0) target = $region25
    $region24: #{senn_forward.7} parent=1 // pred_region
      %118 = dma.done [#allocation4], 16
    $region25: #{senn_forward.7} parent=1 // pred_fallthru
      _
    %119 = vsyncpa [#allocation4], 1

</llo_original>
